<compile_context>
chip_gen: v7x
topology: tpu7x:2x2x1
jax: 0.10.0
libtpu: 0.0.40
codegen_flags: <defaults>
</compile_context>

<pallas_src>
import functools

import jax
import jax.numpy as jnp
from jax.experimental import pallas as pl
from jax.experimental.pallas import tpu as pltpu

LANE = 128
SUBLANE = 8


def _round_up(x, m):
    return (x + m - 1) // m * m


def _lrelu(v, ns):
    return jnp.where(v >= 0, v, ns * v)


# ----------------------------------------------------------------------------- kernel
def tarnet_kernel(
    x_ref,                         # (TILE_N, dim_input+1)  compute dtype
    w_in_ref,                      # (dim_input+1, Hp)      treatment row zeroed
    w_r0_ref, w_r1_ref,            # (Hp, Hp)
    w_a_ref,                       # (2*Hp, Hp)  rows [0:Hp]=op(phi), [Hp:2Hp]=skip(phi)
    w_b_ref,                       # (Hp, Hp)
    small_ref,                     # (8, Hp) f32: b_in, b_r0, b_r1, b_a+b_s, b_b, w_a_t, w_s_t
    o_ref,                         # (TILE_N, out_cols)
    *, dim_input, negative_slope, fuse_block_a, out_cols,
):
    ns = negative_slope
    cdt = w_r0_ref.dtype           # MXU operand dtype (f32 or bf16)
    hp = w_b_ref.shape[0]

    x = x_ref[...]                                            # (T, D+1)
    t = x[:, dim_input:dim_input + 1].astype(jnp.float32)     # (T, 1) treatment column

    b_in = small_ref[0:1, :]
    b_r0 = small_ref[1:2, :]
    b_r1 = small_ref[2:3, :]
    b_as = small_ref[3:4, :]       # b_a + b_s, pre-added in wrapper
    b_b = small_ref[4:5, :]
    w_a_t = small_ref[5:6, :]
    w_s_t = small_ref[6:7, :]

    # ---- encoder: input Linear (treatment row of W_in is zero) -----------------
    h = jnp.dot(x, w_in_ref[...], preferred_element_type=jnp.float32) + b_in

    # ---- encoder: two ResidualDense blocks  h += Linear(LeakyReLU(h)) ----------
    h = h + (jnp.dot(_lrelu(h, ns).astype(cdt), w_r0_ref[...],
                     preferred_element_type=jnp.float32) + b_r0)
    phi = h + (jnp.dot(_lrelu(h, ns).astype(cdt), w_r1_ref[...],
                       preferred_element_type=jnp.float32) + b_r1)

    # ---- t_encoder block A: ResidualDense(H+1 -> H) ----------------------------
    # Treatment column enters via rank-1 broadcasts; op/skip phi matmuls are either
    # fused into one K=2*Hp contraction (only worthwhile when Hp==128 on a 256-deep
    # MXU) or kept as two K=Hp matmuls (no (T, 2*Hp) phi_cat materialization).
    phi_act = _lrelu(phi, ns).astype(cdt)
    if fuse_block_a:
        phi_cat = jnp.concatenate([phi_act, phi.astype(cdt)], axis=-1)   # (T, 2*Hp)
        h2 = jnp.dot(phi_cat, w_a_ref[...], preferred_element_type=jnp.float32)
    else:
        h2 = (jnp.dot(phi_act, w_a_ref[:hp, :], preferred_element_type=jnp.float32)
              + jnp.dot(phi.astype(cdt), w_a_ref[hp:, :],
                        preferred_element_type=jnp.float32))
    h2 = h2 + _lrelu(t, ns) * w_a_t + t * w_s_t + b_as

    # ---- t_encoder block B: ResidualDense(H -> H), identity skip ---------------
    h2 = h2 + (jnp.dot(_lrelu(h2, ns).astype(cdt), w_b_ref[...],
                       preferred_element_type=jnp.float32) + b_b)

    # ---- final Activation (LeakyReLU; dropout=identity at eval) ----------------
    out = _lrelu(h2, ns)
    o_ref[...] = out[:, :out_cols].astype(o_ref.dtype)


# ----------------------------------------------------------------------------- wrapper
def tarnet_forward(inputs, params, *, negative_slope=0.1, tile_n=1024,
                   compute_dtype=jnp.bfloat16, out_dtype=None,
                   fuse_block_a=None, lane_dense_output=True,
                   single_buffer_weights=True):
    """inputs: (N, dim_input + 1); last column is the treatment."""
    n, d_in_p1 = inputs.shape
    dim_input = d_in_p1 - 1
    h = params["w_in"].shape[1]
    hp = _round_up(h, LANE)
    f32 = jnp.float32

    compute_dtype = jnp.dtype(compute_dtype)
    if out_dtype is None:
        out_dtype = compute_dtype if compute_dtype == jnp.bfloat16 else jnp.dtype(f32)
    out_dtype = jnp.dtype(out_dtype)

    if fuse_block_a is None:
        # K=2*Hp only improves MXU fill when Hp==128 on the 256-deep v6e/v7x MXU; on
        # v5e (4x128x128 MXU) or for Hp>=256 the phi_cat materialization is pure cost.
        kind = jax.devices()[0].device_kind.lower()
        fuse_block_a = (hp == LANE) and ("v5" not in kind)

    out_cols = hp if lane_dense_output else h

    def pad_w(w, rows, cols):
        return jnp.pad(w, ((0, rows - w.shape[0]), (0, cols - w.shape[1])))

    # encoder stem: zero-extend with one extra input row so the treatment column of the
    # full (N, dim_input+1) input block contributes nothing to the encoder.
    w_in = pad_w(jnp.concatenate([params["w_in"], jnp.zeros((1, h), f32)], 0), d_in_p1, hp)
    w_r0 = pad_w(params["w_r0"], hp, hp)
    w_r1 = pad_w(params["w_r1"], hp, hp)
    w_b = pad_w(params["w_b"], hp, hp)
    # block-A weight: rows [0:Hp] = op(phi) weight, rows [Hp:2Hp] = skip(phi) weight
    w_a = jnp.concatenate([pad_w(params["w_a_phi"], hp, hp),
                           pad_w(params["w_s_phi"], hp, hp)], axis=0)

    # pack all small (1, H) vectors into a single (8, Hp) sublane tile -> one DMA stream
    rows = jnp.concatenate(
        [params["b_in"], params["b_r0"], params["b_r1"],
         params["b_a"] + params["b_s"], params["b_b"],
         params["w_a_t"], params["w_s_t"]], axis=0)                     # (7, H)
    small = jnp.zeros((SUBLANE, hp), f32).at[:rows.shape[0], :h].set(rows)

    # ---- batch tiling -----------------------------------------------------------
    # sublane granule: 8 rows for f32 tiles, 16 when any streamed tile is 16-bit
    sub = 16 if (compute_dtype.itemsize < 4 or out_dtype.itemsize < 4) else SUBLANE
    tile_n = max(sub, _round_up(min(tile_n, max(n, 1)), sub))
    if n > sub:
        # ensure the grid has >= 2 steps so "parallel" actually feeds both v7x cores
        tile_n = min(tile_n, _round_up((n + 1) // 2, sub))
    n_pad = _round_up(n, tile_n)

    x = inputs if n_pad == n else jnp.pad(inputs, ((0, n_pad - n), (0, 0)))
    x = x.astype(compute_dtype)

    w_in, w_r0, w_r1, w_a, w_b = [w.astype(compute_dtype)
                                  for w in (w_in, w_r0, w_r1, w_a, w_b)]

    # ---- VMEM budget: weights (resident) + streamed tiles + elementwise temps ----
    w_bytes = sum(int(w.size) * w.dtype.itemsize
                  for w in (w_in, w_r0, w_r1, w_a, w_b)) + int(small.size) * 4
    w_bufs = 1 if single_buffer_weights else 2
    act_bytes = (2 * tile_n * d_in_p1 * compute_dtype.itemsize      # input, 2-deep
                 + 2 * tile_n * out_cols * out_dtype.itemsize       # output, 2-deep
                 + 8 * tile_n * hp * 4)                             # h/phi/phi_cat/h2/temps
    vmem_limit = int(1.25 * (w_bufs * w_bytes + act_bytes))
    vmem_limit = min(max(vmem_limit, 32 << 20), 128 << 20)

    kern = functools.partial(tarnet_kernel, dim_input=dim_input,
                             negative_slope=negative_slope,
                             fuse_block_a=fuse_block_a, out_cols=out_cols)
    cparams = pltpu.CompilerParams(dimension_semantics=("parallel",),
                                   vmem_limit_bytes=vmem_limit)

    def run(single_buf):
        if single_buf:
            # constant index_map -> single buffer is enough; halves weight footprint
            resident = lambda a: pl.BlockSpec(a.shape, lambda i: (0, 0),
                                              pipeline_mode=pl.Buffered(1))
        else:
            resident = lambda a: pl.BlockSpec(a.shape, lambda i: (0, 0))
        return pl.pallas_call(
            kern,
            out_shape=jax.ShapeDtypeStruct((n_pad, out_cols), out_dtype),
            grid=(n_pad // tile_n,),
            in_specs=[pl.BlockSpec((tile_n, d_in_p1), lambda i: (i, 0)),
                      resident(w_in), resident(w_r0), resident(w_r1),
                      resident(w_a), resident(w_b), resident(small)],
            out_specs=pl.BlockSpec((tile_n, out_cols), lambda i: (i, 0)),
            compiler_params=cparams,
        )(x, w_in, w_r0, w_r1, w_a, w_b, small)

    if single_buffer_weights:
        try:
            out = run(True)
        except Exception:  # runtime without Buffered(1) support: fall back to default
            out = run(False)
    else:
        out = run(False)

    if n_pad == n and out_cols == h:
        return out                      # no extra HBM pass when nothing was padded
    return out[:n, :h]


# ----------------------------------------------------------------------------- params
def init_params(key, dim_input, dim_hidden, dim_treatment=1, scale=0.1):
    ks = jax.random.split(key, 16)
    h = dim_hidden

    def w(k, shape):
        return scale * jax.random.normal(k, shape, dtype=jnp.float32)

    return {
        # encoder input linear (stored as [in, out])
        "w_in": w(ks[0], (dim_input, h)), "b_in": w(ks[1], (1, h)),
        # encoder residual blocks
        "w_r0": w(ks[2], (h, h)), "b_r0": w(ks[3], (1, h)),
        "w_r1": w(ks[4], (h, h)), "b_r1": w(ks[5], (1, h)),
        # t_encoder block A op linear, split into phi / treatment parts
        "w_a_phi": w(ks[6], (h, h)), "w_a_t": w(ks[7], (dim_treatment, h)),
        "b_a": w(ks[8], (1, h)),
        # t_encoder block A skip linear (dims differ -> real Linear), split
        "w_s_phi": w(ks[9], (h, h)), "w_s_t": w(ks[10], (dim_treatment, h)),
        "b_s": w(ks[11], (1, h)),
        # t_encoder block B op linear (skip = identity)
        "w_b": w(ks[12], (h, h)), "b_b": w(ks[13], (1, h)),
    }


# ----------------------------------------------------------------------------- reference
def tarnet_reference(inputs, p, *, negative_slope=0.1):
    ns = negative_slope
    lrelu = lambda v: jnp.where(v >= 0, v, ns * v)
    x, t = inputs[:, :-1], inputs[:, -1:]
    h = x @ p["w_in"] + p["b_in"]
    h = h + lrelu(h) @ p["w_r0"] + p["b_r0"]
    phi = h + lrelu(h) @ p["w_r1"] + p["b_r1"]
    t_in = jnp.concatenate([phi, t], axis=-1)
    w_a = jnp.concatenate([p["w_a_phi"], p["w_a_t"]], axis=0)
    w_s = jnp.concatenate([p["w_s_phi"], p["w_s_t"]], axis=0)
    h2 = (lrelu(t_in) @ w_a + p["b_a"]) + (t_in @ w_s + p["b_s"])
    h2 = h2 + lrelu(h2) @ p["w_b"] + p["b_b"]
    return lrelu(h2)


# ----------------------------------------------------------------------------- main
if __name__ == "__main__":
    N, DIM_INPUT, DIM_HIDDEN = 200, 8, 32
    NEG_SLOPE = 0.1

    key = jax.random.PRNGKey(0)
    k_in, k_p, k_t = jax.random.split(key, 3)

    covariates = jax.random.normal(k_in, (N, DIM_INPUT), dtype=jnp.float32)
    treatment = (jax.random.uniform(k_t, (N, 1)) > 0.5).astype(jnp.float32)
    inputs = jnp.concatenate([covariates, treatment], axis=-1)  # (N, dim_input + 1)

    params = init_params(k_p, DIM_INPUT, DIM_HIDDEN)
    ref = tarnet_reference(inputs, params, negative_slope=NEG_SLOPE)

    # f32 path (auto block-A fusion; grid split into >= 2 steps): tight check.
    out = tarnet_forward(inputs, params, negative_slope=NEG_SLOPE,
                         tile_n=128, compute_dtype=jnp.float32)
    out = jax.block_until_ready(out)
    assert out.shape == (N, DIM_HIDDEN)
    assert jnp.allclose(out, ref, atol=1e-5, rtol=1e-5), "f32 Pallas output != reference"

    # f32 path with the split (two K=Hp matmuls, no phi_cat) block-A variant used for
    # Hp >= 256 and on v5e.
    out_split = tarnet_forward(inputs, params, negative_slope=NEG_SLOPE,
                               tile_n=128, compute_dtype=jnp.float32,
                               fuse_block_a=False)
    out_split = jax.block_until_ready(out_split)
    assert jnp.allclose(out_split, ref, atol=1e-5, rtol=1e-5), "split block-A diverged"

    # default path: bf16 MXU operands + bf16 writeback, f32 accumulation/elementwise.
    out_bf16 = tarnet_forward(inputs, params, negative_slope=NEG_SLOPE)
    out_bf16 = jax.block_until_ready(out_bf16)
    assert out_bf16.shape == (N, DIM_HIDDEN)
    assert out_bf16.dtype == jnp.bfloat16
    assert float(jnp.max(jnp.abs(out_bf16.astype(jnp.float32) - ref))) < 5e-2, \
        "bf16 Pallas output diverged"

    # trimmed (H-wide) output variant for H << 128 memory-bound consumers.
    out_trim = tarnet_forward(inputs, params, negative_slope=NEG_SLOPE,
                              tile_n=128, compute_dtype=jnp.float32,
                              lane_dense_output=False)
    out_trim = jax.block_until_ready(out_trim)
    assert jnp.allclose(out_trim, ref, atol=1e-5, rtol=1e-5), "trimmed output diverged"

    print("KERNEL_OK")
</pallas_src>

<mosaic_0001>
module attributes {stable_mosaic.version = 11 : i64} {
  func.func @tarnet_kernel(%arg0: i32, %arg1: memref<104x9xf32, #tpu.memory_space<vmem>>, %arg2: memref<9x128xf32, #tpu.memory_space<vmem>>, %arg3: memref<128x128xf32, #tpu.memory_space<vmem>>, %arg4: memref<128x128xf32, #tpu.memory_space<vmem>>, %arg5: memref<256x128xf32, #tpu.memory_space<vmem>>, %arg6: memref<128x128xf32, #tpu.memory_space<vmem>>, %arg7: memref<8x128xf32, #tpu.memory_space<vmem>>, %arg8: memref<104x128xf32, #tpu.memory_space<vmem>>) attributes {dimension_semantics = [#tpu.dimension_semantics<parallel>], iteration_bounds = array<i64: 2>, scalar_prefetch = 0 : i64, scratch_operands = 0 : i64, tpu.core_type = #tpu.core_type<tc>, window_params = [{transform_indices = @transform_0, window_bounds = array<i64: 104, 9>}, {pipeline_mode = #tpu.pipeline_mode<synchronous>, transform_indices = @transform_1, window_bounds = array<i64: 9, 128>}, {pipeline_mode = #tpu.pipeline_mode<synchronous>, transform_indices = @transform_2, window_bounds = array<i64: 128, 128>}, {pipeline_mode = #tpu.pipeline_mode<synchronous>, transform_indices = @transform_3, window_bounds = array<i64: 128, 128>}, {pipeline_mode = #tpu.pipeline_mode<synchronous>, transform_indices = @transform_4, window_bounds = array<i64: 256, 128>}, {pipeline_mode = #tpu.pipeline_mode<synchronous>, transform_indices = @transform_5, window_bounds = array<i64: 128, 128>}, {pipeline_mode = #tpu.pipeline_mode<synchronous>, transform_indices = @transform_6, window_bounds = array<i64: 8, 128>}, {transform_indices = @transform_7, window_bounds = array<i64: 104, 128>}]} {
    %c0 = arith.constant 0 : index
    %c0_0 = arith.constant 0 : index
    %0 = vector.load %arg1[%c0, %c0_0] : memref<104x9xf32, #tpu.memory_space<vmem>>, vector<104x9xf32>
    %1 = vector.extract_strided_slice %0 {offsets = [0, 8], sizes = [104, 1], strides = [1, 1]} : vector<104x9xf32> to vector<104x1xf32>
    %c0_1 = arith.constant 0 : index
    %c0_2 = arith.constant 0 : index
    %2 = vector.load %arg7[%c0_1, %c0_2] : memref<8x128xf32, #tpu.memory_space<vmem>>, vector<1x128xf32>
    %c1 = arith.constant 1 : index
    %c0_3 = arith.constant 0 : index
    %3 = vector.load %arg7[%c1, %c0_3] : memref<8x128xf32, #tpu.memory_space<vmem>>, vector<1x128xf32>
    %c2 = arith.constant 2 : index
    %c0_4 = arith.constant 0 : index
    %4 = vector.load %arg7[%c2, %c0_4] : memref<8x128xf32, #tpu.memory_space<vmem>>, vector<1x128xf32>
    %c3 = arith.constant 3 : index
    %c0_5 = arith.constant 0 : index
    %5 = vector.load %arg7[%c3, %c0_5] : memref<8x128xf32, #tpu.memory_space<vmem>>, vector<1x128xf32>
    %c4 = arith.constant 4 : index
    %c0_6 = arith.constant 0 : index
    %6 = vector.load %arg7[%c4, %c0_6] : memref<8x128xf32, #tpu.memory_space<vmem>>, vector<1x128xf32>
    %c5 = arith.constant 5 : index
    %c0_7 = arith.constant 0 : index
    %7 = vector.load %arg7[%c5, %c0_7] : memref<8x128xf32, #tpu.memory_space<vmem>>, vector<1x128xf32>
    %c6 = arith.constant 6 : index
    %c0_8 = arith.constant 0 : index
    %8 = vector.load %arg7[%c6, %c0_8] : memref<8x128xf32, #tpu.memory_space<vmem>>, vector<1x128xf32>
    %c0_9 = arith.constant 0 : index
    %c0_10 = arith.constant 0 : index
    %9 = vector.load %arg2[%c0_9, %c0_10] : memref<9x128xf32, #tpu.memory_space<vmem>>, vector<9x128xf32>
    %cst = arith.constant dense<0.000000e+00> : vector<104x128xf32>
    %10 = tpu.matmul %0, %9, %cst {dimension_numbers = #tpu.dot_dimension_numbers<[1], [0], [0], [1], [0, 0, 1, 1], [], []>} : vector<104x9xf32>, vector<9x128xf32>, vector<104x128xf32> -> vector<104x128xf32>
    %11 = vector.broadcast %2 : vector<1x128xf32> to vector<104x128xf32>
    %12 = arith.addf %10, %11 : vector<104x128xf32>
    %cst_11 = arith.constant 0.000000e+00 : f32
    %13 = vector.broadcast %cst_11 : f32 to vector<104x128xf32>
    %14 = arith.cmpf oge, %12, %13 : vector<104x128xf32>
    %cst_12 = arith.constant 1.000000e-01 : f32
    %15 = vector.broadcast %cst_12 : f32 to vector<104x128xf32>
    %16 = arith.mulf %15, %12 : vector<104x128xf32>
    %17 = arith.select %14, %12, %16 : vector<104x128xi1>, vector<104x128xf32>
    %c0_13 = arith.constant 0 : index
    %c0_14 = arith.constant 0 : index
    %18 = vector.load %arg3[%c0_13, %c0_14] : memref<128x128xf32, #tpu.memory_space<vmem>>, vector<128x128xf32>
    %cst_15 = arith.constant dense<0.000000e+00> : vector<104x128xf32>
    %19 = tpu.matmul %17, %18, %cst_15 {dimension_numbers = #tpu.dot_dimension_numbers<[1], [0], [0], [1], [0, 0, 1, 1], [], []>} : vector<104x128xf32>, vector<128x128xf32>, vector<104x128xf32> -> vector<104x128xf32>
    %20 = vector.broadcast %3 : vector<1x128xf32> to vector<104x128xf32>
    %21 = arith.addf %19, %20 : vector<104x128xf32>
    %22 = arith.addf %12, %21 : vector<104x128xf32>
    %cst_16 = arith.constant 0.000000e+00 : f32
    %23 = vector.broadcast %cst_16 : f32 to vector<104x128xf32>
    %24 = arith.cmpf oge, %22, %23 : vector<104x128xf32>
    %cst_17 = arith.constant 1.000000e-01 : f32
    %25 = vector.broadcast %cst_17 : f32 to vector<104x128xf32>
    %26 = arith.mulf %25, %22 : vector<104x128xf32>
    %27 = arith.select %24, %22, %26 : vector<104x128xi1>, vector<104x128xf32>
    %c0_18 = arith.constant 0 : index
    %c0_19 = arith.constant 0 : index
    %28 = vector.load %arg4[%c0_18, %c0_19] : memref<128x128xf32, #tpu.memory_space<vmem>>, vector<128x128xf32>
    %cst_20 = arith.constant dense<0.000000e+00> : vector<104x128xf32>
    %29 = tpu.matmul %27, %28, %cst_20 {dimension_numbers = #tpu.dot_dimension_numbers<[1], [0], [0], [1], [0, 0, 1, 1], [], []>} : vector<104x128xf32>, vector<128x128xf32>, vector<104x128xf32> -> vector<104x128xf32>
    %30 = vector.broadcast %4 : vector<1x128xf32> to vector<104x128xf32>
    %31 = arith.addf %29, %30 : vector<104x128xf32>
    %32 = arith.addf %22, %31 : vector<104x128xf32>
    %cst_21 = arith.constant 0.000000e+00 : f32
    %33 = vector.broadcast %cst_21 : f32 to vector<104x128xf32>
    %34 = arith.cmpf oge, %32, %33 : vector<104x128xf32>
    %cst_22 = arith.constant 1.000000e-01 : f32
    %35 = vector.broadcast %cst_22 : f32 to vector<104x128xf32>
    %36 = arith.mulf %35, %32 : vector<104x128xf32>
    %37 = arith.select %34, %32, %36 : vector<104x128xi1>, vector<104x128xf32>
    %38 = tpu.concatenate %37, %32 in 1 : vector<104x128xf32>, vector<104x128xf32> -> vector<104x256xf32>
    %c0_23 = arith.constant 0 : index
    %c0_24 = arith.constant 0 : index
    %39 = vector.load %arg5[%c0_23, %c0_24] : memref<256x128xf32, #tpu.memory_space<vmem>>, vector<256x128xf32>
    %cst_25 = arith.constant dense<0.000000e+00> : vector<104x128xf32>
    %40 = tpu.matmul %38, %39, %cst_25 {dimension_numbers = #tpu.dot_dimension_numbers<[1], [0], [0], [1], [0, 0, 1, 1], [], []>} : vector<104x256xf32>, vector<256x128xf32>, vector<104x128xf32> -> vector<104x128xf32>
    %cst_26 = arith.constant 0.000000e+00 : f32
    %41 = vector.broadcast %cst_26 : f32 to vector<104x1xf32>
    %42 = arith.cmpf oge, %1, %41 : vector<104x1xf32>
    %cst_27 = arith.constant 1.000000e-01 : f32
    %43 = vector.broadcast %cst_27 : f32 to vector<104x1xf32>
    %44 = arith.mulf %43, %1 : vector<104x1xf32>
    %45 = arith.select %42, %1, %44 : vector<104x1xi1>, vector<104x1xf32>
    %46 = vector.broadcast %45 : vector<104x1xf32> to vector<104x128xf32>
    %47 = vector.broadcast %7 : vector<1x128xf32> to vector<104x128xf32>
    %48 = arith.mulf %46, %47 : vector<104x128xf32>
    %49 = arith.addf %40, %48 : vector<104x128xf32>
    %50 = vector.broadcast %1 : vector<104x1xf32> to vector<104x128xf32>
    %51 = vector.broadcast %8 : vector<1x128xf32> to vector<104x128xf32>
    %52 = arith.mulf %50, %51 : vector<104x128xf32>
    %53 = arith.addf %49, %52 : vector<104x128xf32>
    %54 = vector.broadcast %5 : vector<1x128xf32> to vector<104x128xf32>
    %55 = arith.addf %53, %54 : vector<104x128xf32>
    %cst_28 = arith.constant 0.000000e+00 : f32
    %56 = vector.broadcast %cst_28 : f32 to vector<104x128xf32>
    %57 = arith.cmpf oge, %55, %56 : vector<104x128xf32>
    %cst_29 = arith.constant 1.000000e-01 : f32
    %58 = vector.broadcast %cst_29 : f32 to vector<104x128xf32>
    %59 = arith.mulf %58, %55 : vector<104x128xf32>
    %60 = arith.select %57, %55, %59 : vector<104x128xi1>, vector<104x128xf32>
    %c0_30 = arith.constant 0 : index
    %c0_31 = arith.constant 0 : index
    %61 = vector.load %arg6[%c0_30, %c0_31] : memref<128x128xf32, #tpu.memory_space<vmem>>, vector<128x128xf32>
    %cst_32 = arith.constant dense<0.000000e+00> : vector<104x128xf32>
    %62 = tpu.matmul %60, %61, %cst_32 {dimension_numbers = #tpu.dot_dimension_numbers<[1], [0], [0], [1], [0, 0, 1, 1], [], []>} : vector<104x128xf32>, vector<128x128xf32>, vector<104x128xf32> -> vector<104x128xf32>
    %63 = vector.broadcast %6 : vector<1x128xf32> to vector<104x128xf32>
    %64 = arith.addf %62, %63 : vector<104x128xf32>
    %65 = arith.addf %55, %64 : vector<104x128xf32>
    %cst_33 = arith.constant 0.000000e+00 : f32
    %66 = vector.broadcast %cst_33 : f32 to vector<104x128xf32>
    %67 = arith.cmpf oge, %65, %66 : vector<104x128xf32>
    %cst_34 = arith.constant 1.000000e-01 : f32
    %68 = vector.broadcast %cst_34 : f32 to vector<104x128xf32>
    %69 = arith.mulf %68, %65 : vector<104x128xf32>
    %70 = arith.select %67, %65, %69 : vector<104x128xi1>, vector<104x128xf32>
    %c0_35 = arith.constant 0 : index
    %c0_36 = arith.constant 0 : index
    %71 = vector.load %arg8[%c0_35, %c0_36] : memref<104x128xf32, #tpu.memory_space<vmem>>, vector<104x128xf32>
    tpu.vector_store %arg8[%c0_35, %c0_36], %70 {strides = array<i32>} : memref<104x128xf32, #tpu.memory_space<vmem>>, vector<104x128xf32>,
    return
  }
  func.func @transform_0(%arg0: i32) -> (i32, i32) {
    %c0_i32 = arith.constant 0 : i32
    %c0_i32_0 = arith.constant 0 : i32
    return %arg0, %c0_i32 : i32, i32
  }
  func.func @transform_1(%arg0: i32) -> (i32, i32) {
    %c0_i32 = arith.constant 0 : i32
    %c0_i32_0 = arith.constant 0 : i32
    %c0_i32_1 = arith.constant 0 : i32
    return %c0_i32, %c0_i32_0 : i32, i32
  }
  func.func @transform_2(%arg0: i32) -> (i32, i32) {
    %c0_i32 = arith.constant 0 : i32
    %c0_i32_0 = arith.constant 0 : i32
    %c0_i32_1 = arith.constant 0 : i32
    return %c0_i32, %c0_i32_0 : i32, i32
  }
  func.func @transform_3(%arg0: i32) -> (i32, i32) {
    %c0_i32 = arith.constant 0 : i32
    %c0_i32_0 = arith.constant 0 : i32
    %c0_i32_1 = arith.constant 0 : i32
    return %c0_i32, %c0_i32_0 : i32, i32
  }
  func.func @transform_4(%arg0: i32) -> (i32, i32) {
    %c0_i32 = arith.constant 0 : i32
    %c0_i32_0 = arith.constant 0 : i32
    %c0_i32_1 = arith.constant 0 : i32
    return %c0_i32, %c0_i32_0 : i32, i32
  }
  func.func @transform_5(%arg0: i32) -> (i32, i32) {
    %c0_i32 = arith.constant 0 : i32
    %c0_i32_0 = arith.constant 0 : i32
    %c0_i32_1 = arith.constant 0 : i32
    return %c0_i32, %c0_i32_0 : i32, i32
  }
  func.func @transform_6(%arg0: i32) -> (i32, i32) {
    %c0_i32 = arith.constant 0 : i32
    %c0_i32_0 = arith.constant 0 : i32
    %c0_i32_1 = arith.constant 0 : i32
    return %c0_i32, %c0_i32_0 : i32, i32
  }
  func.func @transform_7(%arg0: i32) -> (i32, i32) {
    %c0_i32 = arith.constant 0 : i32
    %c0_i32_0 = arith.constant 0 : i32
    return %arg0, %c0_i32 : i32, i32
  }
}

module attributes {stable_mosaic.version = 11 : i64} {
  func.func @tarnet_kernel(%arg0: i32, %arg1: memref<104x9xf32, #tpu.memory_space<vmem>>, %arg2: memref<9x128xf32, #tpu.memory_space<vmem>>, %arg3: memref<128x128xf32, #tpu.memory_space<vmem>>, %arg4: memref<128x128xf32, #tpu.memory_space<vmem>>, %arg5: memref<256x128xf32, #tpu.memory_space<vmem>>, %arg6: memref<128x128xf32, #tpu.memory_space<vmem>>, %arg7: memref<8x128xf32, #tpu.memory_space<vmem>>, %arg8: memref<104x128xf32, #tpu.memory_space<vmem>>) attributes {dimension_semantics = [#tpu.dimension_semantics<parallel>], iteration_bounds = array<i64: 2>, scalar_prefetch = 0 : i64, scratch_operands = 0 : i64, tpu.core_type = #tpu.core_type<tc>, window_params = [{transform_indices = @transform_0, window_bounds = array<i64: 104, 9>}, {pipeline_mode = #tpu.pipeline_mode<synchronous>, transform_indices = @transform_1, window_bounds = array<i64: 9, 128>}, {pipeline_mode = #tpu.pipeline_mode<synchronous>, transform_indices = @transform_2, window_bounds = array<i64: 128, 128>}, {pipeline_mode = #tpu.pipeline_mode<synchronous>, transform_indices = @transform_3, window_bounds = array<i64: 128, 128>}, {pipeline_mode = #tpu.pipeline_mode<synchronous>, transform_indices = @transform_4, window_bounds = array<i64: 256, 128>}, {pipeline_mode = #tpu.pipeline_mode<synchronous>, transform_indices = @transform_5, window_bounds = array<i64: 128, 128>}, {pipeline_mode = #tpu.pipeline_mode<synchronous>, transform_indices = @transform_6, window_bounds = array<i64: 8, 128>}, {transform_indices = @transform_7, window_bounds = array<i64: 104, 128>}]} {
    %c0 = arith.constant 0 : index
    %c0_0 = arith.constant 0 : index
    %0 = vector.load %arg1[%c0, %c0_0] : memref<104x9xf32, #tpu.memory_space<vmem>>, vector<104x9xf32>
    %1 = vector.extract_strided_slice %0 {offsets = [0, 8], sizes = [104, 1], strides = [1, 1]} : vector<104x9xf32> to vector<104x1xf32>
    %c0_1 = arith.constant 0 : index
    %c0_2 = arith.constant 0 : index
    %2 = vector.load %arg7[%c0_1, %c0_2] : memref<8x128xf32, #tpu.memory_space<vmem>>, vector<1x128xf32>
    %c1 = arith.constant 1 : index
    %c0_3 = arith.constant 0 : index
    %3 = vector.load %arg7[%c1, %c0_3] : memref<8x128xf32, #tpu.memory_space<vmem>>, vector<1x128xf32>
    %c2 = arith.constant 2 : index
    %c0_4 = arith.constant 0 : index
    %4 = vector.load %arg7[%c2, %c0_4] : memref<8x128xf32, #tpu.memory_space<vmem>>, vector<1x128xf32>
    %c3 = arith.constant 3 : index
    %c0_5 = arith.constant 0 : index
    %5 = vector.load %arg7[%c3, %c0_5] : memref<8x128xf32, #tpu.memory_space<vmem>>, vector<1x128xf32>
    %c4 = arith.constant 4 : index
    %c0_6 = arith.constant 0 : index
    %6 = vector.load %arg7[%c4, %c0_6] : memref<8x128xf32, #tpu.memory_space<vmem>>, vector<1x128xf32>
    %c5 = arith.constant 5 : index
    %c0_7 = arith.constant 0 : index
    %7 = vector.load %arg7[%c5, %c0_7] : memref<8x128xf32, #tpu.memory_space<vmem>>, vector<1x128xf32>
    %c6 = arith.constant 6 : index
    %c0_8 = arith.constant 0 : index
    %8 = vector.load %arg7[%c6, %c0_8] : memref<8x128xf32, #tpu.memory_space<vmem>>, vector<1x128xf32>
    %c0_9 = arith.constant 0 : index
    %c0_10 = arith.constant 0 : index
    %9 = vector.load %arg2[%c0_9, %c0_10] : memref<9x128xf32, #tpu.memory_space<vmem>>, vector<9x128xf32>
    %cst = arith.constant dense<0.000000e+00> : vector<104x128xf32>
    %10 = tpu.matmul %0, %9, %cst {dimension_numbers = #tpu.dot_dimension_numbers<[1], [0], [0], [1], [0, 0, 1, 1], [], []>} : vector<104x9xf32>, vector<9x128xf32>, vector<104x128xf32> -> vector<104x128xf32>
    %11 = vector.broadcast %2 : vector<1x128xf32> to vector<104x128xf32>
    %12 = arith.addf %10, %11 : vector<104x128xf32>
    %cst_11 = arith.constant 0.000000e+00 : f32
    %13 = vector.broadcast %cst_11 : f32 to vector<104x128xf32>
    %14 = arith.cmpf oge, %12, %13 : vector<104x128xf32>
    %cst_12 = arith.constant 1.000000e-01 : f32
    %15 = vector.broadcast %cst_12 : f32 to vector<104x128xf32>
    %16 = arith.mulf %15, %12 : vector<104x128xf32>
    %17 = arith.select %14, %12, %16 : vector<104x128xi1>, vector<104x128xf32>
    %c0_13 = arith.constant 0 : index
    %c0_14 = arith.constant 0 : index
    %18 = vector.load %arg3[%c0_13, %c0_14] : memref<128x128xf32, #tpu.memory_space<vmem>>, vector<128x128xf32>
    %cst_15 = arith.constant dense<0.000000e+00> : vector<104x128xf32>
    %19 = tpu.matmul %17, %18, %cst_15 {dimension_numbers = #tpu.dot_dimension_numbers<[1], [0], [0], [1], [0, 0, 1, 1], [], []>} : vector<104x128xf32>, vector<128x128xf32>, vector<104x128xf32> -> vector<104x128xf32>
    %20 = vector.broadcast %3 : vector<1x128xf32> to vector<104x128xf32>
    %21 = arith.addf %19, %20 : vector<104x128xf32>
    %22 = arith.addf %12, %21 : vector<104x128xf32>
    %cst_16 = arith.constant 0.000000e+00 : f32
    %23 = vector.broadcast %cst_16 : f32 to vector<104x128xf32>
    %24 = arith.cmpf oge, %22, %23 : vector<104x128xf32>
    %cst_17 = arith.constant 1.000000e-01 : f32
    %25 = vector.broadcast %cst_17 : f32 to vector<104x128xf32>
    %26 = arith.mulf %25, %22 : vector<104x128xf32>
    %27 = arith.select %24, %22, %26 : vector<104x128xi1>, vector<104x128xf32>
    %c0_18 = arith.constant 0 : index
    %c0_19 = arith.constant 0 : index
    %28 = vector.load %arg4[%c0_18, %c0_19] : memref<128x128xf32, #tpu.memory_space<vmem>>, vector<128x128xf32>
    %cst_20 = arith.constant dense<0.000000e+00> : vector<104x128xf32>
    %29 = tpu.matmul %27, %28, %cst_20 {dimension_numbers = #tpu.dot_dimension_numbers<[1], [0], [0], [1], [0, 0, 1, 1], [], []>} : vector<104x128xf32>, vector<128x128xf32>, vector<104x128xf32> -> vector<104x128xf32>
    %30 = vector.broadcast %4 : vector<1x128xf32> to vector<104x128xf32>
    %31 = arith.addf %29, %30 : vector<104x128xf32>
    %32 = arith.addf %22, %31 : vector<104x128xf32>
    %cst_21 = arith.constant 0.000000e+00 : f32
    %33 = vector.broadcast %cst_21 : f32 to vector<104x128xf32>
    %34 = arith.cmpf oge, %32, %33 : vector<104x128xf32>
    %cst_22 = arith.constant 1.000000e-01 : f32
    %35 = vector.broadcast %cst_22 : f32 to vector<104x128xf32>
    %36 = arith.mulf %35, %32 : vector<104x128xf32>
    %37 = arith.select %34, %32, %36 : vector<104x128xi1>, vector<104x128xf32>
    %38 = tpu.concatenate %37, %32 in 1 : vector<104x128xf32>, vector<104x128xf32> -> vector<104x256xf32>
    %c0_23 = arith.constant 0 : index
    %c0_24 = arith.constant 0 : index
    %39 = vector.load %arg5[%c0_23, %c0_24] : memref<256x128xf32, #tpu.memory_space<vmem>>, vector<256x128xf32>
    %cst_25 = arith.constant dense<0.000000e+00> : vector<104x128xf32>
    %40 = tpu.matmul %38, %39, %cst_25 {dimension_numbers = #tpu.dot_dimension_numbers<[1], [0], [0], [1], [0, 0, 1, 1], [], []>} : vector<104x256xf32>, vector<256x128xf32>, vector<104x128xf32> -> vector<104x128xf32>
    %cst_26 = arith.constant 0.000000e+00 : f32
    %41 = vector.broadcast %cst_26 : f32 to vector<104x1xf32>
    %42 = arith.cmpf oge, %1, %41 : vector<104x1xf32>
    %cst_27 = arith.constant 1.000000e-01 : f32
    %43 = vector.broadcast %cst_27 : f32 to vector<104x1xf32>
    %44 = arith.mulf %43, %1 : vector<104x1xf32>
    %45 = arith.select %42, %1, %44 : vector<104x1xi1>, vector<104x1xf32>
    %46 = vector.broadcast %45 : vector<104x1xf32> to vector<104x128xf32>
    %47 = vector.broadcast %7 : vector<1x128xf32> to vector<104x128xf32>
    %48 = arith.mulf %46, %47 : vector<104x128xf32>
    %49 = arith.addf %40, %48 : vector<104x128xf32>
    %50 = vector.broadcast %1 : vector<104x1xf32> to vector<104x128xf32>
    %51 = vector.broadcast %8 : vector<1x128xf32> to vector<104x128xf32>
    %52 = arith.mulf %50, %51 : vector<104x128xf32>
    %53 = arith.addf %49, %52 : vector<104x128xf32>
    %54 = vector.broadcast %5 : vector<1x128xf32> to vector<104x128xf32>
    %55 = arith.addf %53, %54 : vector<104x128xf32>
    %cst_28 = arith.constant 0.000000e+00 : f32
    %56 = vector.broadcast %cst_28 : f32 to vector<104x128xf32>
    %57 = arith.cmpf oge, %55, %56 : vector<104x128xf32>
    %cst_29 = arith.constant 1.000000e-01 : f32
    %58 = vector.broadcast %cst_29 : f32 to vector<104x128xf32>
    %59 = arith.mulf %58, %55 : vector<104x128xf32>
    %60 = arith.select %57, %55, %59 : vector<104x128xi1>, vector<104x128xf32>
    %c0_30 = arith.constant 0 : index
    %c0_31 = arith.constant 0 : index
    %61 = vector.load %arg6[%c0_30, %c0_31] : memref<128x128xf32, #tpu.memory_space<vmem>>, vector<128x128xf32>
    %cst_32 = arith.constant dense<0.000000e+00> : vector<104x128xf32>
    %62 = tpu.matmul %60, %61, %cst_32 {dimension_numbers = #tpu.dot_dimension_numbers<[1], [0], [0], [1], [0, 0, 1, 1], [], []>} : vector<104x128xf32>, vector<128x128xf32>, vector<104x128xf32> -> vector<104x128xf32>
    %63 = vector.broadcast %6 : vector<1x128xf32> to vector<104x128xf32>
    %64 = arith.addf %62, %63 : vector<104x128xf32>
    %65 = arith.addf %55, %64 : vector<104x128xf32>
    %cst_33 = arith.constant 0.000000e+00 : f32
    %66 = vector.broadcast %cst_33 : f32 to vector<104x128xf32>
    %67 = arith.cmpf oge, %65, %66 : vector<104x128xf32>
    %cst_34 = arith.constant 1.000000e-01 : f32
    %68 = vector.broadcast %cst_34 : f32 to vector<104x128xf32>
    %69 = arith.mulf %68, %65 : vector<104x128xf32>
    %70 = arith.select %67, %65, %69 : vector<104x128xi1>, vector<104x128xf32>
    %c0_35 = arith.constant 0 : index
    %c0_36 = arith.constant 0 : index
    %71 = vector.load %arg8[%c0_35, %c0_36] : memref<104x128xf32, #tpu.memory_space<vmem>>, vector<104x128xf32>
    tpu.vector_store %arg8[%c0_35, %c0_36], %70 {strides = array<i32>} : memref<104x128xf32, #tpu.memory_space<vmem>>, vector<104x128xf32>,
    return
  }
  func.func @transform_0(%arg0: i32) -> (i32, i32) {
    %c0_i32 = arith.constant 0 : i32
    %c0_i32_0 = arith.constant 0 : i32
    return %arg0, %c0_i32 : i32, i32
  }
  func.func @transform_1(%arg0: i32) -> (i32, i32) {
    %c0_i32 = arith.constant 0 : i32
    %c0_i32_0 = arith.constant 0 : i32
    %c0_i32_1 = arith.constant 0 : i32
    return %c0_i32, %c0_i32_0 : i32, i32
  }
  func.func @transform_2(%arg0: i32) -> (i32, i32) {
    %c0_i32 = arith.constant 0 : i32
    %c0_i32_0 = arith.constant 0 : i32
    %c0_i32_1 = arith.constant 0 : i32
    return %c0_i32, %c0_i32_0 : i32, i32
  }
  func.func @transform_3(%arg0: i32) -> (i32, i32) {
    %c0_i32 = arith.constant 0 : i32
    %c0_i32_0 = arith.constant 0 : i32
    %c0_i32_1 = arith.constant 0 : i32
    return %c0_i32, %c0_i32_0 : i32, i32
  }
  func.func @transform_4(%arg0: i32) -> (i32, i32) {
    %c0_i32 = arith.constant 0 : i32
    %c0_i32_0 = arith.constant 0 : i32
    %c0_i32_1 = arith.constant 0 : i32
    return %c0_i32, %c0_i32_0 : i32, i32
  }
  func.func @transform_5(%arg0: i32) -> (i32, i32) {
    %c0_i32 = arith.constant 0 : i32
    %c0_i32_0 = arith.constant 0 : i32
    %c0_i32_1 = arith.constant 0 : i32
    return %c0_i32, %c0_i32_0 : i32, i32
  }
  func.func @transform_6(%arg0: i32) -> (i32, i32) {
    %c0_i32 = arith.constant 0 : i32
    %c0_i32_0 = arith.constant 0 : i32
    %c0_i32_1 = arith.constant 0 : i32
    return %c0_i32, %c0_i32_0 : i32, i32
  }
  func.func @transform_7(%arg0: i32) -> (i32, i32) {
    %c0_i32 = arith.constant 0 : i32
    %c0_i32_0 = arith.constant 0 : i32
    return %arg0, %c0_i32 : i32, i32
  }
}

</mosaic_0001>

<llo_original>
// kernel: tpu_custom_call.1
$region0: #{tpu_custom_call.1}
  #allocation0 [shape = 'u32[]', space=smem, size = 0x4, offset = 0x4, fixed_abs, tag = 'smem constant byte address 0x4 - core index']
  #allocation1 [shape = 'u32[144,128]{1,0:T(1,128)}', space=vmem, size = 0x12000, scoped, tag = 'internal scratch']
  %s0 = inlined_call_operand.vmem [shape: f32[208,9], index: 0, kind: input, shape index: {}]
  %s1 = inlined_call_operand.hbm [shape: f32[9,128], index: 1, kind: input, shape index: {}]
  %s2 = inlined_call_operand.vmem [shape: f32[128,128], index: 2, kind: input, shape index: {}]
  %s3 = inlined_call_operand.hbm [shape: f32[128,128], index: 3, kind: input, shape index: {}]
  %s4 = inlined_call_operand.hbm [shape: f32[256,128], index: 4, kind: input, shape index: {}]
  %s5 = inlined_call_operand.vmem [shape: f32[128,128], index: 5, kind: input, shape index: {}]
  %s6 = inlined_call_operand.hbm [shape: f32[8,128], index: 6, kind: input, shape index: {}]
  %s7 = inlined_call_operand.hbm [shape: f32[208,128], index: 7, kind: output, shape index: {}]
  %s8 = sld [smem:[#allocation0]]
  $region77: #{tpu_custom_call.1} parent=0
    _
  %s10 = ssub.s32 1, %s8
  %s11 = scalar_select 0, %s10, %s8
  $region1: #{tpu_custom_call.1} parent=0
    #allocation2 [shape = 'u8[8192]{0}', space=vmem, size = 0x2000, scoped, tag = 'input window, operand 1, single buffered']
    #allocation3 [shape = 's32[2]{0}', space=sflag, size = 0x8, scoped, tag = 'scoped memory for tpu_custom_call.1']
    #allocation4 [shape = 's32[2]{0}', space=sflag, size = 0x8, scoped, tag = 'scoped memory for tpu_custom_call.1']
    #allocation5 [shape = 'u8[65536]{0}', space=vmem, size = 0x10000, scoped, tag = 'input window, operand 3, single buffered']
    #allocation6 [shape = 's32[1]{0}', space=sflag, size = 0x4, scoped, tag = 'scoped memory for tpu_custom_call.1']
    #allocation7 [shape = 'u8[131072]{0}', space=vmem, size = 0x20000, scoped, tag = 'input window, operand 4, single buffered']
    #allocation8 [shape = 'u8[4096]{0}', space=vmem, size = 0x1000, scoped, tag = 'input window, operand 6, single buffered']
    #allocation9 [shape = 's32[1]{0}', space=sflag, size = 0x4, scoped, tag = 'scoped memory for tpu_custom_call.1']
    #allocation10 [shape = 'u8[106496]{0}', space=vmem, size = 0x1a000, scoped, tag = 'output window, operand 0']
    %12 = vsyncpa [#allocation3], 0
    %13 = vsyncpa [#allocation6], 0
    %14 = vsyncpa [#allocation9], 0
    %15 = vsyncpa [#allocation4], 0
    %s16 = scalar_lea.sflag [#allocation4], 1
    %17 = vsyncpa %s16, 0
    loop: start=0, step=1, limit=4
    $region2: #{tpu_custom_call.1} parent=1 // loop_pre_header
      _
    $region3: #{tpu_custom_call.1} parent=1 // loop_header
      %s19 = sphi 0, %s23
      %p20 = scmp.ge.s32.totalorder %s19, 4
      %s29 = sphi 0, %s31
      %s32 = sphi 0, %s29
      %s33 = sphi 0, %s32
      %s49 = sphi 0, %s33
      %s53 = sphi 0, %s53
      %s55 = sphi 0, %s53
      %s56 = sphi 0, %s55
      %s70 = sphi 0, %s56
      %s74 = sphi 0, %s74
      %s76 = sphi 0, %s74
      %s77 = sphi 0, %s76
      %s91 = sphi 0, %s77
      %s95 = sphi 0, %s95
      %s97 = sphi 0, %s95
      %s98 = sphi 0, %s97
      %s112 = sphi 0, %s98
      %s116 = sphi 0, %s116
      %s118 = sphi 0, %s116
      %s119 = sphi 0, %s118
      %s133 = sphi 0, %s119
      %s137 = sphi 0, %s137
      %s139 = sphi 0, %s137
      %s140 = sphi 0, %s139
      %s154 = sphi 0, %s140
      %s158 = sphi 0, %s158
      %s160 = sphi 0, %s158
      %s161 = sphi 0, %s160
      %s175 = sphi 0, %s161
      %s181 = sphi 0, %s183
      %s184 = sphi 0, %s181
      %s185 = sphi 0, %s184
      %s201 = sphi 0, %s185
    $region4: #{tpu_custom_call.1} parent=1 // loop_header_branch
      %22 = sbr.rel (%p20) target = $region8
    $region5: #{tpu_custom_call.1} parent=1 // loop_body
      %s24 = ssub.s32 %s19, 1
      %s25 = ssub.s32 %s19, 2
      %s26 = sadd.s32 %s19, 1
      %s27 = ssub.s32 %s19, %s26
      %p28 = scmp.eq.s32.totalorder %s27, 0
      %s30 = sadd.s32 %s29, 1
      %s31 = scalar_select %p28, %s29, %s30
      %p34 = pneg %p28
      %p35 = scmp.eq.s32.totalorder %s19, 1
      %p36 = por %p34, %p35
      %p37 = scmp.ne.s32.totalorder %s29, %s32
      %p38 = scmp.eq.s32.totalorder %s19, 0
      %p39 = por %p37, %p38
      %p40 = scmp.ne.s32.totalorder %s29, %s32
      %p41 = scmp.eq.s32.totalorder %s24, 1
      %p42 = por %p40, %p41
      %p43 = scmp.ne.s32.totalorder %s32, %s33
      %p44 = scmp.eq.s32.totalorder %s24, 0
      %p45 = por %p43, %p44
      %p46 = scmp.ne.s32.totalorder %s32, %s33
      %p47 = scmp.eq.s32.totalorder %s25, 1
      %p48 = por %p46, %p47
      %p50 = scmp.ne.s32.totalorder %s33, %s49
      %p51 = scmp.eq.s32.totalorder %s25, 0
      %p52 = por %p50, %p51
      %s54 = sadd.s32 %s53, 1
      %p57 = scmp.eq.s32.totalorder %s19, 1
      %p58 = scmp.ne.s32.totalorder %s53, %s55
      %p59 = scmp.eq.s32.totalorder %s19, 0
      %p60 = por %p58, %p59
      %p61 = scmp.ne.s32.totalorder %s53, %s55
      %p62 = scmp.eq.s32.totalorder %s24, 1
      %p63 = por %p61, %p62
      %p64 = scmp.ne.s32.totalorder %s55, %s56
      %p65 = scmp.eq.s32.totalorder %s24, 0
      %p66 = por %p64, %p65
      %p67 = scmp.ne.s32.totalorder %s55, %s56
      %p68 = scmp.eq.s32.totalorder %s25, 1
      %p69 = por %p67, %p68
      %p71 = scmp.ne.s32.totalorder %s56, %s70
      %p72 = scmp.eq.s32.totalorder %s25, 0
      %p73 = por %p71, %p72
      %s75 = sadd.s32 %s74, 1
      %p78 = scmp.eq.s32.totalorder %s19, 1
      %p79 = scmp.ne.s32.totalorder %s74, %s76
      %p80 = scmp.eq.s32.totalorder %s19, 0
      %p81 = por %p79, %p80
      %p82 = scmp.ne.s32.totalorder %s74, %s76
      %p83 = scmp.eq.s32.totalorder %s24, 1
      %p84 = por %p82, %p83
      %p85 = scmp.ne.s32.totalorder %s76, %s77
      %p86 = scmp.eq.s32.totalorder %s24, 0
      %p87 = por %p85, %p86
      %p88 = scmp.ne.s32.totalorder %s76, %s77
      %p89 = scmp.eq.s32.totalorder %s25, 1
      %p90 = por %p88, %p89
      %p92 = scmp.ne.s32.totalorder %s77, %s91
      %p93 = scmp.eq.s32.totalorder %s25, 0
      %p94 = por %p92, %p93
      %s96 = sadd.s32 %s95, 1
      %p99 = scmp.eq.s32.totalorder %s19, 1
      %p100 = scmp.ne.s32.totalorder %s95, %s97
      %p101 = scmp.eq.s32.totalorder %s19, 0
      %p102 = por %p100, %p101
      %p103 = scmp.ne.s32.totalorder %s95, %s97
      %p104 = scmp.eq.s32.totalorder %s24, 1
      %p105 = por %p103, %p104
      %p106 = scmp.ne.s32.totalorder %s97, %s98
      %p107 = scmp.eq.s32.totalorder %s24, 0
      %p108 = por %p106, %p107
      %p109 = scmp.ne.s32.totalorder %s97, %s98
      %p110 = scmp.eq.s32.totalorder %s25, 1
      %p111 = por %p109, %p110
      %p113 = scmp.ne.s32.totalorder %s98, %s112
      %p114 = scmp.eq.s32.totalorder %s25, 0
      %p115 = por %p113, %p114
      %s117 = sadd.s32 %s116, 1
      %p120 = scmp.eq.s32.totalorder %s19, 1
      %p121 = scmp.ne.s32.totalorder %s116, %s118
      %p122 = scmp.eq.s32.totalorder %s19, 0
      %p123 = por %p121, %p122
      %p124 = scmp.ne.s32.totalorder %s116, %s118
      %p125 = scmp.eq.s32.totalorder %s24, 1
      %p126 = por %p124, %p125
      %p127 = scmp.ne.s32.totalorder %s118, %s119
      %p128 = scmp.eq.s32.totalorder %s24, 0
      %p129 = por %p127, %p128
      %p130 = scmp.ne.s32.totalorder %s118, %s119
      %p131 = scmp.eq.s32.totalorder %s25, 1
      %p132 = por %p130, %p131
      %p134 = scmp.ne.s32.totalorder %s119, %s133
      %p135 = scmp.eq.s32.totalorder %s25, 0
      %p136 = por %p134, %p135
      %s138 = sadd.s32 %s137, 1
      %p141 = scmp.eq.s32.totalorder %s19, 1
      %p142 = scmp.ne.s32.totalorder %s137, %s139
      %p143 = scmp.eq.s32.totalorder %s19, 0
      %p144 = por %p142, %p143
      %p145 = scmp.ne.s32.totalorder %s137, %s139
      %p146 = scmp.eq.s32.totalorder %s24, 1
      %p147 = por %p145, %p146
      %p148 = scmp.ne.s32.totalorder %s139, %s140
      %p149 = scmp.eq.s32.totalorder %s24, 0
      %p150 = por %p148, %p149
      %p151 = scmp.ne.s32.totalorder %s139, %s140
      %p152 = scmp.eq.s32.totalorder %s25, 1
      %p153 = por %p151, %p152
      %p155 = scmp.ne.s32.totalorder %s140, %s154
      %p156 = scmp.eq.s32.totalorder %s25, 0
      %p157 = por %p155, %p156
      %s159 = sadd.s32 %s158, 1
      %p162 = scmp.eq.s32.totalorder %s19, 1
      %p163 = scmp.ne.s32.totalorder %s158, %s160
      %p164 = scmp.eq.s32.totalorder %s19, 0
      %p165 = por %p163, %p164
      %p166 = scmp.ne.s32.totalorder %s158, %s160
      %p167 = scmp.eq.s32.totalorder %s24, 1
      %p168 = por %p166, %p167
      %p169 = scmp.ne.s32.totalorder %s160, %s161
      %p170 = scmp.eq.s32.totalorder %s24, 0
      %p171 = por %p169, %p170
      %p172 = scmp.ne.s32.totalorder %s160, %s161
      %p173 = scmp.eq.s32.totalorder %s25, 1
      %p174 = por %p172, %p173
      %p176 = scmp.ne.s32.totalorder %s161, %s175
      %p177 = scmp.eq.s32.totalorder %s25, 0
      %p178 = por %p176, %p177
      %s179 = ssub.s32 %s19, %s26
      %p180 = scmp.eq.s32.totalorder %s179, 0
      %s182 = sadd.s32 %s181, 1
      %s183 = scalar_select %p180, %s181, %s182
      %p186 = pneg %p180
      %p187 = scmp.eq.s32.totalorder %s19, 1
      %p188 = por %p186, %p187
      %p189 = scmp.ne.s32.totalorder %s181, %s184
      %p190 = scmp.eq.s32.totalorder %s19, 0
      %p191 = por %p189, %p190
      %p192 = scmp.ne.s32.totalorder %s181, %s184
      %p193 = scmp.eq.s32.totalorder %s24, 1
      %p194 = por %p192, %p193
      %p195 = scmp.ne.s32.totalorder %s184, %s185
      %p196 = scmp.eq.s32.totalorder %s24, 0
      %p197 = por %p195, %p196
      %p198 = scmp.ne.s32.totalorder %s184, %s185
      %p199 = scmp.eq.s32.totalorder %s25, 1
      %p200 = por %p198, %p199
      %p202 = scmp.ne.s32.totalorder %s185, %s201
      %p203 = scmp.eq.s32.totalorder %s25, 0
      %p204 = por %p202, %p203
      %p205 = scmp.le.s32.totalorder 1, %s19
      %p206 = scmp.lt.s32.totalorder %s19, 3
      %p207 = pnand %p205, %p206
      %p208 = pneg %p207
      // Predicated region
      $region9: #{tpu_custom_call.1} parent=5 // pred_check
        _
      $region10: #{tpu_custom_call.1} parent=5 // pred_check_branch
        %210 = sbr.rel (%p207) target = $region12
      $region11: #{tpu_custom_call.1} parent=5 // pred_region
        %s211 = ssub.s32 %s19, 1
        // Predicated region
        $region13: #{tpu_custom_call.1} parent=11 // pred_check
          %p212 = pneg %p66
        $region14: #{tpu_custom_call.1} parent=11 // pred_check_branch
          %214 = sbr.rel (%p212) target = $region16
        $region15: #{tpu_custom_call.1} parent=11 // pred_region
          %s216 = ssub.s32 256, 256
          %217 = vsyncadd [#allocation3], %s216
          %s218 = sshll.u32 [#allocation2], 4
          %s219 = int_to_ptr.vmem [resolvable:$true] %s218
          %224 = dma.hbm_to_vmem [thread:$0]  %s1, 256, %s219, [#allocation3], 128, 128, 8
        $region16: #{tpu_custom_call.1} parent=11 // pred_fallthru
          _
        // Predicated region
        $region17: #{tpu_custom_call.1} parent=11 // pred_check
          %p225 = pneg %p87
        $region18: #{tpu_custom_call.1} parent=11 // pred_check_branch
          %227 = sbr.rel (%p225) target = $region20
        $region19: #{tpu_custom_call.1} parent=11 // pred_region
          _
        $region20: #{tpu_custom_call.1} parent=11 // pred_fallthru
          _
        // Predicated region
        $region21: #{tpu_custom_call.1} parent=11 // pred_check
          %p228 = pneg %p108
        $region22: #{tpu_custom_call.1} parent=11 // pred_check_branch
          %230 = sbr.rel (%p228) target = $region24
        $region23: #{tpu_custom_call.1} parent=11 // pred_region
          %s232 = ssub.s32 2048, 2048
          %233 = vsyncadd [#allocation6], %s232
          %s234 = sshll.u32 [#allocation5], 4
          %s235 = int_to_ptr.vmem [resolvable:$true] %s234
          %240 = dma.hbm_to_vmem [thread:$0]  %s3, 2048, %s235, [#allocation6], 128, 128, 8
        $region24: #{tpu_custom_call.1} parent=11 // pred_fallthru
          _
        // Predicated region
        $region25: #{tpu_custom_call.1} parent=11 // pred_check
          %p241 = pneg %p129
        $region26: #{tpu_custom_call.1} parent=11 // pred_check_branch
          %243 = sbr.rel (%p241) target = $region28
        $region27: #{tpu_custom_call.1} parent=11 // pred_region
          %s245 = ssub.s32 4096, 4096
          %246 = vsyncadd [#allocation6], %s245
          %s247 = sshll.u32 [#allocation7], 4
          %s248 = int_to_ptr.vmem [resolvable:$true] %s247
          %253 = dma.hbm_to_vmem [thread:$0]  %s4, 4096, %s248, [#allocation6], 128, 128, 8
        $region28: #{tpu_custom_call.1} parent=11 // pred_fallthru
          _
        // Predicated region
        $region29: #{tpu_custom_call.1} parent=11 // pred_check
          %p254 = pneg %p150
        $region30: #{tpu_custom_call.1} parent=11 // pred_check_branch
          %256 = sbr.rel (%p254) target = $region32
        $region31: #{tpu_custom_call.1} parent=11 // pred_region
          _
        $region32: #{tpu_custom_call.1} parent=11 // pred_fallthru
          _
        // Predicated region
        $region33: #{tpu_custom_call.1} parent=11 // pred_check
          %p257 = pneg %p171
        $region34: #{tpu_custom_call.1} parent=11 // pred_check_branch
          %259 = sbr.rel (%p257) target = $region36
        $region35: #{tpu_custom_call.1} parent=11 // pred_region
          %s261 = ssub.s32 128, 128
          %262 = vsyncadd [#allocation9], %s261
          %s264 = sshll.u32 [#allocation8], 4
          %s265 = int_to_ptr.vmem [resolvable:$true] %s264
          %267 = dma.hbm_to_vmem [thread:$0]  %s6, 128, %s265, [#allocation9]
        $region36: #{tpu_custom_call.1} parent=11 // pred_fallthru
          _
      $region12: #{tpu_custom_call.1} parent=5 // pred_fallthru
        _
      %p268 = scmp.lt.s32.totalorder %s19, 2
      // Predicated region
      $region37: #{tpu_custom_call.1} parent=5 // pred_check
        %p269 = pneg %p268
      $region38: #{tpu_custom_call.1} parent=5 // pred_check_branch
        %271 = sbr.rel (%p269) target = $region40
      $region39: #{tpu_custom_call.1} parent=5 // pred_region
        // Predicated region
        $region41: #{tpu_custom_call.1} parent=39 // pred_check
          %p272 = pneg %p39
        $region42: #{tpu_custom_call.1} parent=39 // pred_check_branch
          %274 = sbr.rel (%p272) target = $region44
        $region43: #{tpu_custom_call.1} parent=39 // pred_region
          %s275 = smul.u32 13, %s19
          %p276 = scmp.lt.s32.totalorder %s275, 25
          %s277 = scalar_select %p276, %s275, 25
          %s278 = smul.addr %s277, 8
          %s279 = scalar_lea.vmem %s0, %s278
          %s280 = smul.u32 13, %s19
        $region44: #{tpu_custom_call.1} parent=39 // pred_fallthru
          _
      $region40: #{tpu_custom_call.1} parent=5 // pred_fallthru
        _
      %p281 = scmp.le.s32.totalorder 1, %s19
      %p282 = scmp.lt.s32.totalorder %s19, 3
      %p283 = pnand %p281, %p282
      %p284 = pneg %p283
      // Predicated region
      $region45: #{tpu_custom_call.1} parent=5 // pred_check
        _
      $region46: #{tpu_custom_call.1} parent=5 // pred_check_branch
        %286 = sbr.rel (%p283) target = $region48
      $region47: #{tpu_custom_call.1} parent=5 // pred_region
        %s287 = ssub.s32 %s19, 1
        // Predicated region
        $region49: #{tpu_custom_call.1} parent=47 // pred_check
          %p288 = pneg %p66
        $region50: #{tpu_custom_call.1} parent=47 // pred_check_branch
          %290 = sbr.rel (%p288) target = $region52
        $region51: #{tpu_custom_call.1} parent=47 // pred_region
          %291 = dma.done [#allocation3], 256
        $region52: #{tpu_custom_call.1} parent=47 // pred_fallthru
          _
        // Predicated region
        $region53: #{tpu_custom_call.1} parent=47 // pred_check
          %p292 = pneg %p108
        $region54: #{tpu_custom_call.1} parent=47 // pred_check_branch
          %294 = sbr.rel (%p292) target = $region56
        $region55: #{tpu_custom_call.1} parent=47 // pred_region
          %295 = dma.done [#allocation6], 2048
        $region56: #{tpu_custom_call.1} parent=47 // pred_fallthru
          _
        // Predicated region
        $region57: #{tpu_custom_call.1} parent=47 // pred_check
          %p296 = pneg %p129
        $region58: #{tpu_custom_call.1} parent=47 // pred_check_branch
          %298 = sbr.rel (%p296) target = $region60
        $region59: #{tpu_custom_call.1} parent=47 // pred_region
          %299 = dma.done [#allocation6], 4096
        $region60: #{tpu_custom_call.1} parent=47 // pred_fallthru
          _
        // Predicated region
        $region61: #{tpu_custom_call.1} parent=47 // pred_check
          %p300 = pneg %p171
        $region62: #{tpu_custom_call.1} parent=47 // pred_check_branch
          %302 = sbr.rel (%p300) target = $region64
        $region63: #{tpu_custom_call.1} parent=47 // pred_region
          %303 = dma.done [#allocation9], 128
        $region64: #{tpu_custom_call.1} parent=47 // pred_fallthru
          _
        %s304 = smul.u32 13, %s24
        %p305 = scmp.lt.s32.totalorder %s304, 25
        %s306 = scalar_select %p305, %s304, 25
        %s307 = smul.addr %s306, 8
        %s308 = scalar_lea.vmem %s0, %s307
        %p309 = pneg %p45
        %p310 = pneg %p42
        %p311 = pneg %p66
        %p312 = pneg %p63
        %p313 = pneg %p87
        %p314 = pneg %p84
        %p315 = pneg %p108
        %p316 = pneg %p105
        %p317 = pneg %p129
        %p318 = pneg %p126
        %p319 = pneg %p150
        %p320 = pneg %p147
        %p321 = pneg %p171
        %p322 = pneg %p168
        %p323 = pneg %p197
        %p324 = pneg %p194
        %s325 = sand.u32 %s184, 1
        %s326 = scalar_lea.sflag [#allocation4], %s325
        %s327 = sand.u32 %s184, 1
        %s328 = smul.addr %s327, 104
        %s329 = scalar_lea.vmem [#allocation10], %s328
        %s330 = smul.u32 13, %s24
        %p331 = scmp.lt.s32.totalorder %s330, 25
        %s332 = scalar_select %p331, %s330, 25
        %s333 = smul.addr %s332, 8
        %s334 = scalar_lea.vmem %s0, %s333
        %s335 = smul.u32 13, %s24
        %s336 = smul.u32 13, %s24
        %v337 = vld [vmem:[%s334] sm:$0xff]
        %v338 = vld [vmem:[%s334 + $0x8] sm:$0xff]
        %v339 = vld [vmem:[%s334 + $0x10] sm:$0xff]
        %v340 = vld [vmem:[%s334 + $0x18] sm:$0xff]
        %v341 = vld [vmem:[%s334 + $0x20] sm:$0xff]
        %v342 = vld [vmem:[%s334 + $0x28] sm:$0xff]
        %v343 = vld [vmem:[%s334 + $0x30] sm:$0xff]
        %v344 = vld [vmem:[%s334 + $0x38] sm:$0xff]
        %v345 = vld [vmem:[%s334 + $0x40] sm:$0xff]
        %v346 = vld [vmem:[%s334 + $0x48] sm:$0xff]
        %v347 = vld [vmem:[%s334 + $0x50] sm:$0xff]
        %v348 = vld [vmem:[%s334 + $0x58] sm:$0xff]
        %v349 = vld [vmem:[%s334 + $0x60] sm:$0xff]
        %v350 = vld [vmem:[#allocation8] sm:$0x1]
        %v351 = vld [vmem:[#allocation8 + $0x1] sm:$0x1]
        %v352 = vld [vmem:[#allocation8 + $0x2] sm:$0x1]
        %v353 = vld [vmem:[#allocation8 + $0x3] sm:$0x1]
        %v354 = vld [vmem:[#allocation8 + $0x4] sm:$0x1]
        %v355 = vld [vmem:[#allocation8 + $0x5] sm:$0x1]
        %v356 = vld [vmem:[#allocation8 + $0x6] sm:$0x1]
        %v357 = vld [vmem:[#allocation2] sm:$0xff]
        %v358 = vld [vmem:[#allocation2 + $0x8] sm:$0x1]
        %v359 = vlaneseq
        %v360 = vshrl.u32 %v359, 7
        %v361 = vsub.s32 0, %v360
        %v362 = vrot.slane %v350, %v361
        %vm363 = vcmask 72704
        %v365 = vsel %vm363, %v337, 0
        %v368 = vsel %vm363, %v338, 0
        %v371 = vsel %vm363, %v339, 0
        %v374 = vsel %vm363, %v340, 0
        %v377 = vsel %vm363, %v341, 0
        %v380 = vsel %vm363, %v342, 0
        %v383 = vsel %vm363, %v343, 0
        %v386 = vsel %vm363, %v344, 0
        %v389 = vsel %vm363, %v345, 0
        %v392 = vsel %vm363, %v346, 0
        %v395 = vsel %vm363, %v347, 0
        %v398 = vsel %vm363, %v348, 0
        %v401 = vsel %vm363, %v349, 0
        %vm403 = vcmask 1040384
        %v405 = vsel %vm403, %v358, 0
        %407 = vmatprep.subr.mxu0 0.0
        %408 = vmatpush1.msra.mxu0 %v357
        %409 = vmatprep.subr.mxu0 0.0
        %410 = vmatpush1.msra.mxu0 %v405
        %411 = vmatprep.subr.mxu0 0.0
        %412 = vmatpush1.msra.mxu0 0.0
        %413 = vmatprep.subr.mxu0 0.0
        %414 = vmatpush1.msra.mxu0 0.0
        %415 = vmatprep.subr.mxu0 0.0
        %416 = vmatpush1.msra.mxu0 0.0
        %417 = vmatprep.subr.mxu0 0.0
        %418 = vmatpush1.msra.mxu0 0.0
        %419 = vmatprep.subr.mxu0 0.0
        %420 = vmatpush1.msra.mxu0 0.0
        %421 = vmatprep.subr.mxu0 0.0
        %422 = vmatpush1.msra.mxu0 0.0
        %423 = vmatprep.subr.mxu0 0.0
        %424 = vmatpush1.msra.mxu0 0.0
        %425 = vmatprep.subr.mxu0 0.0
        %426 = vmatpush1.msra.mxu0 0.0
        %427 = vmatprep.subr.mxu0 0.0
        %428 = vmatpush1.msra.mxu0 0.0
        %429 = vmatprep.subr.mxu0 0.0
        %430 = vmatpush1.msra.mxu0 0.0
        %431 = vmatprep.subr.mxu0 0.0
        %432 = vmatpush1.msra.mxu0 0.0
        %433 = vmatprep.subr.mxu0 0.0
        %434 = vmatpush1.msra.mxu0 0.0
        %435 = vmatprep.subr.mxu0 0.0
        %436 = vmatpush1.msra.mxu0 0.0
        %437 = vmatprep.subr.mxu0 0.0
        %438 = vmatpush1.msra.mxu0 0.0
        %439 = vmatprep.subr.mxu0 0.0
        %440 = vmatpush1.msra.mxu0 0.0
        %441 = vmatprep.subr.mxu0 0.0
        %442 = vmatpush1.msra.mxu0 0.0
        %443 = vmatprep.subr.mxu0 0.0
        %444 = vmatpush1.msra.mxu0 0.0
        %445 = vmatprep.subr.mxu0 0.0
        %446 = vmatpush1.msra.mxu0 0.0
        %447 = vmatprep.subr.mxu0 0.0
        %448 = vmatpush1.msra.mxu0 0.0
        %449 = vmatprep.subr.mxu0 0.0
        %450 = vmatpush1.msra.mxu0 0.0
        %451 = vmatprep.subr.mxu0 0.0
        %452 = vmatpush1.msra.mxu0 0.0
        %453 = vmatprep.subr.mxu0 0.0
        %454 = vmatpush1.msra.mxu0 0.0
        %455 = vmatprep.subr.mxu0 0.0
        %456 = vmatpush1.msra.mxu0 0.0
        %457 = vmatprep.subr.mxu0 0.0
        %458 = vmatpush1.msra.mxu0 0.0
        %459 = vmatprep.subr.mxu0 0.0
        %460 = vmatpush1.msra.mxu0 0.0
        %461 = vmatprep.subr.mxu0 0.0
        %462 = vmatpush1.msra.mxu0 0.0
        %463 = vmatprep.subr.mxu0 0.0
        %464 = vmatpush1.msra.mxu0 0.0
        %465 = vmatprep.subr.mxu0 0.0
        %466 = vmatpush1.msra.mxu0 0.0
        %467 = vmatprep.subr.mxu0 0.0
        %468 = vmatpush1.msra.mxu0 0.0
        %469 = vmatprep.subr.mxu0 0.0
        %470 = vmatpush1.msra.mxu0 0.0
        %471 = vmatprep.mubr.f32.mxu0 0.0
        %472 = vmatmul.mubr.f32.gmra.mrb[0].mxu0 %v365
        %v473 = vpop.f32.mrb[0].mxu0
        %v474 = vadd.f32 %v362, %v473
        %v475 = vpop.f32.mrb[0].mxu0
        %476 = vmatprep.mubr.f32.mxu0 0.0
        %477 = vmatmul.mubr.f32.gmra.mrb[0].mxu0 %v368
        %v478 = vpop.f32.mrb[0].mxu0
        %v479 = vadd.f32 %v362, %v478
        %v480 = vpop.f32.mrb[0].mxu0
        %481 = vmatprep.mubr.f32.mxu0 0.0
        %482 = vmatmul.mubr.f32.gmra.mrb[0].mxu0 %v371
        %v483 = vpop.f32.mrb[0].mxu0
        %v484 = vadd.f32 %v362, %v483
        %v485 = vpop.f32.mrb[0].mxu0
        %486 = vmatprep.mubr.f32.mxu0 0.0
        %487 = vmatmul.mubr.f32.gmra.mrb[0].mxu0 %v374
        %v488 = vpop.f32.mrb[0].mxu0
        %v489 = vadd.f32 %v362, %v488
        %v490 = vpop.f32.mrb[0].mxu0
        %491 = vmatprep.mubr.f32.mxu0 0.0
        %492 = vmatmul.mubr.f32.gmra.mrb[0].mxu0 %v377
        %v493 = vpop.f32.mrb[0].mxu0
        %v494 = vadd.f32 %v362, %v493
        %v495 = vpop.f32.mrb[0].mxu0
        %496 = vmatprep.mubr.f32.mxu0 0.0
        %497 = vmatmul.mubr.f32.gmra.mrb[0].mxu0 %v380
        %v498 = vpop.f32.mrb[0].mxu0
        %v499 = vadd.f32 %v362, %v498
        %v500 = vpop.f32.mrb[0].mxu0
        %501 = vmatprep.mubr.f32.mxu0 0.0
        %502 = vmatmul.mubr.f32.gmra.mrb[0].mxu0 %v383
        %v503 = vpop.f32.mrb[0].mxu0
        %v504 = vadd.f32 %v362, %v503
        %v505 = vpop.f32.mrb[0].mxu0
        %506 = vmatprep.mubr.f32.mxu0 0.0
        %507 = vmatmul.mubr.f32.gmra.mrb[0].mxu0 %v386
        %v508 = vpop.f32.mrb[0].mxu0
        %v509 = vadd.f32 %v362, %v508
        %v510 = vpop.f32.mrb[0].mxu0
        %511 = vmatprep.mubr.f32.mxu0 0.0
        %512 = vmatmul.mubr.f32.gmra.mrb[0].mxu0 %v389
        %v513 = vpop.f32.mrb[0].mxu0
        %v514 = vadd.f32 %v362, %v513
        %v515 = vpop.f32.mrb[0].mxu0
        %516 = vmatprep.mubr.f32.mxu0 0.0
        %517 = vmatmul.mubr.f32.gmra.mrb[0].mxu0 %v392
        %v518 = vpop.f32.mrb[0].mxu0
        %v519 = vadd.f32 %v362, %v518
        %v520 = vpop.f32.mrb[0].mxu0
        %521 = vmatprep.mubr.f32.mxu0 0.0
        %522 = vmatmul.mubr.f32.gmra.mrb[0].mxu0 %v395
        %v523 = vpop.f32.mrb[0].mxu0
        %v524 = vadd.f32 %v362, %v523
        %v525 = vpop.f32.mrb[0].mxu0
        %526 = vmatprep.mubr.f32.mxu0 0.0
        %527 = vmatmul.mubr.f32.gmra.mrb[0].mxu0 %v398
        %v528 = vpop.f32.mrb[0].mxu0
        %v529 = vadd.f32 %v362, %v528
        %v530 = vpop.f32.mrb[0].mxu0
        %531 = vmatprep.mubr.f32.mxu0 0.0
        %532 = vmatmul.mubr.f32.gmra.mrb[0].mxu0 %v401
        %v533 = vpop.f32.mrb[0].mxu0
        %v534 = vadd.f32 %v362, %v533
        %v535 = vpop.f32.mrb[0].mxu0
        %536 = vdwg.mxu0
        %vm537 = vcmp.ge.f32.partialorder %v474, 0.0
        %vm538 = vcmp.ge.f32.partialorder %v479, 0.0
        %vm539 = vcmp.ge.f32.partialorder %v484, 0.0
        %vm540 = vcmp.ge.f32.partialorder %v489, 0.0
        %vm541 = vcmp.ge.f32.partialorder %v494, 0.0
        %vm542 = vcmp.ge.f32.partialorder %v499, 0.0
        %vm543 = vcmp.ge.f32.partialorder %v504, 0.0
        %vm544 = vcmp.ge.f32.partialorder %v509, 0.0
        %vm545 = vcmp.ge.f32.partialorder %v514, 0.0
        %vm546 = vcmp.ge.f32.partialorder %v519, 0.0
        %vm547 = vcmp.ge.f32.partialorder %v524, 0.0
        %vm548 = vcmp.ge.f32.partialorder %v529, 0.0
        %vm549 = vcmp.ge.f32.partialorder %v534, 0.0
        %v550 = vmul.f32 %v474, 0.1
        %v551 = vmul.f32 %v479, 0.1
        %v552 = vmul.f32 %v484, 0.1
        %v553 = vmul.f32 %v489, 0.1
        %v554 = vmul.f32 %v494, 0.1
        %v555 = vmul.f32 %v499, 0.1
        %v556 = vmul.f32 %v504, 0.1
        %v557 = vmul.f32 %v509, 0.1
        %v558 = vmul.f32 %v514, 0.1
        %v559 = vmul.f32 %v519, 0.1
        %v560 = vmul.f32 %v524, 0.1
        %v561 = vmul.f32 %v529, 0.1
        %v562 = vmul.f32 %v534, 0.1
        %v563 = vsel %vm537, %v474, %v550
        %v564 = vsel %vm538, %v479, %v551
        %v565 = vsel %vm539, %v484, %v552
        %v566 = vsel %vm540, %v489, %v553
        %v567 = vsel %vm541, %v494, %v554
        %v568 = vsel %vm542, %v499, %v555
        %v569 = vsel %vm543, %v504, %v556
        %v570 = vsel %vm544, %v509, %v557
        %v571 = vsel %vm545, %v514, %v558
        %v572 = vsel %vm546, %v519, %v559
        %v573 = vsel %vm547, %v524, %v560
        %v574 = vsel %vm548, %v529, %v561
        %v575 = vsel %vm549, %v534, %v562
        %v576 = vld [vmem:[%s2] sm:$0xff]
        %v577 = vld [vmem:[%s2 + $0x8] sm:$0xff]
        %v578 = vld [vmem:[%s2 + $0x10] sm:$0xff]
        %v579 = vld [vmem:[%s2 + $0x18] sm:$0xff]
        %v580 = vld [vmem:[%s2 + $0x20] sm:$0xff]
        %v581 = vld [vmem:[%s2 + $0x28] sm:$0xff]
        %v582 = vld [vmem:[%s2 + $0x30] sm:$0xff]
        %v583 = vld [vmem:[%s2 + $0x38] sm:$0xff]
        %v584 = vld [vmem:[%s2 + $0x40] sm:$0xff]
        %v585 = vld [vmem:[%s2 + $0x48] sm:$0xff]
        %v586 = vld [vmem:[%s2 + $0x50] sm:$0xff]
        %v587 = vld [vmem:[%s2 + $0x58] sm:$0xff]
        %v588 = vld [vmem:[%s2 + $0x60] sm:$0xff]
        %v589 = vld [vmem:[%s2 + $0x68] sm:$0xff]
        %v590 = vld [vmem:[%s2 + $0x70] sm:$0xff]
        %v591 = vld [vmem:[%s2 + $0x78] sm:$0xff]
        %v592 = vlaneseq
        %v593 = vshrl.u32 %v592, 7
        %v594 = vsub.s32 0, %v593
        %v595 = vrot.slane %v351, %v594
        %596 = vmatprep.subr.mxu0 0.0
        %597 = vmatpush1.msra.mxu0 %v576
        %598 = vmatprep.subr.mxu0 0.0
        %599 = vmatpush1.msra.mxu0 %v577
        %600 = vmatprep.subr.mxu0 0.0
        %601 = vmatpush1.msra.mxu0 %v578
        %602 = vmatprep.subr.mxu0 0.0
        %603 = vmatpush1.msra.mxu0 %v579
        %604 = vmatprep.subr.mxu0 0.0
        %605 = vmatpush1.msra.mxu0 %v580
        %606 = vmatprep.subr.mxu0 0.0
        %607 = vmatpush1.msra.mxu0 %v581
        %608 = vmatprep.subr.mxu0 0.0
        %609 = vmatpush1.msra.mxu0 %v582
        %610 = vmatprep.subr.mxu0 0.0
        %611 = vmatpush1.msra.mxu0 %v583
        %612 = vmatprep.subr.mxu0 0.0
        %613 = vmatpush1.msra.mxu0 %v584
        %614 = vmatprep.subr.mxu0 0.0
        %615 = vmatpush1.msra.mxu0 %v585
        %616 = vmatprep.subr.mxu0 0.0
        %617 = vmatpush1.msra.mxu0 %v586
        %618 = vmatprep.subr.mxu0 0.0
        %619 = vmatpush1.msra.mxu0 %v587
        %620 = vmatprep.subr.mxu0 0.0
        %621 = vmatpush1.msra.mxu0 %v588
        %622 = vmatprep.subr.mxu0 0.0
        %623 = vmatpush1.msra.mxu0 %v589
        %624 = vmatprep.subr.mxu0 0.0
        %625 = vmatpush1.msra.mxu0 %v590
        %626 = vmatprep.subr.mxu0 0.0
        %627 = vmatpush1.msra.mxu0 %v591
        %628 = vmatprep.subr.mxu0 0.0
        %629 = vmatpush1.msra.mxu0 0.0
        %630 = vmatprep.subr.mxu0 0.0
        %631 = vmatpush1.msra.mxu0 0.0
        %632 = vmatprep.subr.mxu0 0.0
        %633 = vmatpush1.msra.mxu0 0.0
        %634 = vmatprep.subr.mxu0 0.0
        %635 = vmatpush1.msra.mxu0 0.0
        %636 = vmatprep.subr.mxu0 0.0
        %637 = vmatpush1.msra.mxu0 0.0
        %638 = vmatprep.subr.mxu0 0.0
        %639 = vmatpush1.msra.mxu0 0.0
        %640 = vmatprep.subr.mxu0 0.0
        %641 = vmatpush1.msra.mxu0 0.0
        %642 = vmatprep.subr.mxu0 0.0
        %643 = vmatpush1.msra.mxu0 0.0
        %644 = vmatprep.subr.mxu0 0.0
        %645 = vmatpush1.msra.mxu0 0.0
        %646 = vmatprep.subr.mxu0 0.0
        %647 = vmatpush1.msra.mxu0 0.0
        %648 = vmatprep.subr.mxu0 0.0
        %649 = vmatpush1.msra.mxu0 0.0
        %650 = vmatprep.subr.mxu0 0.0
        %651 = vmatpush1.msra.mxu0 0.0
        %652 = vmatprep.subr.mxu0 0.0
        %653 = vmatpush1.msra.mxu0 0.0
        %654 = vmatprep.subr.mxu0 0.0
        %655 = vmatpush1.msra.mxu0 0.0
        %656 = vmatprep.subr.mxu0 0.0
        %657 = vmatpush1.msra.mxu0 0.0
        %658 = vmatprep.subr.mxu0 0.0
        %659 = vmatpush1.msra.mxu0 0.0
        %660 = vmatprep.mubr.f32.mxu0 0.0
        %661 = vmatmul.mubr.f32.gmra.mrb[0].mxu0 %v563
        %v662 = vpop.f32.mrb[0].mxu0
        %v663 = vadd.f32 %v595, %v662
        %v664 = vpop.f32.mrb[0].mxu0
        %665 = vmatprep.mubr.f32.mxu0 0.0
        %666 = vmatmul.mubr.f32.gmra.mrb[0].mxu0 %v564
        %v667 = vpop.f32.mrb[0].mxu0
        %v668 = vadd.f32 %v595, %v667
        %v669 = vpop.f32.mrb[0].mxu0
        %670 = vmatprep.mubr.f32.mxu0 0.0
        %671 = vmatmul.mubr.f32.gmra.mrb[0].mxu0 %v565
        %v672 = vpop.f32.mrb[0].mxu0
        %v673 = vadd.f32 %v595, %v672
        %v674 = vpop.f32.mrb[0].mxu0
        %675 = vmatprep.mubr.f32.mxu0 0.0
        %676 = vmatmul.mubr.f32.gmra.mrb[0].mxu0 %v566
        %v677 = vpop.f32.mrb[0].mxu0
        %v678 = vadd.f32 %v595, %v677
        %v679 = vpop.f32.mrb[0].mxu0
        %680 = vmatprep.mubr.f32.mxu0 0.0
        %681 = vmatmul.mubr.f32.gmra.mrb[0].mxu0 %v567
        %v682 = vpop.f32.mrb[0].mxu0
        %v683 = vadd.f32 %v595, %v682
        %v684 = vpop.f32.mrb[0].mxu0
        %685 = vmatprep.mubr.f32.mxu0 0.0
        %686 = vmatmul.mubr.f32.gmra.mrb[0].mxu0 %v568
        %v687 = vpop.f32.mrb[0].mxu0
        %v688 = vadd.f32 %v595, %v687
        %v689 = vpop.f32.mrb[0].mxu0
        %690 = vmatprep.mubr.f32.mxu0 0.0
        %691 = vmatmul.mubr.f32.gmra.mrb[0].mxu0 %v569
        %v692 = vpop.f32.mrb[0].mxu0
        %v693 = vadd.f32 %v595, %v692
        %v694 = vpop.f32.mrb[0].mxu0
        %695 = vmatprep.mubr.f32.mxu0 0.0
        %696 = vmatmul.mubr.f32.gmra.mrb[0].mxu0 %v570
        %v697 = vpop.f32.mrb[0].mxu0
        %v698 = vadd.f32 %v595, %v697
        %v699 = vpop.f32.mrb[0].mxu0
        %700 = vmatprep.mubr.f32.mxu0 0.0
        %701 = vmatmul.mubr.f32.gmra.mrb[0].mxu0 %v571
        %v702 = vpop.f32.mrb[0].mxu0
        %v703 = vadd.f32 %v595, %v702
        %v704 = vpop.f32.mrb[0].mxu0
        %705 = vmatprep.mubr.f32.mxu0 0.0
        %706 = vmatmul.mubr.f32.gmra.mrb[0].mxu0 %v572
        %v707 = vpop.f32.mrb[0].mxu0
        %v708 = vadd.f32 %v595, %v707
        %v709 = vpop.f32.mrb[0].mxu0
        %710 = vmatprep.mubr.f32.mxu0 0.0
        %711 = vmatmul.mubr.f32.gmra.mrb[0].mxu0 %v573
        %v712 = vpop.f32.mrb[0].mxu0
        %v713 = vadd.f32 %v595, %v712
        %v714 = vpop.f32.mrb[0].mxu0
        %715 = vmatprep.mubr.f32.mxu0 0.0
        %716 = vmatmul.mubr.f32.gmra.mrb[0].mxu0 %v574
        %v717 = vpop.f32.mrb[0].mxu0
        %v718 = vadd.f32 %v595, %v717
        %v719 = vpop.f32.mrb[0].mxu0
        %720 = vmatprep.mubr.f32.mxu0 0.0
        %721 = vmatmul.mubr.f32.gmra.mrb[0].mxu0 %v575
        %v722 = vpop.f32.mrb[0].mxu0
        %v723 = vadd.f32 %v595, %v722
        %v724 = vpop.f32.mrb[0].mxu0
        %725 = vdwg.mxu0
        %v726 = vadd.f32 %v474, %v663
        %v727 = vadd.f32 %v479, %v668
        %v728 = vadd.f32 %v484, %v673
        %v729 = vadd.f32 %v489, %v678
        %v730 = vadd.f32 %v494, %v683
        %v731 = vadd.f32 %v499, %v688
        %v732 = vadd.f32 %v504, %v693
        %v733 = vadd.f32 %v509, %v698
        %v734 = vadd.f32 %v514, %v703
        %v735 = vadd.f32 %v519, %v708
        %v736 = vadd.f32 %v524, %v713
        %v737 = vadd.f32 %v529, %v718
        %v738 = vadd.f32 %v534, %v723
        %vm739 = vcmp.ge.f32.partialorder %v726, 0.0
        %vm740 = vcmp.ge.f32.partialorder %v727, 0.0
        %vm741 = vcmp.ge.f32.partialorder %v728, 0.0
        %vm742 = vcmp.ge.f32.partialorder %v729, 0.0
        %vm743 = vcmp.ge.f32.partialorder %v730, 0.0
        %vm744 = vcmp.ge.f32.partialorder %v731, 0.0
        %vm745 = vcmp.ge.f32.partialorder %v732, 0.0
        %vm746 = vcmp.ge.f32.partialorder %v733, 0.0
        %vm747 = vcmp.ge.f32.partialorder %v734, 0.0
        %vm748 = vcmp.ge.f32.partialorder %v735, 0.0
        %vm749 = vcmp.ge.f32.partialorder %v736, 0.0
        %vm750 = vcmp.ge.f32.partialorder %v737, 0.0
        %vm751 = vcmp.ge.f32.partialorder %v738, 0.0
        %v752 = vmul.f32 %v726, 0.1
        %v753 = vmul.f32 %v727, 0.1
        %v754 = vmul.f32 %v728, 0.1
        %v755 = vmul.f32 %v729, 0.1
        %v756 = vmul.f32 %v730, 0.1
        %v757 = vmul.f32 %v731, 0.1
        %v758 = vmul.f32 %v732, 0.1
        %v759 = vmul.f32 %v733, 0.1
        %v760 = vmul.f32 %v734, 0.1
        %v761 = vmul.f32 %v735, 0.1
        %v762 = vmul.f32 %v736, 0.1
        %v763 = vmul.f32 %v737, 0.1
        %v764 = vmul.f32 %v738, 0.1
        %v765 = vsel %vm739, %v726, %v752
        %v766 = vsel %vm740, %v727, %v753
        %v767 = vsel %vm741, %v728, %v754
        %v768 = vsel %vm742, %v729, %v755
        %v769 = vsel %vm743, %v730, %v756
        %v770 = vsel %vm744, %v731, %v757
        %v771 = vsel %vm745, %v732, %v758
        %v772 = vsel %vm746, %v733, %v759
        %v773 = vsel %vm747, %v734, %v760
        %v774 = vsel %vm748, %v735, %v761
        %v775 = vsel %vm749, %v736, %v762
        %v776 = vsel %vm750, %v737, %v763
        %v777 = vsel %vm751, %v738, %v764
        %v778 = vld [vmem:[#allocation5] sm:$0xff]
        %v779 = vld [vmem:[#allocation5 + $0x8] sm:$0xff]
        %v780 = vld [vmem:[#allocation5 + $0x10] sm:$0xff]
        %v781 = vld [vmem:[#allocation5 + $0x18] sm:$0xff]
        %v782 = vld [vmem:[#allocation5 + $0x20] sm:$0xff]
        %v783 = vld [vmem:[#allocation5 + $0x28] sm:$0xff]
        %v784 = vld [vmem:[#allocation5 + $0x30] sm:$0xff]
        %v785 = vld [vmem:[#allocation5 + $0x38] sm:$0xff]
        %v786 = vld [vmem:[#allocation5 + $0x40] sm:$0xff]
        %v787 = vld [vmem:[#allocation5 + $0x48] sm:$0xff]
        %v788 = vld [vmem:[#allocation5 + $0x50] sm:$0xff]
        %v789 = vld [vmem:[#allocation5 + $0x58] sm:$0xff]
        %v790 = vld [vmem:[#allocation5 + $0x60] sm:$0xff]
        %v791 = vld [vmem:[#allocation5 + $0x68] sm:$0xff]
        %v792 = vld [vmem:[#allocation5 + $0x70] sm:$0xff]
        %v793 = vld [vmem:[#allocation5 + $0x78] sm:$0xff]
        %v794 = vlaneseq
        %v795 = vshrl.u32 %v794, 7
        %v796 = vsub.s32 0, %v795
        %v797 = vrot.slane %v352, %v796
        %798 = vmatprep.subr.mxu0 0.0
        %799 = vmatpush1.msra.mxu0 %v778
        %800 = vmatprep.subr.mxu0 0.0
        %801 = vmatpush1.msra.mxu0 %v779
        %802 = vmatprep.subr.mxu0 0.0
        %803 = vmatpush1.msra.mxu0 %v780
        %804 = vmatprep.subr.mxu0 0.0
        %805 = vmatpush1.msra.mxu0 %v781
        %806 = vmatprep.subr.mxu0 0.0
        %807 = vmatpush1.msra.mxu0 %v782
        %808 = vmatprep.subr.mxu0 0.0
        %809 = vmatpush1.msra.mxu0 %v783
        %810 = vmatprep.subr.mxu0 0.0
        %811 = vmatpush1.msra.mxu0 %v784
        %812 = vmatprep.subr.mxu0 0.0
        %813 = vmatpush1.msra.mxu0 %v785
        %814 = vmatprep.subr.mxu0 0.0
        %815 = vmatpush1.msra.mxu0 %v786
        %816 = vmatprep.subr.mxu0 0.0
        %817 = vmatpush1.msra.mxu0 %v787
        %818 = vmatprep.subr.mxu0 0.0
        %819 = vmatpush1.msra.mxu0 %v788
        %820 = vmatprep.subr.mxu0 0.0
        %821 = vmatpush1.msra.mxu0 %v789
        %822 = vmatprep.subr.mxu0 0.0
        %823 = vmatpush1.msra.mxu0 %v790
        %824 = vmatprep.subr.mxu0 0.0
        %825 = vmatpush1.msra.mxu0 %v791
        %826 = vmatprep.subr.mxu0 0.0
        %827 = vmatpush1.msra.mxu0 %v792
        %828 = vmatprep.subr.mxu0 0.0
        %829 = vmatpush1.msra.mxu0 %v793
        %830 = vmatprep.subr.mxu0 0.0
        %831 = vmatpush1.msra.mxu0 0.0
        %832 = vmatprep.subr.mxu0 0.0
        %833 = vmatpush1.msra.mxu0 0.0
        %834 = vmatprep.subr.mxu0 0.0
        %835 = vmatpush1.msra.mxu0 0.0
        %836 = vmatprep.subr.mxu0 0.0
        %837 = vmatpush1.msra.mxu0 0.0
        %838 = vmatprep.subr.mxu0 0.0
        %839 = vmatpush1.msra.mxu0 0.0
        %840 = vmatprep.subr.mxu0 0.0
        %841 = vmatpush1.msra.mxu0 0.0
        %842 = vmatprep.subr.mxu0 0.0
        %843 = vmatpush1.msra.mxu0 0.0
        %844 = vmatprep.subr.mxu0 0.0
        %845 = vmatpush1.msra.mxu0 0.0
        %846 = vmatprep.subr.mxu0 0.0
        %847 = vmatpush1.msra.mxu0 0.0
        %848 = vmatprep.subr.mxu0 0.0
        %849 = vmatpush1.msra.mxu0 0.0
        %850 = vmatprep.subr.mxu0 0.0
        %851 = vmatpush1.msra.mxu0 0.0
        %852 = vmatprep.subr.mxu0 0.0
        %853 = vmatpush1.msra.mxu0 0.0
        %854 = vmatprep.subr.mxu0 0.0
        %855 = vmatpush1.msra.mxu0 0.0
        %856 = vmatprep.subr.mxu0 0.0
        %857 = vmatpush1.msra.mxu0 0.0
        %858 = vmatprep.subr.mxu0 0.0
        %859 = vmatpush1.msra.mxu0 0.0
        %860 = vmatprep.subr.mxu0 0.0
        %861 = vmatpush1.msra.mxu0 0.0
        %862 = vmatprep.mubr.f32.mxu0 0.0
        %863 = vmatmul.mubr.f32.gmra.mrb[0].mxu0 %v765
        %v864 = vpop.f32.mrb[0].mxu0
        %v865 = vadd.f32 %v797, %v864
        %v866 = vpop.f32.mrb[0].mxu0
        %867 = vmatprep.mubr.f32.mxu0 0.0
        %868 = vmatmul.mubr.f32.gmra.mrb[0].mxu0 %v766
        %v869 = vpop.f32.mrb[0].mxu0
        %v870 = vadd.f32 %v797, %v869
        %v871 = vpop.f32.mrb[0].mxu0
        %872 = vmatprep.mubr.f32.mxu0 0.0
        %873 = vmatmul.mubr.f32.gmra.mrb[0].mxu0 %v767
        %v874 = vpop.f32.mrb[0].mxu0
        %v875 = vadd.f32 %v797, %v874
        %v876 = vpop.f32.mrb[0].mxu0
        %877 = vmatprep.mubr.f32.mxu0 0.0
        %878 = vmatmul.mubr.f32.gmra.mrb[0].mxu0 %v768
        %v879 = vpop.f32.mrb[0].mxu0
        %v880 = vadd.f32 %v797, %v879
        %v881 = vpop.f32.mrb[0].mxu0
        %882 = vmatprep.mubr.f32.mxu0 0.0
        %883 = vmatmul.mubr.f32.gmra.mrb[0].mxu0 %v769
        %v884 = vpop.f32.mrb[0].mxu0
        %v885 = vadd.f32 %v797, %v884
        %v886 = vpop.f32.mrb[0].mxu0
        %887 = vmatprep.mubr.f32.mxu0 0.0
        %888 = vmatmul.mubr.f32.gmra.mrb[0].mxu0 %v770
        %v889 = vpop.f32.mrb[0].mxu0
        %v890 = vadd.f32 %v797, %v889
        %v891 = vpop.f32.mrb[0].mxu0
        %892 = vmatprep.mubr.f32.mxu0 0.0
        %893 = vmatmul.mubr.f32.gmra.mrb[0].mxu0 %v771
        %v894 = vpop.f32.mrb[0].mxu0
        %v895 = vadd.f32 %v797, %v894
        %v896 = vpop.f32.mrb[0].mxu0
        %897 = vmatprep.mubr.f32.mxu0 0.0
        %898 = vmatmul.mubr.f32.gmra.mrb[0].mxu0 %v772
        %v899 = vpop.f32.mrb[0].mxu0
        %v900 = vadd.f32 %v797, %v899
        %v901 = vpop.f32.mrb[0].mxu0
        %902 = vmatprep.mubr.f32.mxu0 0.0
        %903 = vmatmul.mubr.f32.gmra.mrb[0].mxu0 %v773
        %v904 = vpop.f32.mrb[0].mxu0
        %v905 = vadd.f32 %v797, %v904
        %v906 = vpop.f32.mrb[0].mxu0
        %907 = vmatprep.mubr.f32.mxu0 0.0
        %908 = vmatmul.mubr.f32.gmra.mrb[0].mxu0 %v774
        %v909 = vpop.f32.mrb[0].mxu0
        %v910 = vadd.f32 %v797, %v909
        %v911 = vpop.f32.mrb[0].mxu0
        %912 = vmatprep.mubr.f32.mxu0 0.0
        %913 = vmatmul.mubr.f32.gmra.mrb[0].mxu0 %v775
        %v914 = vpop.f32.mrb[0].mxu0
        %v915 = vadd.f32 %v797, %v914
        %v916 = vpop.f32.mrb[0].mxu0
        %917 = vmatprep.mubr.f32.mxu0 0.0
        %918 = vmatmul.mubr.f32.gmra.mrb[0].mxu0 %v776
        %v919 = vpop.f32.mrb[0].mxu0
        %v920 = vadd.f32 %v797, %v919
        %v921 = vpop.f32.mrb[0].mxu0
        %922 = vmatprep.mubr.f32.mxu0 0.0
        %923 = vmatmul.mubr.f32.gmra.mrb[0].mxu0 %v777
        %v924 = vpop.f32.mrb[0].mxu0
        %v925 = vadd.f32 %v797, %v924
        %v926 = vpop.f32.mrb[0].mxu0
        %927 = vdwg.mxu0
        %v928 = vadd.f32 %v726, %v865
        %v929 = vadd.f32 %v727, %v870
        %v930 = vadd.f32 %v728, %v875
        %v931 = vadd.f32 %v729, %v880
        %v932 = vadd.f32 %v730, %v885
        %v933 = vadd.f32 %v731, %v890
        %v934 = vadd.f32 %v732, %v895
        %v935 = vadd.f32 %v733, %v900
        %v936 = vadd.f32 %v734, %v905
        %v937 = vadd.f32 %v735, %v910
        %v938 = vadd.f32 %v736, %v915
        %v939 = vadd.f32 %v737, %v920
        %v940 = vadd.f32 %v738, %v925
        %vm941 = vcmp.ge.f32.partialorder %v928, 0.0
        %vm942 = vcmp.ge.f32.partialorder %v929, 0.0
        %vm943 = vcmp.ge.f32.partialorder %v930, 0.0
        %vm944 = vcmp.ge.f32.partialorder %v931, 0.0
        %vm945 = vcmp.ge.f32.partialorder %v932, 0.0
        %vm946 = vcmp.ge.f32.partialorder %v933, 0.0
        %vm947 = vcmp.ge.f32.partialorder %v934, 0.0
        %vm948 = vcmp.ge.f32.partialorder %v935, 0.0
        %vm949 = vcmp.ge.f32.partialorder %v936, 0.0
        %vm950 = vcmp.ge.f32.partialorder %v937, 0.0
        %vm951 = vcmp.ge.f32.partialorder %v938, 0.0
        %vm952 = vcmp.ge.f32.partialorder %v939, 0.0
        %vm953 = vcmp.ge.f32.partialorder %v940, 0.0
        %v954 = vmul.f32 %v928, 0.1
        %v955 = vmul.f32 %v929, 0.1
        %v956 = vmul.f32 %v930, 0.1
        %v957 = vmul.f32 %v931, 0.1
        %v958 = vmul.f32 %v932, 0.1
        %v959 = vmul.f32 %v933, 0.1
        %v960 = vmul.f32 %v934, 0.1
        %v961 = vmul.f32 %v935, 0.1
        %v962 = vmul.f32 %v936, 0.1
        %v963 = vmul.f32 %v937, 0.1
        %v964 = vmul.f32 %v938, 0.1
        %v965 = vmul.f32 %v939, 0.1
        %v966 = vmul.f32 %v940, 0.1
        %v967 = vsel %vm941, %v928, %v954
        %v968 = vsel %vm942, %v929, %v955
        %v969 = vsel %vm943, %v930, %v956
        %v970 = vsel %vm944, %v931, %v957
        %v971 = vsel %vm945, %v932, %v958
        %v972 = vsel %vm946, %v933, %v959
        %v973 = vsel %vm947, %v934, %v960
        %v974 = vsel %vm948, %v935, %v961
        %v975 = vsel %vm949, %v936, %v962
        %v976 = vsel %vm950, %v937, %v963
        %v977 = vsel %vm951, %v938, %v964
        %v978 = vsel %vm952, %v939, %v965
        %v979 = vsel %vm953, %v940, %v966
        %v980 = vld [vmem:[#allocation7] sm:$0xff]
        %v981 = vld [vmem:[#allocation7 + $0x8] sm:$0xff]
        %v982 = vld [vmem:[#allocation7 + $0x10] sm:$0xff]
        %v983 = vld [vmem:[#allocation7 + $0x18] sm:$0xff]
        %v984 = vld [vmem:[#allocation7 + $0x20] sm:$0xff]
        %v985 = vld [vmem:[#allocation7 + $0x28] sm:$0xff]
        %v986 = vld [vmem:[#allocation7 + $0x30] sm:$0xff]
        %v987 = vld [vmem:[#allocation7 + $0x38] sm:$0xff]
        %v988 = vld [vmem:[#allocation7 + $0x40] sm:$0xff]
        %v989 = vld [vmem:[#allocation7 + $0x48] sm:$0xff]
        %v990 = vld [vmem:[#allocation7 + $0x50] sm:$0xff]
        %v991 = vld [vmem:[#allocation7 + $0x58] sm:$0xff]
        %v992 = vld [vmem:[#allocation7 + $0x60] sm:$0xff]
        %v993 = vld [vmem:[#allocation7 + $0x68] sm:$0xff]
        %v994 = vld [vmem:[#allocation7 + $0x70] sm:$0xff]
        %v995 = vld [vmem:[#allocation7 + $0x78] sm:$0xff]
        %v996 = vld [vmem:[#allocation7 + $0x80] sm:$0xff]
        %v997 = vld [vmem:[#allocation7 + $0x88] sm:$0xff]
        %v998 = vld [vmem:[#allocation7 + $0x90] sm:$0xff]
        %v999 = vld [vmem:[#allocation7 + $0x98] sm:$0xff]
        %v1000 = vld [vmem:[#allocation7 + $0xa0] sm:$0xff]
        %v1001 = vld [vmem:[#allocation7 + $0xa8] sm:$0xff]
        %v1002 = vld [vmem:[#allocation7 + $0xb0] sm:$0xff]
        %v1003 = vld [vmem:[#allocation7 + $0xb8] sm:$0xff]
        %v1004 = vld [vmem:[#allocation7 + $0xc0] sm:$0xff]
        %v1005 = vld [vmem:[#allocation7 + $0xc8] sm:$0xff]
        %v1006 = vld [vmem:[#allocation7 + $0xd0] sm:$0xff]
        %v1007 = vld [vmem:[#allocation7 + $0xd8] sm:$0xff]
        %v1008 = vld [vmem:[#allocation7 + $0xe0] sm:$0xff]
        %v1009 = vld [vmem:[#allocation7 + $0xe8] sm:$0xff]
        %v1010 = vld [vmem:[#allocation7 + $0xf0] sm:$0xff]
        %v1011 = vld [vmem:[#allocation7 + $0xf8] sm:$0xff]
        %vm1012 = vcmp.ge.f32.partialorder %v337, 0.0
        %vm1013 = vcmp.ge.f32.partialorder %v338, 0.0
        %vm1014 = vcmp.ge.f32.partialorder %v339, 0.0
        %vm1015 = vcmp.ge.f32.partialorder %v340, 0.0
        %vm1016 = vcmp.ge.f32.partialorder %v341, 0.0
        %vm1017 = vcmp.ge.f32.partialorder %v342, 0.0
        %vm1018 = vcmp.ge.f32.partialorder %v343, 0.0
        %vm1019 = vcmp.ge.f32.partialorder %v344, 0.0
        %vm1020 = vcmp.ge.f32.partialorder %v345, 0.0
        %vm1021 = vcmp.ge.f32.partialorder %v346, 0.0
        %vm1022 = vcmp.ge.f32.partialorder %v347, 0.0
        %vm1023 = vcmp.ge.f32.partialorder %v348, 0.0
        %vm1024 = vcmp.ge.f32.partialorder %v349, 0.0
        %v1025 = vmul.f32 %v337, 0.1
        %v1026 = vmul.f32 %v338, 0.1
        %v1027 = vmul.f32 %v339, 0.1
        %v1028 = vmul.f32 %v340, 0.1
        %v1029 = vmul.f32 %v341, 0.1
        %v1030 = vmul.f32 %v342, 0.1
        %v1031 = vmul.f32 %v343, 0.1
        %v1032 = vmul.f32 %v344, 0.1
        %v1033 = vmul.f32 %v345, 0.1
        %v1034 = vmul.f32 %v346, 0.1
        %v1035 = vmul.f32 %v347, 0.1
        %v1036 = vmul.f32 %v348, 0.1
        %v1037 = vmul.f32 %v349, 0.1
        %v1038 = vsel %vm1012, %v337, %v1025
        %v1039 = vsel %vm1013, %v338, %v1026
        %v1040 = vsel %vm1014, %v339, %v1027
        %v1041 = vsel %vm1015, %v340, %v1028
        %v1042 = vsel %vm1016, %v341, %v1029
        %v1043 = vsel %vm1017, %v342, %v1030
        %v1044 = vsel %vm1018, %v343, %v1031
        %v1045 = vsel %vm1019, %v344, %v1032
        %v1046 = vsel %vm1020, %v345, %v1033
        %v1047 = vsel %vm1021, %v346, %v1034
        %v1048 = vsel %vm1022, %v347, %v1035
        %v1049 = vsel %vm1023, %v348, %v1036
        %v1050 = vsel %vm1024, %v349, %v1037
        %1052 = vset.pattern.permute.xlu0 8
        %1053 = vperm.xlu0 %1052, %v1038
        %v1054 = vpop.permute.xlu0 %1053
        %1057 = vset.pattern.permute.xlu0 8
        %1058 = vperm.xlu0 %1057, %v1039
        %v1059 = vpop.permute.xlu0 %1058
        %1062 = vset.pattern.permute.xlu0 8
        %1063 = vperm.xlu0 %1062, %v1040
        %v1064 = vpop.permute.xlu0 %1063
        %1067 = vset.pattern.permute.xlu0 8
        %1068 = vperm.xlu0 %1067, %v1041
        %v1069 = vpop.permute.xlu0 %1068
        %1072 = vset.pattern.permute.xlu0 8
        %1073 = vperm.xlu0 %1072, %v1042
        %v1074 = vpop.permute.xlu0 %1073
        %1077 = vset.pattern.permute.xlu0 8
        %1078 = vperm.xlu0 %1077, %v1043
        %v1079 = vpop.permute.xlu0 %1078
        %1082 = vset.pattern.permute.xlu0 8
        %1083 = vperm.xlu0 %1082, %v1044
        %v1084 = vpop.permute.xlu0 %1083
        %1087 = vset.pattern.permute.xlu0 8
        %1088 = vperm.xlu0 %1087, %v1045
        %v1089 = vpop.permute.xlu0 %1088
        %1092 = vset.pattern.permute.xlu0 8
        %1093 = vperm.xlu0 %1092, %v1046
        %v1094 = vpop.permute.xlu0 %1093
        %1097 = vset.pattern.permute.xlu0 8
        %1098 = vperm.xlu0 %1097, %v1047
        %v1099 = vpop.permute.xlu0 %1098
        %1102 = vset.pattern.permute.xlu0 8
        %1103 = vperm.xlu0 %1102, %v1048
        %v1104 = vpop.permute.xlu0 %1103
        %1107 = vset.pattern.permute.xlu0 8
        %1108 = vperm.xlu0 %1107, %v1049
        %v1109 = vpop.permute.xlu0 %1108
        %1112 = vset.pattern.permute.xlu0 8
        %1113 = vperm.xlu0 %1112, %v1050
        %v1114 = vpop.permute.xlu0 %1113
        %v1116 = vlaneseq
        %v1117 = vshrl.u32 %v1116, 7
        %v1118 = vsub.s32 0, %v1117
        %v1119 = vrot.slane %v355, %v1118
        %v1120 = vmul.f32 %v1054, %v1119
        %v1121 = vmul.f32 %v1059, %v1119
        %v1122 = vmul.f32 %v1064, %v1119
        %v1123 = vmul.f32 %v1069, %v1119
        %v1124 = vmul.f32 %v1074, %v1119
        %v1125 = vmul.f32 %v1079, %v1119
        %v1126 = vmul.f32 %v1084, %v1119
        %v1127 = vmul.f32 %v1089, %v1119
        %v1128 = vmul.f32 %v1094, %v1119
        %v1129 = vmul.f32 %v1099, %v1119
        %v1130 = vmul.f32 %v1104, %v1119
        %v1131 = vmul.f32 %v1109, %v1119
        %v1132 = vmul.f32 %v1114, %v1119
        %1133 = vmatprep.subr.mxu0 0.0
        %1134 = vmatpush1.msra.mxu0 %v980
        %1135 = vmatprep.subr.mxu0 0.0
        %1136 = vmatpush1.msra.mxu0 %v981
        %1137 = vmatprep.subr.mxu0 0.0
        %1138 = vmatpush1.msra.mxu0 %v982
        %1139 = vmatprep.subr.mxu0 0.0
        %1140 = vmatpush1.msra.mxu0 %v983
        %1141 = vmatprep.subr.mxu0 0.0
        %1142 = vmatpush1.msra.mxu0 %v984
        %1143 = vmatprep.subr.mxu0 0.0
        %1144 = vmatpush1.msra.mxu0 %v985
        %1145 = vmatprep.subr.mxu0 0.0
        %1146 = vmatpush1.msra.mxu0 %v986
        %1147 = vmatprep.subr.mxu0 0.0
        %1148 = vmatpush1.msra.mxu0 %v987
        %1149 = vmatprep.subr.mxu0 0.0
        %1150 = vmatpush1.msra.mxu0 %v988
        %1151 = vmatprep.subr.mxu0 0.0
        %1152 = vmatpush1.msra.mxu0 %v989
        %1153 = vmatprep.subr.mxu0 0.0
        %1154 = vmatpush1.msra.mxu0 %v990
        %1155 = vmatprep.subr.mxu0 0.0
        %1156 = vmatpush1.msra.mxu0 %v991
        %1157 = vmatprep.subr.mxu0 0.0
        %1158 = vmatpush1.msra.mxu0 %v992
        %1159 = vmatprep.subr.mxu0 0.0
        %1160 = vmatpush1.msra.mxu0 %v993
        %1161 = vmatprep.subr.mxu0 0.0
        %1162 = vmatpush1.msra.mxu0 %v994
        %1163 = vmatprep.subr.mxu0 0.0
        %1164 = vmatpush1.msra.mxu0 %v995
        %1165 = vmatprep.subr.mxu0 0.0
        %1166 = vmatpush1.msra.mxu0 %v996
        %1167 = vmatprep.subr.mxu0 0.0
        %1168 = vmatpush1.msra.mxu0 %v997
        %1169 = vmatprep.subr.mxu0 0.0
        %1170 = vmatpush1.msra.mxu0 %v998
        %1171 = vmatprep.subr.mxu0 0.0
        %1172 = vmatpush1.msra.mxu0 %v999
        %1173 = vmatprep.subr.mxu0 0.0
        %1174 = vmatpush1.msra.mxu0 %v1000
        %1175 = vmatprep.subr.mxu0 0.0
        %1176 = vmatpush1.msra.mxu0 %v1001
        %1177 = vmatprep.subr.mxu0 0.0
        %1178 = vmatpush1.msra.mxu0 %v1002
        %1179 = vmatprep.subr.mxu0 0.0
        %1180 = vmatpush1.msra.mxu0 %v1003
        %1181 = vmatprep.subr.mxu0 0.0
        %1182 = vmatpush1.msra.mxu0 %v1004
        %1183 = vmatprep.subr.mxu0 0.0
        %1184 = vmatpush1.msra.mxu0 %v1005
        %1185 = vmatprep.subr.mxu0 0.0
        %1186 = vmatpush1.msra.mxu0 %v1006
        %1187 = vmatprep.subr.mxu0 0.0
        %1188 = vmatpush1.msra.mxu0 %v1007
        %1189 = vmatprep.subr.mxu0 0.0
        %1190 = vmatpush1.msra.mxu0 %v1008
        %1191 = vmatprep.subr.mxu0 0.0
        %1192 = vmatpush1.msra.mxu0 %v1009
        %1193 = vmatprep.subr.mxu0 0.0
        %1194 = vmatpush1.msra.mxu0 %v1010
        %1195 = vmatprep.subr.mxu0 0.0
        %1196 = vmatpush1.msra.mxu0 %v1011
        %1197 = vmatprep.mubr.f32.mxu0 %v928
        %1198 = vmatmul.mubr.f32.gmra.mrb[0].mxu0 %v967
        %v1199 = vpop.f32.mrb[0].mxu0
        %v1200 = vadd.f32 %v1120, %v1199
        %v1201 = vpop.f32.mrb[0].mxu0
        %1202 = vmatprep.mubr.f32.mxu0 %v929
        %1203 = vmatmul.mubr.f32.gmra.mrb[0].mxu0 %v968
        %v1204 = vpop.f32.mrb[0].mxu0
        %v1205 = vadd.f32 %v1121, %v1204
        %v1206 = vpop.f32.mrb[0].mxu0
        %1207 = vmatprep.mubr.f32.mxu0 %v930
        %1208 = vmatmul.mubr.f32.gmra.mrb[0].mxu0 %v969
        %v1209 = vpop.f32.mrb[0].mxu0
        %v1210 = vadd.f32 %v1122, %v1209
        %v1211 = vpop.f32.mrb[0].mxu0
        %1212 = vmatprep.mubr.f32.mxu0 %v931
        %1213 = vmatmul.mubr.f32.gmra.mrb[0].mxu0 %v970
        %v1214 = vpop.f32.mrb[0].mxu0
        %v1215 = vadd.f32 %v1123, %v1214
        %v1216 = vpop.f32.mrb[0].mxu0
        %1217 = vmatprep.mubr.f32.mxu0 %v932
        %1218 = vmatmul.mubr.f32.gmra.mrb[0].mxu0 %v971
        %v1219 = vpop.f32.mrb[0].mxu0
        %v1220 = vadd.f32 %v1124, %v1219
        %v1221 = vpop.f32.mrb[0].mxu0
        %1222 = vmatprep.mubr.f32.mxu0 %v933
        %1223 = vmatmul.mubr.f32.gmra.mrb[0].mxu0 %v972
        %v1224 = vpop.f32.mrb[0].mxu0
        %v1225 = vadd.f32 %v1125, %v1224
        %v1226 = vpop.f32.mrb[0].mxu0
        %1227 = vmatprep.mubr.f32.mxu0 %v934
        %1228 = vmatmul.mubr.f32.gmra.mrb[0].mxu0 %v973
        %v1229 = vpop.f32.mrb[0].mxu0
        %v1230 = vadd.f32 %v1126, %v1229
        %v1231 = vpop.f32.mrb[0].mxu0
        %1232 = vmatprep.mubr.f32.mxu0 %v935
        %1233 = vmatmul.mubr.f32.gmra.mrb[0].mxu0 %v974
        %v1234 = vpop.f32.mrb[0].mxu0
        %v1235 = vadd.f32 %v1127, %v1234
        %v1236 = vpop.f32.mrb[0].mxu0
        %1237 = vmatprep.mubr.f32.mxu0 %v936
        %1238 = vmatmul.mubr.f32.gmra.mrb[0].mxu0 %v975
        %v1239 = vpop.f32.mrb[0].mxu0
        %v1240 = vadd.f32 %v1128, %v1239
        %v1241 = vpop.f32.mrb[0].mxu0
        %1242 = vmatprep.mubr.f32.mxu0 %v937
        %1243 = vmatmul.mubr.f32.gmra.mrb[0].mxu0 %v976
        %v1244 = vpop.f32.mrb[0].mxu0
        %v1245 = vadd.f32 %v1129, %v1244
        %v1246 = vpop.f32.mrb[0].mxu0
        %1247 = vmatprep.mubr.f32.mxu0 %v938
        %1248 = vmatmul.mubr.f32.gmra.mrb[0].mxu0 %v977
        %v1249 = vpop.f32.mrb[0].mxu0
        %v1250 = vadd.f32 %v1130, %v1249
        %v1251 = vpop.f32.mrb[0].mxu0
        %1252 = vmatprep.mubr.f32.mxu0 %v939
        %1253 = vmatmul.mubr.f32.gmra.mrb[0].mxu0 %v978
        %v1254 = vpop.f32.mrb[0].mxu0
        %v1255 = vadd.f32 %v1131, %v1254
        %v1256 = vpop.f32.mrb[0].mxu0
        %1257 = vmatprep.mubr.f32.mxu0 %v940
        %1258 = vmatmul.mubr.f32.gmra.mrb[0].mxu0 %v979
        %v1259 = vpop.f32.mrb[0].mxu0
        %v1260 = vadd.f32 %v1132, %v1259
        %v1261 = vpop.f32.mrb[0].mxu0
        %1262 = vdwg.mxu0
        %1263 = vset.pattern.permute.xlu0 8
        %1264 = vperm.xlu0 %1263, %v337
        %v1265 = vpop.permute.xlu0 %1264
        %1267 = vset.pattern.permute.xlu0 8
        %1268 = vperm.xlu0 %1267, %v338
        %v1269 = vpop.permute.xlu0 %1268
        %1271 = vset.pattern.permute.xlu0 8
        %1272 = vperm.xlu0 %1271, %v339
        %v1273 = vpop.permute.xlu0 %1272
        %1275 = vset.pattern.permute.xlu0 8
        %1276 = vperm.xlu0 %1275, %v340
        %v1277 = vpop.permute.xlu0 %1276
        %1279 = vset.pattern.permute.xlu0 8
        %1280 = vperm.xlu0 %1279, %v341
        %v1281 = vpop.permute.xlu0 %1280
        %1283 = vset.pattern.permute.xlu0 8
        %1284 = vperm.xlu0 %1283, %v342
        %v1285 = vpop.permute.xlu0 %1284
        %1287 = vset.pattern.permute.xlu0 8
        %1288 = vperm.xlu0 %1287, %v343
        %v1289 = vpop.permute.xlu0 %1288
        %1291 = vset.pattern.permute.xlu0 8
        %1292 = vperm.xlu0 %1291, %v344
        %v1293 = vpop.permute.xlu0 %1292
        %1295 = vset.pattern.permute.xlu0 8
        %1296 = vperm.xlu0 %1295, %v345
        %v1297 = vpop.permute.xlu0 %1296
        %1299 = vset.pattern.permute.xlu0 8
        %1300 = vperm.xlu0 %1299, %v346
        %v1301 = vpop.permute.xlu0 %1300
        %1303 = vset.pattern.permute.xlu0 8
        %1304 = vperm.xlu0 %1303, %v347
        %v1305 = vpop.permute.xlu0 %1304
        %1307 = vset.pattern.permute.xlu0 8
        %1308 = vperm.xlu0 %1307, %v348
        %v1309 = vpop.permute.xlu0 %1308
        %1311 = vset.pattern.permute.xlu0 8
        %1312 = vperm.xlu0 %1311, %v349
        %v1313 = vpop.permute.xlu0 %1312
        %v1315 = vlaneseq
        %v1316 = vshrl.u32 %v1315, 7
        %v1317 = vsub.s32 0, %v1316
        %v1318 = vrot.slane %v356, %v1317
        %v1319 = vmul.f32 %v1265, %v1318
        %v1320 = vmul.f32 %v1269, %v1318
        %v1321 = vmul.f32 %v1273, %v1318
        %v1322 = vmul.f32 %v1277, %v1318
        %v1323 = vmul.f32 %v1281, %v1318
        %v1324 = vmul.f32 %v1285, %v1318
        %v1325 = vmul.f32 %v1289, %v1318
        %v1326 = vmul.f32 %v1293, %v1318
        %v1327 = vmul.f32 %v1297, %v1318
        %v1328 = vmul.f32 %v1301, %v1318
        %v1329 = vmul.f32 %v1305, %v1318
        %v1330 = vmul.f32 %v1309, %v1318
        %v1331 = vmul.f32 %v1313, %v1318
        %v1332 = vadd.f32 %v1200, %v1319
        %v1333 = vadd.f32 %v1205, %v1320
        %v1334 = vadd.f32 %v1210, %v1321
        %v1335 = vadd.f32 %v1215, %v1322
        %v1336 = vadd.f32 %v1220, %v1323
        %v1337 = vadd.f32 %v1225, %v1324
        %v1338 = vadd.f32 %v1230, %v1325
        %v1339 = vadd.f32 %v1235, %v1326
        %v1340 = vadd.f32 %v1240, %v1327
        %v1341 = vadd.f32 %v1245, %v1328
        %v1342 = vadd.f32 %v1250, %v1329
        %v1343 = vadd.f32 %v1255, %v1330
        %v1344 = vadd.f32 %v1260, %v1331
        %v1345 = vlaneseq
        %v1346 = vshrl.u32 %v1345, 7
        %v1347 = vsub.s32 0, %v1346
        %v1348 = vrot.slane %v353, %v1347
        %v1349 = vadd.f32 %v1332, %v1348
        %v1350 = vadd.f32 %v1333, %v1348
        %v1351 = vadd.f32 %v1334, %v1348
        %v1352 = vadd.f32 %v1335, %v1348
        %v1353 = vadd.f32 %v1336, %v1348
        %v1354 = vadd.f32 %v1337, %v1348
        %v1355 = vadd.f32 %v1338, %v1348
        %v1356 = vadd.f32 %v1339, %v1348
        %v1357 = vadd.f32 %v1340, %v1348
        %v1358 = vadd.f32 %v1341, %v1348
        %v1359 = vadd.f32 %v1342, %v1348
        %v1360 = vadd.f32 %v1343, %v1348
        %v1361 = vadd.f32 %v1344, %v1348
        %vm1362 = vcmp.ge.f32.partialorder %v1349, 0.0
        %vm1363 = vcmp.ge.f32.partialorder %v1350, 0.0
        %vm1364 = vcmp.ge.f32.partialorder %v1351, 0.0
        %vm1365 = vcmp.ge.f32.partialorder %v1352, 0.0
        %vm1366 = vcmp.ge.f32.partialorder %v1353, 0.0
        %vm1367 = vcmp.ge.f32.partialorder %v1354, 0.0
        %vm1368 = vcmp.ge.f32.partialorder %v1355, 0.0
        %vm1369 = vcmp.ge.f32.partialorder %v1356, 0.0
        %vm1370 = vcmp.ge.f32.partialorder %v1357, 0.0
        %vm1371 = vcmp.ge.f32.partialorder %v1358, 0.0
        %vm1372 = vcmp.ge.f32.partialorder %v1359, 0.0
        %vm1373 = vcmp.ge.f32.partialorder %v1360, 0.0
        %vm1374 = vcmp.ge.f32.partialorder %v1361, 0.0
        %v1375 = vmul.f32 %v1349, 0.1
        %v1376 = vmul.f32 %v1350, 0.1
        %v1377 = vmul.f32 %v1351, 0.1
        %v1378 = vmul.f32 %v1352, 0.1
        %v1379 = vmul.f32 %v1353, 0.1
        %v1380 = vmul.f32 %v1354, 0.1
        %v1381 = vmul.f32 %v1355, 0.1
        %v1382 = vmul.f32 %v1356, 0.1
        %v1383 = vmul.f32 %v1357, 0.1
        %v1384 = vmul.f32 %v1358, 0.1
        %v1385 = vmul.f32 %v1359, 0.1
        %v1386 = vmul.f32 %v1360, 0.1
        %v1387 = vmul.f32 %v1361, 0.1
        %v1388 = vsel %vm1362, %v1349, %v1375
        %v1389 = vsel %vm1363, %v1350, %v1376
        %v1390 = vsel %vm1364, %v1351, %v1377
        %v1391 = vsel %vm1365, %v1352, %v1378
        %v1392 = vsel %vm1366, %v1353, %v1379
        %v1393 = vsel %vm1367, %v1354, %v1380
        %v1394 = vsel %vm1368, %v1355, %v1381
        %v1395 = vsel %vm1369, %v1356, %v1382
        %v1396 = vsel %vm1370, %v1357, %v1383
        %v1397 = vsel %vm1371, %v1358, %v1384
        %v1398 = vsel %vm1372, %v1359, %v1385
        %v1399 = vsel %vm1373, %v1360, %v1386
        %v1400 = vsel %vm1374, %v1361, %v1387
        %v1401 = vld [vmem:[%s5] sm:$0xff]
        %v1402 = vld [vmem:[%s5 + $0x8] sm:$0xff]
        %v1403 = vld [vmem:[%s5 + $0x10] sm:$0xff]
        %v1404 = vld [vmem:[%s5 + $0x18] sm:$0xff]
        %v1405 = vld [vmem:[%s5 + $0x20] sm:$0xff]
        %v1406 = vld [vmem:[%s5 + $0x28] sm:$0xff]
        %v1407 = vld [vmem:[%s5 + $0x30] sm:$0xff]
        %v1408 = vld [vmem:[%s5 + $0x38] sm:$0xff]
        %v1409 = vld [vmem:[%s5 + $0x40] sm:$0xff]
        %v1410 = vld [vmem:[%s5 + $0x48] sm:$0xff]
        %v1411 = vld [vmem:[%s5 + $0x50] sm:$0xff]
        %v1412 = vld [vmem:[%s5 + $0x58] sm:$0xff]
        %v1413 = vld [vmem:[%s5 + $0x60] sm:$0xff]
        %v1414 = vld [vmem:[%s5 + $0x68] sm:$0xff]
        %v1415 = vld [vmem:[%s5 + $0x70] sm:$0xff]
        %v1416 = vld [vmem:[%s5 + $0x78] sm:$0xff]
        %v1417 = vlaneseq
        %v1418 = vshrl.u32 %v1417, 7
        %v1419 = vsub.s32 0, %v1418
        %v1420 = vrot.slane %v354, %v1419
        %1421 = vmatprep.subr.mxu0 0.0
        %1422 = vmatpush1.msra.mxu0 %v1401
        %1423 = vmatprep.subr.mxu0 0.0
        %1424 = vmatpush1.msra.mxu0 %v1402
        %1425 = vmatprep.subr.mxu0 0.0
        %1426 = vmatpush1.msra.mxu0 %v1403
        %1427 = vmatprep.subr.mxu0 0.0
        %1428 = vmatpush1.msra.mxu0 %v1404
        %1429 = vmatprep.subr.mxu0 0.0
        %1430 = vmatpush1.msra.mxu0 %v1405
        %1431 = vmatprep.subr.mxu0 0.0
        %1432 = vmatpush1.msra.mxu0 %v1406
        %1433 = vmatprep.subr.mxu0 0.0
        %1434 = vmatpush1.msra.mxu0 %v1407
        %1435 = vmatprep.subr.mxu0 0.0
        %1436 = vmatpush1.msra.mxu0 %v1408
        %1437 = vmatprep.subr.mxu0 0.0
        %1438 = vmatpush1.msra.mxu0 %v1409
        %1439 = vmatprep.subr.mxu0 0.0
        %1440 = vmatpush1.msra.mxu0 %v1410
        %1441 = vmatprep.subr.mxu0 0.0
        %1442 = vmatpush1.msra.mxu0 %v1411
        %1443 = vmatprep.subr.mxu0 0.0
        %1444 = vmatpush1.msra.mxu0 %v1412
        %1445 = vmatprep.subr.mxu0 0.0
        %1446 = vmatpush1.msra.mxu0 %v1413
        %1447 = vmatprep.subr.mxu0 0.0
        %1448 = vmatpush1.msra.mxu0 %v1414
        %1449 = vmatprep.subr.mxu0 0.0
        %1450 = vmatpush1.msra.mxu0 %v1415
        %1451 = vmatprep.subr.mxu0 0.0
        %1452 = vmatpush1.msra.mxu0 %v1416
        %1453 = vmatprep.subr.mxu0 0.0
        %1454 = vmatpush1.msra.mxu0 0.0
        %1455 = vmatprep.subr.mxu0 0.0
        %1456 = vmatpush1.msra.mxu0 0.0
        %1457 = vmatprep.subr.mxu0 0.0
        %1458 = vmatpush1.msra.mxu0 0.0
        %1459 = vmatprep.subr.mxu0 0.0
        %1460 = vmatpush1.msra.mxu0 0.0
        %1461 = vmatprep.subr.mxu0 0.0
        %1462 = vmatpush1.msra.mxu0 0.0
        %1463 = vmatprep.subr.mxu0 0.0
        %1464 = vmatpush1.msra.mxu0 0.0
        %1465 = vmatprep.subr.mxu0 0.0
        %1466 = vmatpush1.msra.mxu0 0.0
        %1467 = vmatprep.subr.mxu0 0.0
        %1468 = vmatpush1.msra.mxu0 0.0
        %1469 = vmatprep.subr.mxu0 0.0
        %1470 = vmatpush1.msra.mxu0 0.0
        %1471 = vmatprep.subr.mxu0 0.0
        %1472 = vmatpush1.msra.mxu0 0.0
        %1473 = vmatprep.subr.mxu0 0.0
        %1474 = vmatpush1.msra.mxu0 0.0
        %1475 = vmatprep.subr.mxu0 0.0
        %1476 = vmatpush1.msra.mxu0 0.0
        %1477 = vmatprep.subr.mxu0 0.0
        %1478 = vmatpush1.msra.mxu0 0.0
        %1479 = vmatprep.subr.mxu0 0.0
        %1480 = vmatpush1.msra.mxu0 0.0
        %1481 = vmatprep.subr.mxu0 0.0
        %1482 = vmatpush1.msra.mxu0 0.0
        %1483 = vmatprep.subr.mxu0 0.0
        %1484 = vmatpush1.msra.mxu0 0.0
        %1485 = vmatprep.mubr.f32.mxu0 0.0
        %1486 = vmatmul.mubr.f32.gmra.mrb[0].mxu0 %v1388
        %v1487 = vpop.f32.mrb[0].mxu0
        %v1488 = vadd.f32 %v1420, %v1487
        %v1489 = vpop.f32.mrb[0].mxu0
        %1490 = vmatprep.mubr.f32.mxu0 0.0
        %1491 = vmatmul.mubr.f32.gmra.mrb[0].mxu0 %v1389
        %v1492 = vpop.f32.mrb[0].mxu0
        %v1493 = vadd.f32 %v1420, %v1492
        %v1494 = vpop.f32.mrb[0].mxu0
        %1495 = vmatprep.mubr.f32.mxu0 0.0
        %1496 = vmatmul.mubr.f32.gmra.mrb[0].mxu0 %v1390
        %v1497 = vpop.f32.mrb[0].mxu0
        %v1498 = vadd.f32 %v1420, %v1497
        %v1499 = vpop.f32.mrb[0].mxu0
        %1500 = vmatprep.mubr.f32.mxu0 0.0
        %1501 = vmatmul.mubr.f32.gmra.mrb[0].mxu0 %v1391
        %v1502 = vpop.f32.mrb[0].mxu0
        %v1503 = vadd.f32 %v1420, %v1502
        %v1504 = vpop.f32.mrb[0].mxu0
        %1505 = vmatprep.mubr.f32.mxu0 0.0
        %1506 = vmatmul.mubr.f32.gmra.mrb[0].mxu0 %v1392
        %v1507 = vpop.f32.mrb[0].mxu0
        %v1508 = vadd.f32 %v1420, %v1507
        %v1509 = vpop.f32.mrb[0].mxu0
        %1510 = vmatprep.mubr.f32.mxu0 0.0
        %1511 = vmatmul.mubr.f32.gmra.mrb[0].mxu0 %v1393
        %v1512 = vpop.f32.mrb[0].mxu0
        %v1513 = vadd.f32 %v1420, %v1512
        %v1514 = vpop.f32.mrb[0].mxu0
        %1515 = vmatprep.mubr.f32.mxu0 0.0
        %1516 = vmatmul.mubr.f32.gmra.mrb[0].mxu0 %v1394
        %v1517 = vpop.f32.mrb[0].mxu0
        %v1518 = vadd.f32 %v1420, %v1517
        %v1519 = vpop.f32.mrb[0].mxu0
        %1520 = vmatprep.mubr.f32.mxu0 0.0
        %1521 = vmatmul.mubr.f32.gmra.mrb[0].mxu0 %v1395
        %v1522 = vpop.f32.mrb[0].mxu0
        %v1523 = vadd.f32 %v1420, %v1522
        %v1524 = vpop.f32.mrb[0].mxu0
        %1525 = vmatprep.mubr.f32.mxu0 0.0
        %1526 = vmatmul.mubr.f32.gmra.mrb[0].mxu0 %v1396
        %v1527 = vpop.f32.mrb[0].mxu0
        %v1528 = vadd.f32 %v1420, %v1527
        %v1529 = vpop.f32.mrb[0].mxu0
        %1530 = vmatprep.mubr.f32.mxu0 0.0
        %1531 = vmatmul.mubr.f32.gmra.mrb[0].mxu0 %v1397
        %v1532 = vpop.f32.mrb[0].mxu0
        %v1533 = vadd.f32 %v1420, %v1532
        %v1534 = vpop.f32.mrb[0].mxu0
        %1535 = vmatprep.mubr.f32.mxu0 0.0
        %1536 = vmatmul.mubr.f32.gmra.mrb[0].mxu0 %v1398
        %v1537 = vpop.f32.mrb[0].mxu0
        %v1538 = vadd.f32 %v1420, %v1537
        %v1539 = vpop.f32.mrb[0].mxu0
        %1540 = vmatprep.mubr.f32.mxu0 0.0
        %1541 = vmatmul.mubr.f32.gmra.mrb[0].mxu0 %v1399
        %v1542 = vpop.f32.mrb[0].mxu0
        %v1543 = vadd.f32 %v1420, %v1542
        %v1544 = vpop.f32.mrb[0].mxu0
        %1545 = vmatprep.mubr.f32.mxu0 0.0
        %1546 = vmatmul.mubr.f32.gmra.mrb[0].mxu0 %v1400
        %v1547 = vpop.f32.mrb[0].mxu0
        %v1548 = vadd.f32 %v1420, %v1547
        %v1549 = vpop.f32.mrb[0].mxu0
        %1550 = vdwg.mxu0
        %v1551 = vadd.f32 %v1349, %v1488
        %v1552 = vadd.f32 %v1350, %v1493
        %v1553 = vadd.f32 %v1351, %v1498
        %v1554 = vadd.f32 %v1352, %v1503
        %v1555 = vadd.f32 %v1353, %v1508
        %v1556 = vadd.f32 %v1354, %v1513
        %v1557 = vadd.f32 %v1355, %v1518
        %v1558 = vadd.f32 %v1356, %v1523
        %v1559 = vadd.f32 %v1357, %v1528
        %v1560 = vadd.f32 %v1358, %v1533
        %v1561 = vadd.f32 %v1359, %v1538
        %v1562 = vadd.f32 %v1360, %v1543
        %v1563 = vadd.f32 %v1361, %v1548
        %vm1564 = vcmp.ge.f32.partialorder %v1551, 0.0
        %vm1565 = vcmp.ge.f32.partialorder %v1552, 0.0
        %vm1566 = vcmp.ge.f32.partialorder %v1553, 0.0
        %vm1567 = vcmp.ge.f32.partialorder %v1554, 0.0
        %vm1568 = vcmp.ge.f32.partialorder %v1555, 0.0
        %vm1569 = vcmp.ge.f32.partialorder %v1556, 0.0
        %vm1570 = vcmp.ge.f32.partialorder %v1557, 0.0
        %vm1571 = vcmp.ge.f32.partialorder %v1558, 0.0
        %vm1572 = vcmp.ge.f32.partialorder %v1559, 0.0
        %vm1573 = vcmp.ge.f32.partialorder %v1560, 0.0
        %vm1574 = vcmp.ge.f32.partialorder %v1561, 0.0
        %vm1575 = vcmp.ge.f32.partialorder %v1562, 0.0
        %vm1576 = vcmp.ge.f32.partialorder %v1563, 0.0
        %v1577 = vmul.f32 %v1551, 0.1
        %v1578 = vmul.f32 %v1552, 0.1
        %v1579 = vmul.f32 %v1553, 0.1
        %v1580 = vmul.f32 %v1554, 0.1
        %v1581 = vmul.f32 %v1555, 0.1
        %v1582 = vmul.f32 %v1556, 0.1
        %v1583 = vmul.f32 %v1557, 0.1
        %v1584 = vmul.f32 %v1558, 0.1
        %v1585 = vmul.f32 %v1559, 0.1
        %v1586 = vmul.f32 %v1560, 0.1
        %v1587 = vmul.f32 %v1561, 0.1
        %v1588 = vmul.f32 %v1562, 0.1
        %v1589 = vmul.f32 %v1563, 0.1
        %v1590 = vsel %vm1564, %v1551, %v1577
        %v1591 = vsel %vm1565, %v1552, %v1578
        %v1592 = vsel %vm1566, %v1553, %v1579
        %v1593 = vsel %vm1567, %v1554, %v1580
        %v1594 = vsel %vm1568, %v1555, %v1581
        %v1595 = vsel %vm1569, %v1556, %v1582
        %v1596 = vsel %vm1570, %v1557, %v1583
        %v1597 = vsel %vm1571, %v1558, %v1584
        %v1598 = vsel %vm1572, %v1559, %v1585
        %v1599 = vsel %vm1573, %v1560, %v1586
        %v1600 = vsel %vm1574, %v1561, %v1587
        %v1601 = vsel %vm1575, %v1562, %v1588
        %v1602 = vsel %vm1576, %v1563, %v1589
        %1603 = vst [vmem:[%s329] sm:$0xff] %v1590
        %1604 = vst [vmem:[%s329 + $0x8] sm:$0xff] %v1591
        %1605 = vst [vmem:[%s329 + $0x10] sm:$0xff] %v1592
        %1606 = vst [vmem:[%s329 + $0x18] sm:$0xff] %v1593
        %1607 = vst [vmem:[%s329 + $0x20] sm:$0xff] %v1594
        %1608 = vst [vmem:[%s329 + $0x28] sm:$0xff] %v1595
        %1609 = vst [vmem:[%s329 + $0x30] sm:$0xff] %v1596
        %1610 = vst [vmem:[%s329 + $0x38] sm:$0xff] %v1597
        %1611 = vst [vmem:[%s329 + $0x40] sm:$0xff] %v1598
        %1612 = vst [vmem:[%s329 + $0x48] sm:$0xff] %v1599
        %1613 = vst [vmem:[%s329 + $0x50] sm:$0xff] %v1600
        %1614 = vst [vmem:[%s329 + $0x58] sm:$0xff] %v1601
        %1615 = vst [vmem:[%s329 + $0x60] sm:$0xff] %v1602
        %s1616 = sand.u32 %s184, 1
        %s1617 = scalar_lea.sflag [#allocation4], %s1616
        %s1618 = sand.u32 %s184, 1
        %s1619 = smul.addr %s1618, 104
        %s1620 = scalar_lea.vmem [#allocation10], %s1619
        // Predicated region
        $region65: #{tpu_custom_call.1} parent=47 // pred_check
          %p1621 = pneg %p194
        $region66: #{tpu_custom_call.1} parent=47 // pred_check_branch
          %1623 = sbr.rel (%p1621) target = $region68
        $region67: #{tpu_custom_call.1} parent=47 // pred_region
          %s1624 = smul.u32 13, %s24
          %s1626 = ssub.s32 1664, 1664
          %1627 = vsyncadd %s1617, %s1626
          %s1628 = smul.addr %s1624, 128
          %s1629 = scalar_lea.hbm %s7, %s1628
          %s1630 = sshll.u32 %s1620, 4
          %s1631 = int_to_ptr.vmem [resolvable:$true] %s1630
          %1636 = dma.vmem_to_hbm [thread:$0]  %s1631, 1664, %s1629, %s1617, 128, 128, 8
        $region68: #{tpu_custom_call.1} parent=47 // pred_fallthru
          _
      $region48: #{tpu_custom_call.1} parent=5 // pred_fallthru
        _
      %p1637 = scmp.le.s32.totalorder 2, %s19
      // Predicated region
      $region69: #{tpu_custom_call.1} parent=5 // pred_check
        %p1638 = pneg %p1637
      $region70: #{tpu_custom_call.1} parent=5 // pred_check_branch
        %1640 = sbr.rel (%p1638) target = $region72
      $region71: #{tpu_custom_call.1} parent=5 // pred_region
        %s1641 = ssub.s32 %s19, 2
        // Predicated region
        $region73: #{tpu_custom_call.1} parent=71 // pred_check
          %p1642 = pneg %p200
        $region74: #{tpu_custom_call.1} parent=71 // pred_check_branch
          %1644 = sbr.rel (%p1642) target = $region76
        $region75: #{tpu_custom_call.1} parent=71 // pred_region
          %s1645 = sand.u32 %s185, 1
          %s1646 = scalar_lea.sflag [#allocation4], %s1645
          %s1647 = sand.u32 %s185, 1
          %s1648 = smul.addr %s1647, 104
          %s1649 = scalar_lea.vmem [#allocation10], %s1648
          %1650 = dma.done %s1646, 1664
        $region76: #{tpu_custom_call.1} parent=71 // pred_fallthru
          _
      $region72: #{tpu_custom_call.1} parent=5 // pred_fallthru
        _
    $region6: #{tpu_custom_call.1} parent=1 // loop_footer
      %s23 = sadd.s32 1, %s19
    $region7: #{tpu_custom_call.1} parent=1 // loop_footer_branch
      %18 = sbr.rel target = $region3
    $region8: #{tpu_custom_call.1} parent=1 // loop_exit
      _
    %1651 = vsyncpa [#allocation3], 1
    %s1652 = scalar_lea.sflag [#allocation3], 1
    %1653 = vsyncpa %s1652, 1
    %1654 = vsyncpa [#allocation6], 1
    %1655 = vsyncpa [#allocation9], 1
    %1656 = vsyncpa [#allocation4], 1
    %s1657 = scalar_lea.sflag [#allocation4], 1
    %1658 = vsyncpa %s1657, 1

// kernel: tpu_custom_call.1
$region0: #{tpu_custom_call.1}
  #allocation0 [shape = 'u32[]', space=smem, size = 0x4, offset = 0x4, fixed_abs, tag = 'smem constant byte address 0x4 - core index']
  #allocation1 [shape = 'u32[144,128]{1,0:T(1,128)}', space=vmem, size = 0x12000, scoped, tag = 'internal scratch']
  %s0 = inlined_call_operand.vmem [shape: f32[208,9], index: 0, kind: input, shape index: {}]
  %s1 = inlined_call_operand.hbm [shape: f32[9,128], index: 1, kind: input, shape index: {}]
  %s2 = inlined_call_operand.vmem [shape: f32[128,128], index: 2, kind: input, shape index: {}]
  %s3 = inlined_call_operand.hbm [shape: f32[128,128], index: 3, kind: input, shape index: {}]
  %s4 = inlined_call_operand.hbm [shape: f32[256,128], index: 4, kind: input, shape index: {}]
  %s5 = inlined_call_operand.vmem [shape: f32[128,128], index: 5, kind: input, shape index: {}]
  %s6 = inlined_call_operand.hbm [shape: f32[8,128], index: 6, kind: input, shape index: {}]
  %s7 = inlined_call_operand.hbm [shape: f32[208,128], index: 7, kind: output, shape index: {}]
  %s8 = sld [smem:[#allocation0]]
  $region77: #{tpu_custom_call.1} parent=0
    _
  %s10 = ssub.s32 1, %s8
  %s11 = scalar_select 0, %s10, %s8
  $region1: #{tpu_custom_call.1} parent=0
    #allocation2 [shape = 'u8[8192]{0}', space=vmem, size = 0x2000, scoped, tag = 'input window, operand 1, single buffered']
    #allocation3 [shape = 's32[2]{0}', space=sflag, size = 0x8, scoped, tag = 'scoped memory for tpu_custom_call.1']
    #allocation4 [shape = 's32[2]{0}', space=sflag, size = 0x8, scoped, tag = 'scoped memory for tpu_custom_call.1']
    #allocation5 [shape = 'u8[65536]{0}', space=vmem, size = 0x10000, scoped, tag = 'input window, operand 3, single buffered']
    #allocation6 [shape = 's32[1]{0}', space=sflag, size = 0x4, scoped, tag = 'scoped memory for tpu_custom_call.1']
    #allocation7 [shape = 'u8[131072]{0}', space=vmem, size = 0x20000, scoped, tag = 'input window, operand 4, single buffered']
    #allocation8 [shape = 'u8[4096]{0}', space=vmem, size = 0x1000, scoped, tag = 'input window, operand 6, single buffered']
    #allocation9 [shape = 's32[1]{0}', space=sflag, size = 0x4, scoped, tag = 'scoped memory for tpu_custom_call.1']
    #allocation10 [shape = 'u8[106496]{0}', space=vmem, size = 0x1a000, scoped, tag = 'output window, operand 0']
    %12 = vsyncpa [#allocation3], 0
    %13 = vsyncpa [#allocation6], 0
    %14 = vsyncpa [#allocation9], 0
    %15 = vsyncpa [#allocation4], 0
    %s16 = scalar_lea.sflag [#allocation4], 1
    %17 = vsyncpa %s16, 0
    loop: start=0, step=1, limit=4
    $region2: #{tpu_custom_call.1} parent=1 // loop_pre_header
      _
    $region3: #{tpu_custom_call.1} parent=1 // loop_header
      %s19 = sphi 0, %s23
      %p20 = scmp.ge.s32.totalorder %s19, 4
      %s29 = sphi 0, %s31
      %s32 = sphi 0, %s29
      %s33 = sphi 0, %s32
      %s49 = sphi 0, %s33
      %s53 = sphi 0, %s53
      %s55 = sphi 0, %s53
      %s56 = sphi 0, %s55
      %s70 = sphi 0, %s56
      %s74 = sphi 0, %s74
      %s76 = sphi 0, %s74
      %s77 = sphi 0, %s76
      %s91 = sphi 0, %s77
      %s95 = sphi 0, %s95
      %s97 = sphi 0, %s95
      %s98 = sphi 0, %s97
      %s112 = sphi 0, %s98
      %s116 = sphi 0, %s116
      %s118 = sphi 0, %s116
      %s119 = sphi 0, %s118
      %s133 = sphi 0, %s119
      %s137 = sphi 0, %s137
      %s139 = sphi 0, %s137
      %s140 = sphi 0, %s139
      %s154 = sphi 0, %s140
      %s158 = sphi 0, %s158
      %s160 = sphi 0, %s158
      %s161 = sphi 0, %s160
      %s175 = sphi 0, %s161
      %s181 = sphi 0, %s183
      %s184 = sphi 0, %s181
      %s185 = sphi 0, %s184
      %s201 = sphi 0, %s185
    $region4: #{tpu_custom_call.1} parent=1 // loop_header_branch
      %22 = sbr.rel (%p20) target = $region8
    $region5: #{tpu_custom_call.1} parent=1 // loop_body
      %s24 = ssub.s32 %s19, 1
      %s25 = ssub.s32 %s19, 2
      %s26 = sadd.s32 %s19, 1
      %s27 = ssub.s32 %s19, %s26
      %p28 = scmp.eq.s32.totalorder %s27, 0
      %s30 = sadd.s32 %s29, 1
      %s31 = scalar_select %p28, %s29, %s30
      %p34 = pneg %p28
      %p35 = scmp.eq.s32.totalorder %s19, 1
      %p36 = por %p34, %p35
      %p37 = scmp.ne.s32.totalorder %s29, %s32
      %p38 = scmp.eq.s32.totalorder %s19, 0
      %p39 = por %p37, %p38
      %p40 = scmp.ne.s32.totalorder %s29, %s32
      %p41 = scmp.eq.s32.totalorder %s24, 1
      %p42 = por %p40, %p41
      %p43 = scmp.ne.s32.totalorder %s32, %s33
      %p44 = scmp.eq.s32.totalorder %s24, 0
      %p45 = por %p43, %p44
      %p46 = scmp.ne.s32.totalorder %s32, %s33
      %p47 = scmp.eq.s32.totalorder %s25, 1
      %p48 = por %p46, %p47
      %p50 = scmp.ne.s32.totalorder %s33, %s49
      %p51 = scmp.eq.s32.totalorder %s25, 0
      %p52 = por %p50, %p51
      %s54 = sadd.s32 %s53, 1
      %p57 = scmp.eq.s32.totalorder %s19, 1
      %p58 = scmp.ne.s32.totalorder %s53, %s55
      %p59 = scmp.eq.s32.totalorder %s19, 0
      %p60 = por %p58, %p59
      %p61 = scmp.ne.s32.totalorder %s53, %s55
      %p62 = scmp.eq.s32.totalorder %s24, 1
      %p63 = por %p61, %p62
      %p64 = scmp.ne.s32.totalorder %s55, %s56
      %p65 = scmp.eq.s32.totalorder %s24, 0
      %p66 = por %p64, %p65
      %p67 = scmp.ne.s32.totalorder %s55, %s56
      %p68 = scmp.eq.s32.totalorder %s25, 1
      %p69 = por %p67, %p68
      %p71 = scmp.ne.s32.totalorder %s56, %s70
      %p72 = scmp.eq.s32.totalorder %s25, 0
      %p73 = por %p71, %p72
      %s75 = sadd.s32 %s74, 1
      %p78 = scmp.eq.s32.totalorder %s19, 1
      %p79 = scmp.ne.s32.totalorder %s74, %s76
      %p80 = scmp.eq.s32.totalorder %s19, 0
      %p81 = por %p79, %p80
      %p82 = scmp.ne.s32.totalorder %s74, %s76
      %p83 = scmp.eq.s32.totalorder %s24, 1
      %p84 = por %p82, %p83
      %p85 = scmp.ne.s32.totalorder %s76, %s77
      %p86 = scmp.eq.s32.totalorder %s24, 0
      %p87 = por %p85, %p86
      %p88 = scmp.ne.s32.totalorder %s76, %s77
      %p89 = scmp.eq.s32.totalorder %s25, 1
      %p90 = por %p88, %p89
      %p92 = scmp.ne.s32.totalorder %s77, %s91
      %p93 = scmp.eq.s32.totalorder %s25, 0
      %p94 = por %p92, %p93
      %s96 = sadd.s32 %s95, 1
      %p99 = scmp.eq.s32.totalorder %s19, 1
      %p100 = scmp.ne.s32.totalorder %s95, %s97
      %p101 = scmp.eq.s32.totalorder %s19, 0
      %p102 = por %p100, %p101
      %p103 = scmp.ne.s32.totalorder %s95, %s97
      %p104 = scmp.eq.s32.totalorder %s24, 1
      %p105 = por %p103, %p104
      %p106 = scmp.ne.s32.totalorder %s97, %s98
      %p107 = scmp.eq.s32.totalorder %s24, 0
      %p108 = por %p106, %p107
      %p109 = scmp.ne.s32.totalorder %s97, %s98
      %p110 = scmp.eq.s32.totalorder %s25, 1
      %p111 = por %p109, %p110
      %p113 = scmp.ne.s32.totalorder %s98, %s112
      %p114 = scmp.eq.s32.totalorder %s25, 0
      %p115 = por %p113, %p114
      %s117 = sadd.s32 %s116, 1
      %p120 = scmp.eq.s32.totalorder %s19, 1
      %p121 = scmp.ne.s32.totalorder %s116, %s118
      %p122 = scmp.eq.s32.totalorder %s19, 0
      %p123 = por %p121, %p122
      %p124 = scmp.ne.s32.totalorder %s116, %s118
      %p125 = scmp.eq.s32.totalorder %s24, 1
      %p126 = por %p124, %p125
      %p127 = scmp.ne.s32.totalorder %s118, %s119
      %p128 = scmp.eq.s32.totalorder %s24, 0
      %p129 = por %p127, %p128
      %p130 = scmp.ne.s32.totalorder %s118, %s119
      %p131 = scmp.eq.s32.totalorder %s25, 1
      %p132 = por %p130, %p131
      %p134 = scmp.ne.s32.totalorder %s119, %s133
      %p135 = scmp.eq.s32.totalorder %s25, 0
      %p136 = por %p134, %p135
      %s138 = sadd.s32 %s137, 1
      %p141 = scmp.eq.s32.totalorder %s19, 1
      %p142 = scmp.ne.s32.totalorder %s137, %s139
      %p143 = scmp.eq.s32.totalorder %s19, 0
      %p144 = por %p142, %p143
      %p145 = scmp.ne.s32.totalorder %s137, %s139
      %p146 = scmp.eq.s32.totalorder %s24, 1
      %p147 = por %p145, %p146
      %p148 = scmp.ne.s32.totalorder %s139, %s140
      %p149 = scmp.eq.s32.totalorder %s24, 0
      %p150 = por %p148, %p149
      %p151 = scmp.ne.s32.totalorder %s139, %s140
      %p152 = scmp.eq.s32.totalorder %s25, 1
      %p153 = por %p151, %p152
      %p155 = scmp.ne.s32.totalorder %s140, %s154
      %p156 = scmp.eq.s32.totalorder %s25, 0
      %p157 = por %p155, %p156
      %s159 = sadd.s32 %s158, 1
      %p162 = scmp.eq.s32.totalorder %s19, 1
      %p163 = scmp.ne.s32.totalorder %s158, %s160
      %p164 = scmp.eq.s32.totalorder %s19, 0
      %p165 = por %p163, %p164
      %p166 = scmp.ne.s32.totalorder %s158, %s160
      %p167 = scmp.eq.s32.totalorder %s24, 1
      %p168 = por %p166, %p167
      %p169 = scmp.ne.s32.totalorder %s160, %s161
      %p170 = scmp.eq.s32.totalorder %s24, 0
      %p171 = por %p169, %p170
      %p172 = scmp.ne.s32.totalorder %s160, %s161
      %p173 = scmp.eq.s32.totalorder %s25, 1
      %p174 = por %p172, %p173
      %p176 = scmp.ne.s32.totalorder %s161, %s175
      %p177 = scmp.eq.s32.totalorder %s25, 0
      %p178 = por %p176, %p177
      %s179 = ssub.s32 %s19, %s26
      %p180 = scmp.eq.s32.totalorder %s179, 0
      %s182 = sadd.s32 %s181, 1
      %s183 = scalar_select %p180, %s181, %s182
      %p186 = pneg %p180
      %p187 = scmp.eq.s32.totalorder %s19, 1
      %p188 = por %p186, %p187
      %p189 = scmp.ne.s32.totalorder %s181, %s184
      %p190 = scmp.eq.s32.totalorder %s19, 0
      %p191 = por %p189, %p190
      %p192 = scmp.ne.s32.totalorder %s181, %s184
      %p193 = scmp.eq.s32.totalorder %s24, 1
      %p194 = por %p192, %p193
      %p195 = scmp.ne.s32.totalorder %s184, %s185
      %p196 = scmp.eq.s32.totalorder %s24, 0
      %p197 = por %p195, %p196
      %p198 = scmp.ne.s32.totalorder %s184, %s185
      %p199 = scmp.eq.s32.totalorder %s25, 1
      %p200 = por %p198, %p199
      %p202 = scmp.ne.s32.totalorder %s185, %s201
      %p203 = scmp.eq.s32.totalorder %s25, 0
      %p204 = por %p202, %p203
      %p205 = scmp.le.s32.totalorder 1, %s19
      %p206 = scmp.lt.s32.totalorder %s19, 3
      %p207 = pnand %p205, %p206
      %p208 = pneg %p207
      // Predicated region
      $region9: #{tpu_custom_call.1} parent=5 // pred_check
        _
      $region10: #{tpu_custom_call.1} parent=5 // pred_check_branch
        %210 = sbr.rel (%p207) target = $region12
      $region11: #{tpu_custom_call.1} parent=5 // pred_region
        %s211 = ssub.s32 %s19, 1
        // Predicated region
        $region13: #{tpu_custom_call.1} parent=11 // pred_check
          %p212 = pneg %p66
        $region14: #{tpu_custom_call.1} parent=11 // pred_check_branch
          %214 = sbr.rel (%p212) target = $region16
        $region15: #{tpu_custom_call.1} parent=11 // pred_region
          %s216 = ssub.s32 256, 256
          %217 = vsyncadd [#allocation3], %s216
          %s218 = sshll.u32 [#allocation2], 4
          %s219 = int_to_ptr.vmem [resolvable:$true] %s218
          %224 = dma.hbm_to_vmem [thread:$0]  %s1, 256, %s219, [#allocation3], 128, 128, 8
        $region16: #{tpu_custom_call.1} parent=11 // pred_fallthru
          _
        // Predicated region
        $region17: #{tpu_custom_call.1} parent=11 // pred_check
          %p225 = pneg %p87
        $region18: #{tpu_custom_call.1} parent=11 // pred_check_branch
          %227 = sbr.rel (%p225) target = $region20
        $region19: #{tpu_custom_call.1} parent=11 // pred_region
          _
        $region20: #{tpu_custom_call.1} parent=11 // pred_fallthru
          _
        // Predicated region
        $region21: #{tpu_custom_call.1} parent=11 // pred_check
          %p228 = pneg %p108
        $region22: #{tpu_custom_call.1} parent=11 // pred_check_branch
          %230 = sbr.rel (%p228) target = $region24
        $region23: #{tpu_custom_call.1} parent=11 // pred_region
          %s232 = ssub.s32 2048, 2048
          %233 = vsyncadd [#allocation6], %s232
          %s234 = sshll.u32 [#allocation5], 4
          %s235 = int_to_ptr.vmem [resolvable:$true] %s234
          %240 = dma.hbm_to_vmem [thread:$0]  %s3, 2048, %s235, [#allocation6], 128, 128, 8
        $region24: #{tpu_custom_call.1} parent=11 // pred_fallthru
          _
        // Predicated region
        $region25: #{tpu_custom_call.1} parent=11 // pred_check
          %p241 = pneg %p129
        $region26: #{tpu_custom_call.1} parent=11 // pred_check_branch
          %243 = sbr.rel (%p241) target = $region28
        $region27: #{tpu_custom_call.1} parent=11 // pred_region
          %s245 = ssub.s32 4096, 4096
          %246 = vsyncadd [#allocation6], %s245
          %s247 = sshll.u32 [#allocation7], 4
          %s248 = int_to_ptr.vmem [resolvable:$true] %s247
          %253 = dma.hbm_to_vmem [thread:$0]  %s4, 4096, %s248, [#allocation6], 128, 128, 8
        $region28: #{tpu_custom_call.1} parent=11 // pred_fallthru
          _
        // Predicated region
        $region29: #{tpu_custom_call.1} parent=11 // pred_check
          %p254 = pneg %p150
        $region30: #{tpu_custom_call.1} parent=11 // pred_check_branch
          %256 = sbr.rel (%p254) target = $region32
        $region31: #{tpu_custom_call.1} parent=11 // pred_region
          _
        $region32: #{tpu_custom_call.1} parent=11 // pred_fallthru
          _
        // Predicated region
        $region33: #{tpu_custom_call.1} parent=11 // pred_check
          %p257 = pneg %p171
        $region34: #{tpu_custom_call.1} parent=11 // pred_check_branch
          %259 = sbr.rel (%p257) target = $region36
        $region35: #{tpu_custom_call.1} parent=11 // pred_region
          %s261 = ssub.s32 128, 128
          %262 = vsyncadd [#allocation9], %s261
          %s264 = sshll.u32 [#allocation8], 4
          %s265 = int_to_ptr.vmem [resolvable:$true] %s264
          %267 = dma.hbm_to_vmem [thread:$0]  %s6, 128, %s265, [#allocation9]
        $region36: #{tpu_custom_call.1} parent=11 // pred_fallthru
          _
      $region12: #{tpu_custom_call.1} parent=5 // pred_fallthru
        _
      %p268 = scmp.lt.s32.totalorder %s19, 2
      // Predicated region
      $region37: #{tpu_custom_call.1} parent=5 // pred_check
        %p269 = pneg %p268
      $region38: #{tpu_custom_call.1} parent=5 // pred_check_branch
        %271 = sbr.rel (%p269) target = $region40
      $region39: #{tpu_custom_call.1} parent=5 // pred_region
        // Predicated region
        $region41: #{tpu_custom_call.1} parent=39 // pred_check
          %p272 = pneg %p39
        $region42: #{tpu_custom_call.1} parent=39 // pred_check_branch
          %274 = sbr.rel (%p272) target = $region44
        $region43: #{tpu_custom_call.1} parent=39 // pred_region
          %s275 = smul.u32 13, %s19
          %p276 = scmp.lt.s32.totalorder %s275, 25
          %s277 = scalar_select %p276, %s275, 25
          %s278 = smul.addr %s277, 8
          %s279 = scalar_lea.vmem %s0, %s278
          %s280 = smul.u32 13, %s19
        $region44: #{tpu_custom_call.1} parent=39 // pred_fallthru
          _
      $region40: #{tpu_custom_call.1} parent=5 // pred_fallthru
        _
      %p281 = scmp.le.s32.totalorder 1, %s19
      %p282 = scmp.lt.s32.totalorder %s19, 3
      %p283 = pnand %p281, %p282
      %p284 = pneg %p283
      // Predicated region
      $region45: #{tpu_custom_call.1} parent=5 // pred_check
        _
      $region46: #{tpu_custom_call.1} parent=5 // pred_check_branch
        %286 = sbr.rel (%p283) target = $region48
      $region47: #{tpu_custom_call.1} parent=5 // pred_region
        %s287 = ssub.s32 %s19, 1
        // Predicated region
        $region49: #{tpu_custom_call.1} parent=47 // pred_check
          %p288 = pneg %p66
        $region50: #{tpu_custom_call.1} parent=47 // pred_check_branch
          %290 = sbr.rel (%p288) target = $region52
        $region51: #{tpu_custom_call.1} parent=47 // pred_region
          %291 = dma.done [#allocation3], 256
        $region52: #{tpu_custom_call.1} parent=47 // pred_fallthru
          _
        // Predicated region
        $region53: #{tpu_custom_call.1} parent=47 // pred_check
          %p292 = pneg %p108
        $region54: #{tpu_custom_call.1} parent=47 // pred_check_branch
          %294 = sbr.rel (%p292) target = $region56
        $region55: #{tpu_custom_call.1} parent=47 // pred_region
          %295 = dma.done [#allocation6], 2048
        $region56: #{tpu_custom_call.1} parent=47 // pred_fallthru
          _
        // Predicated region
        $region57: #{tpu_custom_call.1} parent=47 // pred_check
          %p296 = pneg %p129
        $region58: #{tpu_custom_call.1} parent=47 // pred_check_branch
          %298 = sbr.rel (%p296) target = $region60
        $region59: #{tpu_custom_call.1} parent=47 // pred_region
          %299 = dma.done [#allocation6], 4096
        $region60: #{tpu_custom_call.1} parent=47 // pred_fallthru
          _
        // Predicated region
        $region61: #{tpu_custom_call.1} parent=47 // pred_check
          %p300 = pneg %p171
        $region62: #{tpu_custom_call.1} parent=47 // pred_check_branch
          %302 = sbr.rel (%p300) target = $region64
        $region63: #{tpu_custom_call.1} parent=47 // pred_region
          %303 = dma.done [#allocation9], 128
        $region64: #{tpu_custom_call.1} parent=47 // pred_fallthru
          _
        %s304 = smul.u32 13, %s24
        %p305 = scmp.lt.s32.totalorder %s304, 25
        %s306 = scalar_select %p305, %s304, 25
        %s307 = smul.addr %s306, 8
        %s308 = scalar_lea.vmem %s0, %s307
        %p309 = pneg %p45
        %p310 = pneg %p42
        %p311 = pneg %p66
        %p312 = pneg %p63
        %p313 = pneg %p87
        %p314 = pneg %p84
        %p315 = pneg %p108
        %p316 = pneg %p105
        %p317 = pneg %p129
        %p318 = pneg %p126
        %p319 = pneg %p150
        %p320 = pneg %p147
        %p321 = pneg %p171
        %p322 = pneg %p168
        %p323 = pneg %p197
        %p324 = pneg %p194
        %s325 = sand.u32 %s184, 1
        %s326 = scalar_lea.sflag [#allocation4], %s325
        %s327 = sand.u32 %s184, 1
        %s328 = smul.addr %s327, 104
        %s329 = scalar_lea.vmem [#allocation10], %s328
        %s330 = smul.u32 13, %s24
        %p331 = scmp.lt.s32.totalorder %s330, 25
        %s332 = scalar_select %p331, %s330, 25
        %s333 = smul.addr %s332, 8
        %s334 = scalar_lea.vmem %s0, %s333
        %s335 = smul.u32 13, %s24
        %s336 = smul.u32 13, %s24
        %v337 = vld [vmem:[%s334] sm:$0xff]
        %v338 = vld [vmem:[%s334 + $0x8] sm:$0xff]
        %v339 = vld [vmem:[%s334 + $0x10] sm:$0xff]
        %v340 = vld [vmem:[%s334 + $0x18] sm:$0xff]
        %v341 = vld [vmem:[%s334 + $0x20] sm:$0xff]
        %v342 = vld [vmem:[%s334 + $0x28] sm:$0xff]
        %v343 = vld [vmem:[%s334 + $0x30] sm:$0xff]
        %v344 = vld [vmem:[%s334 + $0x38] sm:$0xff]
        %v345 = vld [vmem:[%s334 + $0x40] sm:$0xff]
        %v346 = vld [vmem:[%s334 + $0x48] sm:$0xff]
        %v347 = vld [vmem:[%s334 + $0x50] sm:$0xff]
        %v348 = vld [vmem:[%s334 + $0x58] sm:$0xff]
        %v349 = vld [vmem:[%s334 + $0x60] sm:$0xff]
        %v350 = vld [vmem:[#allocation8] sm:$0x1]
        %v351 = vld [vmem:[#allocation8 + $0x1] sm:$0x1]
        %v352 = vld [vmem:[#allocation8 + $0x2] sm:$0x1]
        %v353 = vld [vmem:[#allocation8 + $0x3] sm:$0x1]
        %v354 = vld [vmem:[#allocation8 + $0x4] sm:$0x1]
        %v355 = vld [vmem:[#allocation8 + $0x5] sm:$0x1]
        %v356 = vld [vmem:[#allocation8 + $0x6] sm:$0x1]
        %v357 = vld [vmem:[#allocation2] sm:$0xff]
        %v358 = vld [vmem:[#allocation2 + $0x8] sm:$0x1]
        %v359 = vlaneseq
        %v360 = vshrl.u32 %v359, 7
        %v361 = vsub.s32 0, %v360
        %v362 = vrot.slane %v350, %v361
        %vm363 = vcmask 72704
        %v365 = vsel %vm363, %v337, 0
        %v368 = vsel %vm363, %v338, 0
        %v371 = vsel %vm363, %v339, 0
        %v374 = vsel %vm363, %v340, 0
        %v377 = vsel %vm363, %v341, 0
        %v380 = vsel %vm363, %v342, 0
        %v383 = vsel %vm363, %v343, 0
        %v386 = vsel %vm363, %v344, 0
        %v389 = vsel %vm363, %v345, 0
        %v392 = vsel %vm363, %v346, 0
        %v395 = vsel %vm363, %v347, 0
        %v398 = vsel %vm363, %v348, 0
        %v401 = vsel %vm363, %v349, 0
        %vm403 = vcmask 1040384
        %v405 = vsel %vm403, %v358, 0
        %407 = vmatprep.subr.mxu0 0.0
        %408 = vmatpush1.msra.mxu0 %v357
        %409 = vmatprep.subr.mxu0 0.0
        %410 = vmatpush1.msra.mxu0 %v405
        %411 = vmatprep.subr.mxu0 0.0
        %412 = vmatpush1.msra.mxu0 0.0
        %413 = vmatprep.subr.mxu0 0.0
        %414 = vmatpush1.msra.mxu0 0.0
        %415 = vmatprep.subr.mxu0 0.0
        %416 = vmatpush1.msra.mxu0 0.0
        %417 = vmatprep.subr.mxu0 0.0
        %418 = vmatpush1.msra.mxu0 0.0
        %419 = vmatprep.subr.mxu0 0.0
        %420 = vmatpush1.msra.mxu0 0.0
        %421 = vmatprep.subr.mxu0 0.0
        %422 = vmatpush1.msra.mxu0 0.0
        %423 = vmatprep.subr.mxu0 0.0
        %424 = vmatpush1.msra.mxu0 0.0
        %425 = vmatprep.subr.mxu0 0.0
        %426 = vmatpush1.msra.mxu0 0.0
        %427 = vmatprep.subr.mxu0 0.0
        %428 = vmatpush1.msra.mxu0 0.0
        %429 = vmatprep.subr.mxu0 0.0
        %430 = vmatpush1.msra.mxu0 0.0
        %431 = vmatprep.subr.mxu0 0.0
        %432 = vmatpush1.msra.mxu0 0.0
        %433 = vmatprep.subr.mxu0 0.0
        %434 = vmatpush1.msra.mxu0 0.0
        %435 = vmatprep.subr.mxu0 0.0
        %436 = vmatpush1.msra.mxu0 0.0
        %437 = vmatprep.subr.mxu0 0.0
        %438 = vmatpush1.msra.mxu0 0.0
        %439 = vmatprep.subr.mxu0 0.0
        %440 = vmatpush1.msra.mxu0 0.0
        %441 = vmatprep.subr.mxu0 0.0
        %442 = vmatpush1.msra.mxu0 0.0
        %443 = vmatprep.subr.mxu0 0.0
        %444 = vmatpush1.msra.mxu0 0.0
        %445 = vmatprep.subr.mxu0 0.0
        %446 = vmatpush1.msra.mxu0 0.0
        %447 = vmatprep.subr.mxu0 0.0
        %448 = vmatpush1.msra.mxu0 0.0
        %449 = vmatprep.subr.mxu0 0.0
        %450 = vmatpush1.msra.mxu0 0.0
        %451 = vmatprep.subr.mxu0 0.0
        %452 = vmatpush1.msra.mxu0 0.0
        %453 = vmatprep.subr.mxu0 0.0
        %454 = vmatpush1.msra.mxu0 0.0
        %455 = vmatprep.subr.mxu0 0.0
        %456 = vmatpush1.msra.mxu0 0.0
        %457 = vmatprep.subr.mxu0 0.0
        %458 = vmatpush1.msra.mxu0 0.0
        %459 = vmatprep.subr.mxu0 0.0
        %460 = vmatpush1.msra.mxu0 0.0
        %461 = vmatprep.subr.mxu0 0.0
        %462 = vmatpush1.msra.mxu0 0.0
        %463 = vmatprep.subr.mxu0 0.0
        %464 = vmatpush1.msra.mxu0 0.0
        %465 = vmatprep.subr.mxu0 0.0
        %466 = vmatpush1.msra.mxu0 0.0
        %467 = vmatprep.subr.mxu0 0.0
        %468 = vmatpush1.msra.mxu0 0.0
        %469 = vmatprep.subr.mxu0 0.0
        %470 = vmatpush1.msra.mxu0 0.0
        %471 = vmatprep.mubr.f32.mxu0 0.0
        %472 = vmatmul.mubr.f32.gmra.mrb[0].mxu0 %v365
        %v473 = vpop.f32.mrb[0].mxu0
        %v474 = vadd.f32 %v362, %v473
        %v475 = vpop.f32.mrb[0].mxu0
        %476 = vmatprep.mubr.f32.mxu0 0.0
        %477 = vmatmul.mubr.f32.gmra.mrb[0].mxu0 %v368
        %v478 = vpop.f32.mrb[0].mxu0
        %v479 = vadd.f32 %v362, %v478
        %v480 = vpop.f32.mrb[0].mxu0
        %481 = vmatprep.mubr.f32.mxu0 0.0
        %482 = vmatmul.mubr.f32.gmra.mrb[0].mxu0 %v371
        %v483 = vpop.f32.mrb[0].mxu0
        %v484 = vadd.f32 %v362, %v483
        %v485 = vpop.f32.mrb[0].mxu0
        %486 = vmatprep.mubr.f32.mxu0 0.0
        %487 = vmatmul.mubr.f32.gmra.mrb[0].mxu0 %v374
        %v488 = vpop.f32.mrb[0].mxu0
        %v489 = vadd.f32 %v362, %v488
        %v490 = vpop.f32.mrb[0].mxu0
        %491 = vmatprep.mubr.f32.mxu0 0.0
        %492 = vmatmul.mubr.f32.gmra.mrb[0].mxu0 %v377
        %v493 = vpop.f32.mrb[0].mxu0
        %v494 = vadd.f32 %v362, %v493
        %v495 = vpop.f32.mrb[0].mxu0
        %496 = vmatprep.mubr.f32.mxu0 0.0
        %497 = vmatmul.mubr.f32.gmra.mrb[0].mxu0 %v380
        %v498 = vpop.f32.mrb[0].mxu0
        %v499 = vadd.f32 %v362, %v498
        %v500 = vpop.f32.mrb[0].mxu0
        %501 = vmatprep.mubr.f32.mxu0 0.0
        %502 = vmatmul.mubr.f32.gmra.mrb[0].mxu0 %v383
        %v503 = vpop.f32.mrb[0].mxu0
        %v504 = vadd.f32 %v362, %v503
        %v505 = vpop.f32.mrb[0].mxu0
        %506 = vmatprep.mubr.f32.mxu0 0.0
        %507 = vmatmul.mubr.f32.gmra.mrb[0].mxu0 %v386
        %v508 = vpop.f32.mrb[0].mxu0
        %v509 = vadd.f32 %v362, %v508
        %v510 = vpop.f32.mrb[0].mxu0
        %511 = vmatprep.mubr.f32.mxu0 0.0
        %512 = vmatmul.mubr.f32.gmra.mrb[0].mxu0 %v389
        %v513 = vpop.f32.mrb[0].mxu0
        %v514 = vadd.f32 %v362, %v513
        %v515 = vpop.f32.mrb[0].mxu0
        %516 = vmatprep.mubr.f32.mxu0 0.0
        %517 = vmatmul.mubr.f32.gmra.mrb[0].mxu0 %v392
        %v518 = vpop.f32.mrb[0].mxu0
        %v519 = vadd.f32 %v362, %v518
        %v520 = vpop.f32.mrb[0].mxu0
        %521 = vmatprep.mubr.f32.mxu0 0.0
        %522 = vmatmul.mubr.f32.gmra.mrb[0].mxu0 %v395
        %v523 = vpop.f32.mrb[0].mxu0
        %v524 = vadd.f32 %v362, %v523
        %v525 = vpop.f32.mrb[0].mxu0
        %526 = vmatprep.mubr.f32.mxu0 0.0
        %527 = vmatmul.mubr.f32.gmra.mrb[0].mxu0 %v398
        %v528 = vpop.f32.mrb[0].mxu0
        %v529 = vadd.f32 %v362, %v528
        %v530 = vpop.f32.mrb[0].mxu0
        %531 = vmatprep.mubr.f32.mxu0 0.0
        %532 = vmatmul.mubr.f32.gmra.mrb[0].mxu0 %v401
        %v533 = vpop.f32.mrb[0].mxu0
        %v534 = vadd.f32 %v362, %v533
        %v535 = vpop.f32.mrb[0].mxu0
        %536 = vdwg.mxu0
        %vm537 = vcmp.ge.f32.partialorder %v474, 0.0
        %vm538 = vcmp.ge.f32.partialorder %v479, 0.0
        %vm539 = vcmp.ge.f32.partialorder %v484, 0.0
        %vm540 = vcmp.ge.f32.partialorder %v489, 0.0
        %vm541 = vcmp.ge.f32.partialorder %v494, 0.0
        %vm542 = vcmp.ge.f32.partialorder %v499, 0.0
        %vm543 = vcmp.ge.f32.partialorder %v504, 0.0
        %vm544 = vcmp.ge.f32.partialorder %v509, 0.0
        %vm545 = vcmp.ge.f32.partialorder %v514, 0.0
        %vm546 = vcmp.ge.f32.partialorder %v519, 0.0
        %vm547 = vcmp.ge.f32.partialorder %v524, 0.0
        %vm548 = vcmp.ge.f32.partialorder %v529, 0.0
        %vm549 = vcmp.ge.f32.partialorder %v534, 0.0
        %v550 = vmul.f32 %v474, 0.1
        %v551 = vmul.f32 %v479, 0.1
        %v552 = vmul.f32 %v484, 0.1
        %v553 = vmul.f32 %v489, 0.1
        %v554 = vmul.f32 %v494, 0.1
        %v555 = vmul.f32 %v499, 0.1
        %v556 = vmul.f32 %v504, 0.1
        %v557 = vmul.f32 %v509, 0.1
        %v558 = vmul.f32 %v514, 0.1
        %v559 = vmul.f32 %v519, 0.1
        %v560 = vmul.f32 %v524, 0.1
        %v561 = vmul.f32 %v529, 0.1
        %v562 = vmul.f32 %v534, 0.1
        %v563 = vsel %vm537, %v474, %v550
        %v564 = vsel %vm538, %v479, %v551
        %v565 = vsel %vm539, %v484, %v552
        %v566 = vsel %vm540, %v489, %v553
        %v567 = vsel %vm541, %v494, %v554
        %v568 = vsel %vm542, %v499, %v555
        %v569 = vsel %vm543, %v504, %v556
        %v570 = vsel %vm544, %v509, %v557
        %v571 = vsel %vm545, %v514, %v558
        %v572 = vsel %vm546, %v519, %v559
        %v573 = vsel %vm547, %v524, %v560
        %v574 = vsel %vm548, %v529, %v561
        %v575 = vsel %vm549, %v534, %v562
        %v576 = vld [vmem:[%s2] sm:$0xff]
        %v577 = vld [vmem:[%s2 + $0x8] sm:$0xff]
        %v578 = vld [vmem:[%s2 + $0x10] sm:$0xff]
        %v579 = vld [vmem:[%s2 + $0x18] sm:$0xff]
        %v580 = vld [vmem:[%s2 + $0x20] sm:$0xff]
        %v581 = vld [vmem:[%s2 + $0x28] sm:$0xff]
        %v582 = vld [vmem:[%s2 + $0x30] sm:$0xff]
        %v583 = vld [vmem:[%s2 + $0x38] sm:$0xff]
        %v584 = vld [vmem:[%s2 + $0x40] sm:$0xff]
        %v585 = vld [vmem:[%s2 + $0x48] sm:$0xff]
        %v586 = vld [vmem:[%s2 + $0x50] sm:$0xff]
        %v587 = vld [vmem:[%s2 + $0x58] sm:$0xff]
        %v588 = vld [vmem:[%s2 + $0x60] sm:$0xff]
        %v589 = vld [vmem:[%s2 + $0x68] sm:$0xff]
        %v590 = vld [vmem:[%s2 + $0x70] sm:$0xff]
        %v591 = vld [vmem:[%s2 + $0x78] sm:$0xff]
        %v592 = vlaneseq
        %v593 = vshrl.u32 %v592, 7
        %v594 = vsub.s32 0, %v593
        %v595 = vrot.slane %v351, %v594
        %596 = vmatprep.subr.mxu0 0.0
        %597 = vmatpush1.msra.mxu0 %v576
        %598 = vmatprep.subr.mxu0 0.0
        %599 = vmatpush1.msra.mxu0 %v577
        %600 = vmatprep.subr.mxu0 0.0
        %601 = vmatpush1.msra.mxu0 %v578
        %602 = vmatprep.subr.mxu0 0.0
        %603 = vmatpush1.msra.mxu0 %v579
        %604 = vmatprep.subr.mxu0 0.0
        %605 = vmatpush1.msra.mxu0 %v580
        %606 = vmatprep.subr.mxu0 0.0
        %607 = vmatpush1.msra.mxu0 %v581
        %608 = vmatprep.subr.mxu0 0.0
        %609 = vmatpush1.msra.mxu0 %v582
        %610 = vmatprep.subr.mxu0 0.0
        %611 = vmatpush1.msra.mxu0 %v583
        %612 = vmatprep.subr.mxu0 0.0
        %613 = vmatpush1.msra.mxu0 %v584
        %614 = vmatprep.subr.mxu0 0.0
        %615 = vmatpush1.msra.mxu0 %v585
        %616 = vmatprep.subr.mxu0 0.0
        %617 = vmatpush1.msra.mxu0 %v586
        %618 = vmatprep.subr.mxu0 0.0
        %619 = vmatpush1.msra.mxu0 %v587
        %620 = vmatprep.subr.mxu0 0.0
        %621 = vmatpush1.msra.mxu0 %v588
        %622 = vmatprep.subr.mxu0 0.0
        %623 = vmatpush1.msra.mxu0 %v589
        %624 = vmatprep.subr.mxu0 0.0
        %625 = vmatpush1.msra.mxu0 %v590
        %626 = vmatprep.subr.mxu0 0.0
        %627 = vmatpush1.msra.mxu0 %v591
        %628 = vmatprep.subr.mxu0 0.0
        %629 = vmatpush1.msra.mxu0 0.0
        %630 = vmatprep.subr.mxu0 0.0
        %631 = vmatpush1.msra.mxu0 0.0
        %632 = vmatprep.subr.mxu0 0.0
        %633 = vmatpush1.msra.mxu0 0.0
        %634 = vmatprep.subr.mxu0 0.0
        %635 = vmatpush1.msra.mxu0 0.0
        %636 = vmatprep.subr.mxu0 0.0
        %637 = vmatpush1.msra.mxu0 0.0
        %638 = vmatprep.subr.mxu0 0.0
        %639 = vmatpush1.msra.mxu0 0.0
        %640 = vmatprep.subr.mxu0 0.0
        %641 = vmatpush1.msra.mxu0 0.0
        %642 = vmatprep.subr.mxu0 0.0
        %643 = vmatpush1.msra.mxu0 0.0
        %644 = vmatprep.subr.mxu0 0.0
        %645 = vmatpush1.msra.mxu0 0.0
        %646 = vmatprep.subr.mxu0 0.0
        %647 = vmatpush1.msra.mxu0 0.0
        %648 = vmatprep.subr.mxu0 0.0
        %649 = vmatpush1.msra.mxu0 0.0
        %650 = vmatprep.subr.mxu0 0.0
        %651 = vmatpush1.msra.mxu0 0.0
        %652 = vmatprep.subr.mxu0 0.0
        %653 = vmatpush1.msra.mxu0 0.0
        %654 = vmatprep.subr.mxu0 0.0
        %655 = vmatpush1.msra.mxu0 0.0
        %656 = vmatprep.subr.mxu0 0.0
        %657 = vmatpush1.msra.mxu0 0.0
        %658 = vmatprep.subr.mxu0 0.0
        %659 = vmatpush1.msra.mxu0 0.0
        %660 = vmatprep.mubr.f32.mxu0 0.0
        %661 = vmatmul.mubr.f32.gmra.mrb[0].mxu0 %v563
        %v662 = vpop.f32.mrb[0].mxu0
        %v663 = vadd.f32 %v595, %v662
        %v664 = vpop.f32.mrb[0].mxu0
        %665 = vmatprep.mubr.f32.mxu0 0.0
        %666 = vmatmul.mubr.f32.gmra.mrb[0].mxu0 %v564
        %v667 = vpop.f32.mrb[0].mxu0
        %v668 = vadd.f32 %v595, %v667
        %v669 = vpop.f32.mrb[0].mxu0
        %670 = vmatprep.mubr.f32.mxu0 0.0
        %671 = vmatmul.mubr.f32.gmra.mrb[0].mxu0 %v565
        %v672 = vpop.f32.mrb[0].mxu0
        %v673 = vadd.f32 %v595, %v672
        %v674 = vpop.f32.mrb[0].mxu0
        %675 = vmatprep.mubr.f32.mxu0 0.0
        %676 = vmatmul.mubr.f32.gmra.mrb[0].mxu0 %v566
        %v677 = vpop.f32.mrb[0].mxu0
        %v678 = vadd.f32 %v595, %v677
        %v679 = vpop.f32.mrb[0].mxu0
        %680 = vmatprep.mubr.f32.mxu0 0.0
        %681 = vmatmul.mubr.f32.gmra.mrb[0].mxu0 %v567
        %v682 = vpop.f32.mrb[0].mxu0
        %v683 = vadd.f32 %v595, %v682
        %v684 = vpop.f32.mrb[0].mxu0
        %685 = vmatprep.mubr.f32.mxu0 0.0
        %686 = vmatmul.mubr.f32.gmra.mrb[0].mxu0 %v568
        %v687 = vpop.f32.mrb[0].mxu0
        %v688 = vadd.f32 %v595, %v687
        %v689 = vpop.f32.mrb[0].mxu0
        %690 = vmatprep.mubr.f32.mxu0 0.0
        %691 = vmatmul.mubr.f32.gmra.mrb[0].mxu0 %v569
        %v692 = vpop.f32.mrb[0].mxu0
        %v693 = vadd.f32 %v595, %v692
        %v694 = vpop.f32.mrb[0].mxu0
        %695 = vmatprep.mubr.f32.mxu0 0.0
        %696 = vmatmul.mubr.f32.gmra.mrb[0].mxu0 %v570
        %v697 = vpop.f32.mrb[0].mxu0
        %v698 = vadd.f32 %v595, %v697
        %v699 = vpop.f32.mrb[0].mxu0
        %700 = vmatprep.mubr.f32.mxu0 0.0
        %701 = vmatmul.mubr.f32.gmra.mrb[0].mxu0 %v571
        %v702 = vpop.f32.mrb[0].mxu0
        %v703 = vadd.f32 %v595, %v702
        %v704 = vpop.f32.mrb[0].mxu0
        %705 = vmatprep.mubr.f32.mxu0 0.0
        %706 = vmatmul.mubr.f32.gmra.mrb[0].mxu0 %v572
        %v707 = vpop.f32.mrb[0].mxu0
        %v708 = vadd.f32 %v595, %v707
        %v709 = vpop.f32.mrb[0].mxu0
        %710 = vmatprep.mubr.f32.mxu0 0.0
        %711 = vmatmul.mubr.f32.gmra.mrb[0].mxu0 %v573
        %v712 = vpop.f32.mrb[0].mxu0
        %v713 = vadd.f32 %v595, %v712
        %v714 = vpop.f32.mrb[0].mxu0
        %715 = vmatprep.mubr.f32.mxu0 0.0
        %716 = vmatmul.mubr.f32.gmra.mrb[0].mxu0 %v574
        %v717 = vpop.f32.mrb[0].mxu0
        %v718 = vadd.f32 %v595, %v717
        %v719 = vpop.f32.mrb[0].mxu0
        %720 = vmatprep.mubr.f32.mxu0 0.0
        %721 = vmatmul.mubr.f32.gmra.mrb[0].mxu0 %v575
        %v722 = vpop.f32.mrb[0].mxu0
        %v723 = vadd.f32 %v595, %v722
        %v724 = vpop.f32.mrb[0].mxu0
        %725 = vdwg.mxu0
        %v726 = vadd.f32 %v474, %v663
        %v727 = vadd.f32 %v479, %v668
        %v728 = vadd.f32 %v484, %v673
        %v729 = vadd.f32 %v489, %v678
        %v730 = vadd.f32 %v494, %v683
        %v731 = vadd.f32 %v499, %v688
        %v732 = vadd.f32 %v504, %v693
        %v733 = vadd.f32 %v509, %v698
        %v734 = vadd.f32 %v514, %v703
        %v735 = vadd.f32 %v519, %v708
        %v736 = vadd.f32 %v524, %v713
        %v737 = vadd.f32 %v529, %v718
        %v738 = vadd.f32 %v534, %v723
        %vm739 = vcmp.ge.f32.partialorder %v726, 0.0
        %vm740 = vcmp.ge.f32.partialorder %v727, 0.0
        %vm741 = vcmp.ge.f32.partialorder %v728, 0.0
        %vm742 = vcmp.ge.f32.partialorder %v729, 0.0
        %vm743 = vcmp.ge.f32.partialorder %v730, 0.0
        %vm744 = vcmp.ge.f32.partialorder %v731, 0.0
        %vm745 = vcmp.ge.f32.partialorder %v732, 0.0
        %vm746 = vcmp.ge.f32.partialorder %v733, 0.0
        %vm747 = vcmp.ge.f32.partialorder %v734, 0.0
        %vm748 = vcmp.ge.f32.partialorder %v735, 0.0
        %vm749 = vcmp.ge.f32.partialorder %v736, 0.0
        %vm750 = vcmp.ge.f32.partialorder %v737, 0.0
        %vm751 = vcmp.ge.f32.partialorder %v738, 0.0
        %v752 = vmul.f32 %v726, 0.1
        %v753 = vmul.f32 %v727, 0.1
        %v754 = vmul.f32 %v728, 0.1
        %v755 = vmul.f32 %v729, 0.1
        %v756 = vmul.f32 %v730, 0.1
        %v757 = vmul.f32 %v731, 0.1
        %v758 = vmul.f32 %v732, 0.1
        %v759 = vmul.f32 %v733, 0.1
        %v760 = vmul.f32 %v734, 0.1
        %v761 = vmul.f32 %v735, 0.1
        %v762 = vmul.f32 %v736, 0.1
        %v763 = vmul.f32 %v737, 0.1
        %v764 = vmul.f32 %v738, 0.1
        %v765 = vsel %vm739, %v726, %v752
        %v766 = vsel %vm740, %v727, %v753
        %v767 = vsel %vm741, %v728, %v754
        %v768 = vsel %vm742, %v729, %v755
        %v769 = vsel %vm743, %v730, %v756
        %v770 = vsel %vm744, %v731, %v757
        %v771 = vsel %vm745, %v732, %v758
        %v772 = vsel %vm746, %v733, %v759
        %v773 = vsel %vm747, %v734, %v760
        %v774 = vsel %vm748, %v735, %v761
        %v775 = vsel %vm749, %v736, %v762
        %v776 = vsel %vm750, %v737, %v763
        %v777 = vsel %vm751, %v738, %v764
        %v778 = vld [vmem:[#allocation5] sm:$0xff]
        %v779 = vld [vmem:[#allocation5 + $0x8] sm:$0xff]
        %v780 = vld [vmem:[#allocation5 + $0x10] sm:$0xff]
        %v781 = vld [vmem:[#allocation5 + $0x18] sm:$0xff]
        %v782 = vld [vmem:[#allocation5 + $0x20] sm:$0xff]
        %v783 = vld [vmem:[#allocation5 + $0x28] sm:$0xff]
        %v784 = vld [vmem:[#allocation5 + $0x30] sm:$0xff]
        %v785 = vld [vmem:[#allocation5 + $0x38] sm:$0xff]
        %v786 = vld [vmem:[#allocation5 + $0x40] sm:$0xff]
        %v787 = vld [vmem:[#allocation5 + $0x48] sm:$0xff]
        %v788 = vld [vmem:[#allocation5 + $0x50] sm:$0xff]
        %v789 = vld [vmem:[#allocation5 + $0x58] sm:$0xff]
        %v790 = vld [vmem:[#allocation5 + $0x60] sm:$0xff]
        %v791 = vld [vmem:[#allocation5 + $0x68] sm:$0xff]
        %v792 = vld [vmem:[#allocation5 + $0x70] sm:$0xff]
        %v793 = vld [vmem:[#allocation5 + $0x78] sm:$0xff]
        %v794 = vlaneseq
        %v795 = vshrl.u32 %v794, 7
        %v796 = vsub.s32 0, %v795
        %v797 = vrot.slane %v352, %v796
        %798 = vmatprep.subr.mxu0 0.0
        %799 = vmatpush1.msra.mxu0 %v778
        %800 = vmatprep.subr.mxu0 0.0
        %801 = vmatpush1.msra.mxu0 %v779
        %802 = vmatprep.subr.mxu0 0.0
        %803 = vmatpush1.msra.mxu0 %v780
        %804 = vmatprep.subr.mxu0 0.0
        %805 = vmatpush1.msra.mxu0 %v781
        %806 = vmatprep.subr.mxu0 0.0
        %807 = vmatpush1.msra.mxu0 %v782
        %808 = vmatprep.subr.mxu0 0.0
        %809 = vmatpush1.msra.mxu0 %v783
        %810 = vmatprep.subr.mxu0 0.0
        %811 = vmatpush1.msra.mxu0 %v784
        %812 = vmatprep.subr.mxu0 0.0
        %813 = vmatpush1.msra.mxu0 %v785
        %814 = vmatprep.subr.mxu0 0.0
        %815 = vmatpush1.msra.mxu0 %v786
        %816 = vmatprep.subr.mxu0 0.0
        %817 = vmatpush1.msra.mxu0 %v787
        %818 = vmatprep.subr.mxu0 0.0
        %819 = vmatpush1.msra.mxu0 %v788
        %820 = vmatprep.subr.mxu0 0.0
        %821 = vmatpush1.msra.mxu0 %v789
        %822 = vmatprep.subr.mxu0 0.0
        %823 = vmatpush1.msra.mxu0 %v790
        %824 = vmatprep.subr.mxu0 0.0
        %825 = vmatpush1.msra.mxu0 %v791
        %826 = vmatprep.subr.mxu0 0.0
        %827 = vmatpush1.msra.mxu0 %v792
        %828 = vmatprep.subr.mxu0 0.0
        %829 = vmatpush1.msra.mxu0 %v793
        %830 = vmatprep.subr.mxu0 0.0
        %831 = vmatpush1.msra.mxu0 0.0
        %832 = vmatprep.subr.mxu0 0.0
        %833 = vmatpush1.msra.mxu0 0.0
        %834 = vmatprep.subr.mxu0 0.0
        %835 = vmatpush1.msra.mxu0 0.0
        %836 = vmatprep.subr.mxu0 0.0
        %837 = vmatpush1.msra.mxu0 0.0
        %838 = vmatprep.subr.mxu0 0.0
        %839 = vmatpush1.msra.mxu0 0.0
        %840 = vmatprep.subr.mxu0 0.0
        %841 = vmatpush1.msra.mxu0 0.0
        %842 = vmatprep.subr.mxu0 0.0
        %843 = vmatpush1.msra.mxu0 0.0
        %844 = vmatprep.subr.mxu0 0.0
        %845 = vmatpush1.msra.mxu0 0.0
        %846 = vmatprep.subr.mxu0 0.0
        %847 = vmatpush1.msra.mxu0 0.0
        %848 = vmatprep.subr.mxu0 0.0
        %849 = vmatpush1.msra.mxu0 0.0
        %850 = vmatprep.subr.mxu0 0.0
        %851 = vmatpush1.msra.mxu0 0.0
        %852 = vmatprep.subr.mxu0 0.0
        %853 = vmatpush1.msra.mxu0 0.0
        %854 = vmatprep.subr.mxu0 0.0
        %855 = vmatpush1.msra.mxu0 0.0
        %856 = vmatprep.subr.mxu0 0.0
        %857 = vmatpush1.msra.mxu0 0.0
        %858 = vmatprep.subr.mxu0 0.0
        %859 = vmatpush1.msra.mxu0 0.0
        %860 = vmatprep.subr.mxu0 0.0
        %861 = vmatpush1.msra.mxu0 0.0
        %862 = vmatprep.mubr.f32.mxu0 0.0
        %863 = vmatmul.mubr.f32.gmra.mrb[0].mxu0 %v765
        %v864 = vpop.f32.mrb[0].mxu0
        %v865 = vadd.f32 %v797, %v864
        %v866 = vpop.f32.mrb[0].mxu0
        %867 = vmatprep.mubr.f32.mxu0 0.0
        %868 = vmatmul.mubr.f32.gmra.mrb[0].mxu0 %v766
        %v869 = vpop.f32.mrb[0].mxu0
        %v870 = vadd.f32 %v797, %v869
        %v871 = vpop.f32.mrb[0].mxu0
        %872 = vmatprep.mubr.f32.mxu0 0.0
        %873 = vmatmul.mubr.f32.gmra.mrb[0].mxu0 %v767
        %v874 = vpop.f32.mrb[0].mxu0
        %v875 = vadd.f32 %v797, %v874
        %v876 = vpop.f32.mrb[0].mxu0
        %877 = vmatprep.mubr.f32.mxu0 0.0
        %878 = vmatmul.mubr.f32.gmra.mrb[0].mxu0 %v768
        %v879 = vpop.f32.mrb[0].mxu0
        %v880 = vadd.f32 %v797, %v879
        %v881 = vpop.f32.mrb[0].mxu0
        %882 = vmatprep.mubr.f32.mxu0 0.0
        %883 = vmatmul.mubr.f32.gmra.mrb[0].mxu0 %v769
        %v884 = vpop.f32.mrb[0].mxu0
        %v885 = vadd.f32 %v797, %v884
        %v886 = vpop.f32.mrb[0].mxu0
        %887 = vmatprep.mubr.f32.mxu0 0.0
        %888 = vmatmul.mubr.f32.gmra.mrb[0].mxu0 %v770
        %v889 = vpop.f32.mrb[0].mxu0
        %v890 = vadd.f32 %v797, %v889
        %v891 = vpop.f32.mrb[0].mxu0
        %892 = vmatprep.mubr.f32.mxu0 0.0
        %893 = vmatmul.mubr.f32.gmra.mrb[0].mxu0 %v771
        %v894 = vpop.f32.mrb[0].mxu0
        %v895 = vadd.f32 %v797, %v894
        %v896 = vpop.f32.mrb[0].mxu0
        %897 = vmatprep.mubr.f32.mxu0 0.0
        %898 = vmatmul.mubr.f32.gmra.mrb[0].mxu0 %v772
        %v899 = vpop.f32.mrb[0].mxu0
        %v900 = vadd.f32 %v797, %v899
        %v901 = vpop.f32.mrb[0].mxu0
        %902 = vmatprep.mubr.f32.mxu0 0.0
        %903 = vmatmul.mubr.f32.gmra.mrb[0].mxu0 %v773
        %v904 = vpop.f32.mrb[0].mxu0
        %v905 = vadd.f32 %v797, %v904
        %v906 = vpop.f32.mrb[0].mxu0
        %907 = vmatprep.mubr.f32.mxu0 0.0
        %908 = vmatmul.mubr.f32.gmra.mrb[0].mxu0 %v774
        %v909 = vpop.f32.mrb[0].mxu0
        %v910 = vadd.f32 %v797, %v909
        %v911 = vpop.f32.mrb[0].mxu0
        %912 = vmatprep.mubr.f32.mxu0 0.0
        %913 = vmatmul.mubr.f32.gmra.mrb[0].mxu0 %v775
        %v914 = vpop.f32.mrb[0].mxu0
        %v915 = vadd.f32 %v797, %v914
        %v916 = vpop.f32.mrb[0].mxu0
        %917 = vmatprep.mubr.f32.mxu0 0.0
        %918 = vmatmul.mubr.f32.gmra.mrb[0].mxu0 %v776
        %v919 = vpop.f32.mrb[0].mxu0
        %v920 = vadd.f32 %v797, %v919
        %v921 = vpop.f32.mrb[0].mxu0
        %922 = vmatprep.mubr.f32.mxu0 0.0
        %923 = vmatmul.mubr.f32.gmra.mrb[0].mxu0 %v777
        %v924 = vpop.f32.mrb[0].mxu0
        %v925 = vadd.f32 %v797, %v924
        %v926 = vpop.f32.mrb[0].mxu0
        %927 = vdwg.mxu0
        %v928 = vadd.f32 %v726, %v865
        %v929 = vadd.f32 %v727, %v870
        %v930 = vadd.f32 %v728, %v875
        %v931 = vadd.f32 %v729, %v880
        %v932 = vadd.f32 %v730, %v885
        %v933 = vadd.f32 %v731, %v890
        %v934 = vadd.f32 %v732, %v895
        %v935 = vadd.f32 %v733, %v900
        %v936 = vadd.f32 %v734, %v905
        %v937 = vadd.f32 %v735, %v910
        %v938 = vadd.f32 %v736, %v915
        %v939 = vadd.f32 %v737, %v920
        %v940 = vadd.f32 %v738, %v925
        %vm941 = vcmp.ge.f32.partialorder %v928, 0.0
        %vm942 = vcmp.ge.f32.partialorder %v929, 0.0
        %vm943 = vcmp.ge.f32.partialorder %v930, 0.0
        %vm944 = vcmp.ge.f32.partialorder %v931, 0.0
        %vm945 = vcmp.ge.f32.partialorder %v932, 0.0
        %vm946 = vcmp.ge.f32.partialorder %v933, 0.0
        %vm947 = vcmp.ge.f32.partialorder %v934, 0.0
        %vm948 = vcmp.ge.f32.partialorder %v935, 0.0
        %vm949 = vcmp.ge.f32.partialorder %v936, 0.0
        %vm950 = vcmp.ge.f32.partialorder %v937, 0.0
        %vm951 = vcmp.ge.f32.partialorder %v938, 0.0
        %vm952 = vcmp.ge.f32.partialorder %v939, 0.0
        %vm953 = vcmp.ge.f32.partialorder %v940, 0.0
        %v954 = vmul.f32 %v928, 0.1
        %v955 = vmul.f32 %v929, 0.1
        %v956 = vmul.f32 %v930, 0.1
        %v957 = vmul.f32 %v931, 0.1
        %v958 = vmul.f32 %v932, 0.1
        %v959 = vmul.f32 %v933, 0.1
        %v960 = vmul.f32 %v934, 0.1
        %v961 = vmul.f32 %v935, 0.1
        %v962 = vmul.f32 %v936, 0.1
        %v963 = vmul.f32 %v937, 0.1
        %v964 = vmul.f32 %v938, 0.1
        %v965 = vmul.f32 %v939, 0.1
        %v966 = vmul.f32 %v940, 0.1
        %v967 = vsel %vm941, %v928, %v954
        %v968 = vsel %vm942, %v929, %v955
        %v969 = vsel %vm943, %v930, %v956
        %v970 = vsel %vm944, %v931, %v957
        %v971 = vsel %vm945, %v932, %v958
        %v972 = vsel %vm946, %v933, %v959
        %v973 = vsel %vm947, %v934, %v960
        %v974 = vsel %vm948, %v935, %v961
        %v975 = vsel %vm949, %v936, %v962
        %v976 = vsel %vm950, %v937, %v963
        %v977 = vsel %vm951, %v938, %v964
        %v978 = vsel %vm952, %v939, %v965
        %v979 = vsel %vm953, %v940, %v966
        %v980 = vld [vmem:[#allocation7] sm:$0xff]
        %v981 = vld [vmem:[#allocation7 + $0x8] sm:$0xff]
        %v982 = vld [vmem:[#allocation7 + $0x10] sm:$0xff]
        %v983 = vld [vmem:[#allocation7 + $0x18] sm:$0xff]
        %v984 = vld [vmem:[#allocation7 + $0x20] sm:$0xff]
        %v985 = vld [vmem:[#allocation7 + $0x28] sm:$0xff]
        %v986 = vld [vmem:[#allocation7 + $0x30] sm:$0xff]
        %v987 = vld [vmem:[#allocation7 + $0x38] sm:$0xff]
        %v988 = vld [vmem:[#allocation7 + $0x40] sm:$0xff]
        %v989 = vld [vmem:[#allocation7 + $0x48] sm:$0xff]
        %v990 = vld [vmem:[#allocation7 + $0x50] sm:$0xff]
        %v991 = vld [vmem:[#allocation7 + $0x58] sm:$0xff]
        %v992 = vld [vmem:[#allocation7 + $0x60] sm:$0xff]
        %v993 = vld [vmem:[#allocation7 + $0x68] sm:$0xff]
        %v994 = vld [vmem:[#allocation7 + $0x70] sm:$0xff]
        %v995 = vld [vmem:[#allocation7 + $0x78] sm:$0xff]
        %v996 = vld [vmem:[#allocation7 + $0x80] sm:$0xff]
        %v997 = vld [vmem:[#allocation7 + $0x88] sm:$0xff]
        %v998 = vld [vmem:[#allocation7 + $0x90] sm:$0xff]
        %v999 = vld [vmem:[#allocation7 + $0x98] sm:$0xff]
        %v1000 = vld [vmem:[#allocation7 + $0xa0] sm:$0xff]
        %v1001 = vld [vmem:[#allocation7 + $0xa8] sm:$0xff]
        %v1002 = vld [vmem:[#allocation7 + $0xb0] sm:$0xff]
        %v1003 = vld [vmem:[#allocation7 + $0xb8] sm:$0xff]
        %v1004 = vld [vmem:[#allocation7 + $0xc0] sm:$0xff]
        %v1005 = vld [vmem:[#allocation7 + $0xc8] sm:$0xff]
        %v1006 = vld [vmem:[#allocation7 + $0xd0] sm:$0xff]
        %v1007 = vld [vmem:[#allocation7 + $0xd8] sm:$0xff]
        %v1008 = vld [vmem:[#allocation7 + $0xe0] sm:$0xff]
        %v1009 = vld [vmem:[#allocation7 + $0xe8] sm:$0xff]
        %v1010 = vld [vmem:[#allocation7 + $0xf0] sm:$0xff]
        %v1011 = vld [vmem:[#allocation7 + $0xf8] sm:$0xff]
        %vm1012 = vcmp.ge.f32.partialorder %v337, 0.0
        %vm1013 = vcmp.ge.f32.partialorder %v338, 0.0
        %vm1014 = vcmp.ge.f32.partialorder %v339, 0.0
        %vm1015 = vcmp.ge.f32.partialorder %v340, 0.0
        %vm1016 = vcmp.ge.f32.partialorder %v341, 0.0
        %vm1017 = vcmp.ge.f32.partialorder %v342, 0.0
        %vm1018 = vcmp.ge.f32.partialorder %v343, 0.0
        %vm1019 = vcmp.ge.f32.partialorder %v344, 0.0
        %vm1020 = vcmp.ge.f32.partialorder %v345, 0.0
        %vm1021 = vcmp.ge.f32.partialorder %v346, 0.0
        %vm1022 = vcmp.ge.f32.partialorder %v347, 0.0
        %vm1023 = vcmp.ge.f32.partialorder %v348, 0.0
        %vm1024 = vcmp.ge.f32.partialorder %v349, 0.0
        %v1025 = vmul.f32 %v337, 0.1
        %v1026 = vmul.f32 %v338, 0.1
        %v1027 = vmul.f32 %v339, 0.1
        %v1028 = vmul.f32 %v340, 0.1
        %v1029 = vmul.f32 %v341, 0.1
        %v1030 = vmul.f32 %v342, 0.1
        %v1031 = vmul.f32 %v343, 0.1
        %v1032 = vmul.f32 %v344, 0.1
        %v1033 = vmul.f32 %v345, 0.1
        %v1034 = vmul.f32 %v346, 0.1
        %v1035 = vmul.f32 %v347, 0.1
        %v1036 = vmul.f32 %v348, 0.1
        %v1037 = vmul.f32 %v349, 0.1
        %v1038 = vsel %vm1012, %v337, %v1025
        %v1039 = vsel %vm1013, %v338, %v1026
        %v1040 = vsel %vm1014, %v339, %v1027
        %v1041 = vsel %vm1015, %v340, %v1028
        %v1042 = vsel %vm1016, %v341, %v1029
        %v1043 = vsel %vm1017, %v342, %v1030
        %v1044 = vsel %vm1018, %v343, %v1031
        %v1045 = vsel %vm1019, %v344, %v1032
        %v1046 = vsel %vm1020, %v345, %v1033
        %v1047 = vsel %vm1021, %v346, %v1034
        %v1048 = vsel %vm1022, %v347, %v1035
        %v1049 = vsel %vm1023, %v348, %v1036
        %v1050 = vsel %vm1024, %v349, %v1037
        %1052 = vset.pattern.permute.xlu0 8
        %1053 = vperm.xlu0 %1052, %v1038
        %v1054 = vpop.permute.xlu0 %1053
        %1057 = vset.pattern.permute.xlu0 8
        %1058 = vperm.xlu0 %1057, %v1039
        %v1059 = vpop.permute.xlu0 %1058
        %1062 = vset.pattern.permute.xlu0 8
        %1063 = vperm.xlu0 %1062, %v1040
        %v1064 = vpop.permute.xlu0 %1063
        %1067 = vset.pattern.permute.xlu0 8
        %1068 = vperm.xlu0 %1067, %v1041
        %v1069 = vpop.permute.xlu0 %1068
        %1072 = vset.pattern.permute.xlu0 8
        %1073 = vperm.xlu0 %1072, %v1042
        %v1074 = vpop.permute.xlu0 %1073
        %1077 = vset.pattern.permute.xlu0 8
        %1078 = vperm.xlu0 %1077, %v1043
        %v1079 = vpop.permute.xlu0 %1078
        %1082 = vset.pattern.permute.xlu0 8
        %1083 = vperm.xlu0 %1082, %v1044
        %v1084 = vpop.permute.xlu0 %1083
        %1087 = vset.pattern.permute.xlu0 8
        %1088 = vperm.xlu0 %1087, %v1045
        %v1089 = vpop.permute.xlu0 %1088
        %1092 = vset.pattern.permute.xlu0 8
        %1093 = vperm.xlu0 %1092, %v1046
        %v1094 = vpop.permute.xlu0 %1093
        %1097 = vset.pattern.permute.xlu0 8
        %1098 = vperm.xlu0 %1097, %v1047
        %v1099 = vpop.permute.xlu0 %1098
        %1102 = vset.pattern.permute.xlu0 8
        %1103 = vperm.xlu0 %1102, %v1048
        %v1104 = vpop.permute.xlu0 %1103
        %1107 = vset.pattern.permute.xlu0 8
        %1108 = vperm.xlu0 %1107, %v1049
        %v1109 = vpop.permute.xlu0 %1108
        %1112 = vset.pattern.permute.xlu0 8
        %1113 = vperm.xlu0 %1112, %v1050
        %v1114 = vpop.permute.xlu0 %1113
        %v1116 = vlaneseq
        %v1117 = vshrl.u32 %v1116, 7
        %v1118 = vsub.s32 0, %v1117
        %v1119 = vrot.slane %v355, %v1118
        %v1120 = vmul.f32 %v1054, %v1119
        %v1121 = vmul.f32 %v1059, %v1119
        %v1122 = vmul.f32 %v1064, %v1119
        %v1123 = vmul.f32 %v1069, %v1119
        %v1124 = vmul.f32 %v1074, %v1119
        %v1125 = vmul.f32 %v1079, %v1119
        %v1126 = vmul.f32 %v1084, %v1119
        %v1127 = vmul.f32 %v1089, %v1119
        %v1128 = vmul.f32 %v1094, %v1119
        %v1129 = vmul.f32 %v1099, %v1119
        %v1130 = vmul.f32 %v1104, %v1119
        %v1131 = vmul.f32 %v1109, %v1119
        %v1132 = vmul.f32 %v1114, %v1119
        %1133 = vmatprep.subr.mxu0 0.0
        %1134 = vmatpush1.msra.mxu0 %v980
        %1135 = vmatprep.subr.mxu0 0.0
        %1136 = vmatpush1.msra.mxu0 %v981
        %1137 = vmatprep.subr.mxu0 0.0
        %1138 = vmatpush1.msra.mxu0 %v982
        %1139 = vmatprep.subr.mxu0 0.0
        %1140 = vmatpush1.msra.mxu0 %v983
        %1141 = vmatprep.subr.mxu0 0.0
        %1142 = vmatpush1.msra.mxu0 %v984
        %1143 = vmatprep.subr.mxu0 0.0
        %1144 = vmatpush1.msra.mxu0 %v985
        %1145 = vmatprep.subr.mxu0 0.0
        %1146 = vmatpush1.msra.mxu0 %v986
        %1147 = vmatprep.subr.mxu0 0.0
        %1148 = vmatpush1.msra.mxu0 %v987
        %1149 = vmatprep.subr.mxu0 0.0
        %1150 = vmatpush1.msra.mxu0 %v988
        %1151 = vmatprep.subr.mxu0 0.0
        %1152 = vmatpush1.msra.mxu0 %v989
        %1153 = vmatprep.subr.mxu0 0.0
        %1154 = vmatpush1.msra.mxu0 %v990
        %1155 = vmatprep.subr.mxu0 0.0
        %1156 = vmatpush1.msra.mxu0 %v991
        %1157 = vmatprep.subr.mxu0 0.0
        %1158 = vmatpush1.msra.mxu0 %v992
        %1159 = vmatprep.subr.mxu0 0.0
        %1160 = vmatpush1.msra.mxu0 %v993
        %1161 = vmatprep.subr.mxu0 0.0
        %1162 = vmatpush1.msra.mxu0 %v994
        %1163 = vmatprep.subr.mxu0 0.0
        %1164 = vmatpush1.msra.mxu0 %v995
        %1165 = vmatprep.subr.mxu0 0.0
        %1166 = vmatpush1.msra.mxu0 %v996
        %1167 = vmatprep.subr.mxu0 0.0
        %1168 = vmatpush1.msra.mxu0 %v997
        %1169 = vmatprep.subr.mxu0 0.0
        %1170 = vmatpush1.msra.mxu0 %v998
        %1171 = vmatprep.subr.mxu0 0.0
        %1172 = vmatpush1.msra.mxu0 %v999
        %1173 = vmatprep.subr.mxu0 0.0
        %1174 = vmatpush1.msra.mxu0 %v1000
        %1175 = vmatprep.subr.mxu0 0.0
        %1176 = vmatpush1.msra.mxu0 %v1001
        %1177 = vmatprep.subr.mxu0 0.0
        %1178 = vmatpush1.msra.mxu0 %v1002
        %1179 = vmatprep.subr.mxu0 0.0
        %1180 = vmatpush1.msra.mxu0 %v1003
        %1181 = vmatprep.subr.mxu0 0.0
        %1182 = vmatpush1.msra.mxu0 %v1004
        %1183 = vmatprep.subr.mxu0 0.0
        %1184 = vmatpush1.msra.mxu0 %v1005
        %1185 = vmatprep.subr.mxu0 0.0
        %1186 = vmatpush1.msra.mxu0 %v1006
        %1187 = vmatprep.subr.mxu0 0.0
        %1188 = vmatpush1.msra.mxu0 %v1007
        %1189 = vmatprep.subr.mxu0 0.0
        %1190 = vmatpush1.msra.mxu0 %v1008
        %1191 = vmatprep.subr.mxu0 0.0
        %1192 = vmatpush1.msra.mxu0 %v1009
        %1193 = vmatprep.subr.mxu0 0.0
        %1194 = vmatpush1.msra.mxu0 %v1010
        %1195 = vmatprep.subr.mxu0 0.0
        %1196 = vmatpush1.msra.mxu0 %v1011
        %1197 = vmatprep.mubr.f32.mxu0 %v928
        %1198 = vmatmul.mubr.f32.gmra.mrb[0].mxu0 %v967
        %v1199 = vpop.f32.mrb[0].mxu0
        %v1200 = vadd.f32 %v1120, %v1199
        %v1201 = vpop.f32.mrb[0].mxu0
        %1202 = vmatprep.mubr.f32.mxu0 %v929
        %1203 = vmatmul.mubr.f32.gmra.mrb[0].mxu0 %v968
        %v1204 = vpop.f32.mrb[0].mxu0
        %v1205 = vadd.f32 %v1121, %v1204
        %v1206 = vpop.f32.mrb[0].mxu0
        %1207 = vmatprep.mubr.f32.mxu0 %v930
        %1208 = vmatmul.mubr.f32.gmra.mrb[0].mxu0 %v969
        %v1209 = vpop.f32.mrb[0].mxu0
        %v1210 = vadd.f32 %v1122, %v1209
        %v1211 = vpop.f32.mrb[0].mxu0
        %1212 = vmatprep.mubr.f32.mxu0 %v931
        %1213 = vmatmul.mubr.f32.gmra.mrb[0].mxu0 %v970
        %v1214 = vpop.f32.mrb[0].mxu0
        %v1215 = vadd.f32 %v1123, %v1214
        %v1216 = vpop.f32.mrb[0].mxu0
        %1217 = vmatprep.mubr.f32.mxu0 %v932
        %1218 = vmatmul.mubr.f32.gmra.mrb[0].mxu0 %v971
        %v1219 = vpop.f32.mrb[0].mxu0
        %v1220 = vadd.f32 %v1124, %v1219
        %v1221 = vpop.f32.mrb[0].mxu0
        %1222 = vmatprep.mubr.f32.mxu0 %v933
        %1223 = vmatmul.mubr.f32.gmra.mrb[0].mxu0 %v972
        %v1224 = vpop.f32.mrb[0].mxu0
        %v1225 = vadd.f32 %v1125, %v1224
        %v1226 = vpop.f32.mrb[0].mxu0
        %1227 = vmatprep.mubr.f32.mxu0 %v934
        %1228 = vmatmul.mubr.f32.gmra.mrb[0].mxu0 %v973
        %v1229 = vpop.f32.mrb[0].mxu0
        %v1230 = vadd.f32 %v1126, %v1229
        %v1231 = vpop.f32.mrb[0].mxu0
        %1232 = vmatprep.mubr.f32.mxu0 %v935
        %1233 = vmatmul.mubr.f32.gmra.mrb[0].mxu0 %v974
        %v1234 = vpop.f32.mrb[0].mxu0
        %v1235 = vadd.f32 %v1127, %v1234
        %v1236 = vpop.f32.mrb[0].mxu0
        %1237 = vmatprep.mubr.f32.mxu0 %v936
        %1238 = vmatmul.mubr.f32.gmra.mrb[0].mxu0 %v975
        %v1239 = vpop.f32.mrb[0].mxu0
        %v1240 = vadd.f32 %v1128, %v1239
        %v1241 = vpop.f32.mrb[0].mxu0
        %1242 = vmatprep.mubr.f32.mxu0 %v937
        %1243 = vmatmul.mubr.f32.gmra.mrb[0].mxu0 %v976
        %v1244 = vpop.f32.mrb[0].mxu0
        %v1245 = vadd.f32 %v1129, %v1244
        %v1246 = vpop.f32.mrb[0].mxu0
        %1247 = vmatprep.mubr.f32.mxu0 %v938
        %1248 = vmatmul.mubr.f32.gmra.mrb[0].mxu0 %v977
        %v1249 = vpop.f32.mrb[0].mxu0
        %v1250 = vadd.f32 %v1130, %v1249
        %v1251 = vpop.f32.mrb[0].mxu0
        %1252 = vmatprep.mubr.f32.mxu0 %v939
        %1253 = vmatmul.mubr.f32.gmra.mrb[0].mxu0 %v978
        %v1254 = vpop.f32.mrb[0].mxu0
        %v1255 = vadd.f32 %v1131, %v1254
        %v1256 = vpop.f32.mrb[0].mxu0
        %1257 = vmatprep.mubr.f32.mxu0 %v940
        %1258 = vmatmul.mubr.f32.gmra.mrb[0].mxu0 %v979
        %v1259 = vpop.f32.mrb[0].mxu0
        %v1260 = vadd.f32 %v1132, %v1259
        %v1261 = vpop.f32.mrb[0].mxu0
        %1262 = vdwg.mxu0
        %1263 = vset.pattern.permute.xlu0 8
        %1264 = vperm.xlu0 %1263, %v337
        %v1265 = vpop.permute.xlu0 %1264
        %1267 = vset.pattern.permute.xlu0 8
        %1268 = vperm.xlu0 %1267, %v338
        %v1269 = vpop.permute.xlu0 %1268
        %1271 = vset.pattern.permute.xlu0 8
        %1272 = vperm.xlu0 %1271, %v339
        %v1273 = vpop.permute.xlu0 %1272
        %1275 = vset.pattern.permute.xlu0 8
        %1276 = vperm.xlu0 %1275, %v340
        %v1277 = vpop.permute.xlu0 %1276
        %1279 = vset.pattern.permute.xlu0 8
        %1280 = vperm.xlu0 %1279, %v341
        %v1281 = vpop.permute.xlu0 %1280
        %1283 = vset.pattern.permute.xlu0 8
        %1284 = vperm.xlu0 %1283, %v342
        %v1285 = vpop.permute.xlu0 %1284
        %1287 = vset.pattern.permute.xlu0 8
        %1288 = vperm.xlu0 %1287, %v343
        %v1289 = vpop.permute.xlu0 %1288
        %1291 = vset.pattern.permute.xlu0 8
        %1292 = vperm.xlu0 %1291, %v344
        %v1293 = vpop.permute.xlu0 %1292
        %1295 = vset.pattern.permute.xlu0 8
        %1296 = vperm.xlu0 %1295, %v345
        %v1297 = vpop.permute.xlu0 %1296
        %1299 = vset.pattern.permute.xlu0 8
        %1300 = vperm.xlu0 %1299, %v346
        %v1301 = vpop.permute.xlu0 %1300
        %1303 = vset.pattern.permute.xlu0 8
        %1304 = vperm.xlu0 %1303, %v347
        %v1305 = vpop.permute.xlu0 %1304
        %1307 = vset.pattern.permute.xlu0 8
        %1308 = vperm.xlu0 %1307, %v348
        %v1309 = vpop.permute.xlu0 %1308
        %1311 = vset.pattern.permute.xlu0 8
        %1312 = vperm.xlu0 %1311, %v349
        %v1313 = vpop.permute.xlu0 %1312
        %v1315 = vlaneseq
        %v1316 = vshrl.u32 %v1315, 7
        %v1317 = vsub.s32 0, %v1316
        %v1318 = vrot.slane %v356, %v1317
        %v1319 = vmul.f32 %v1265, %v1318
        %v1320 = vmul.f32 %v1269, %v1318
        %v1321 = vmul.f32 %v1273, %v1318
        %v1322 = vmul.f32 %v1277, %v1318
        %v1323 = vmul.f32 %v1281, %v1318
        %v1324 = vmul.f32 %v1285, %v1318
        %v1325 = vmul.f32 %v1289, %v1318
        %v1326 = vmul.f32 %v1293, %v1318
        %v1327 = vmul.f32 %v1297, %v1318
        %v1328 = vmul.f32 %v1301, %v1318
        %v1329 = vmul.f32 %v1305, %v1318
        %v1330 = vmul.f32 %v1309, %v1318
        %v1331 = vmul.f32 %v1313, %v1318
        %v1332 = vadd.f32 %v1200, %v1319
        %v1333 = vadd.f32 %v1205, %v1320
        %v1334 = vadd.f32 %v1210, %v1321
        %v1335 = vadd.f32 %v1215, %v1322
        %v1336 = vadd.f32 %v1220, %v1323
        %v1337 = vadd.f32 %v1225, %v1324
        %v1338 = vadd.f32 %v1230, %v1325
        %v1339 = vadd.f32 %v1235, %v1326
        %v1340 = vadd.f32 %v1240, %v1327
        %v1341 = vadd.f32 %v1245, %v1328
        %v1342 = vadd.f32 %v1250, %v1329
        %v1343 = vadd.f32 %v1255, %v1330
        %v1344 = vadd.f32 %v1260, %v1331
        %v1345 = vlaneseq
        %v1346 = vshrl.u32 %v1345, 7
        %v1347 = vsub.s32 0, %v1346
        %v1348 = vrot.slane %v353, %v1347
        %v1349 = vadd.f32 %v1332, %v1348
        %v1350 = vadd.f32 %v1333, %v1348
        %v1351 = vadd.f32 %v1334, %v1348
        %v1352 = vadd.f32 %v1335, %v1348
        %v1353 = vadd.f32 %v1336, %v1348
        %v1354 = vadd.f32 %v1337, %v1348
        %v1355 = vadd.f32 %v1338, %v1348
        %v1356 = vadd.f32 %v1339, %v1348
        %v1357 = vadd.f32 %v1340, %v1348
        %v1358 = vadd.f32 %v1341, %v1348
        %v1359 = vadd.f32 %v1342, %v1348
        %v1360 = vadd.f32 %v1343, %v1348
        %v1361 = vadd.f32 %v1344, %v1348
        %vm1362 = vcmp.ge.f32.partialorder %v1349, 0.0
        %vm1363 = vcmp.ge.f32.partialorder %v1350, 0.0
        %vm1364 = vcmp.ge.f32.partialorder %v1351, 0.0
        %vm1365 = vcmp.ge.f32.partialorder %v1352, 0.0
        %vm1366 = vcmp.ge.f32.partialorder %v1353, 0.0
        %vm1367 = vcmp.ge.f32.partialorder %v1354, 0.0
        %vm1368 = vcmp.ge.f32.partialorder %v1355, 0.0
        %vm1369 = vcmp.ge.f32.partialorder %v1356, 0.0
        %vm1370 = vcmp.ge.f32.partialorder %v1357, 0.0
        %vm1371 = vcmp.ge.f32.partialorder %v1358, 0.0
        %vm1372 = vcmp.ge.f32.partialorder %v1359, 0.0
        %vm1373 = vcmp.ge.f32.partialorder %v1360, 0.0
        %vm1374 = vcmp.ge.f32.partialorder %v1361, 0.0
        %v1375 = vmul.f32 %v1349, 0.1
        %v1376 = vmul.f32 %v1350, 0.1
        %v1377 = vmul.f32 %v1351, 0.1
        %v1378 = vmul.f32 %v1352, 0.1
        %v1379 = vmul.f32 %v1353, 0.1
        %v1380 = vmul.f32 %v1354, 0.1
        %v1381 = vmul.f32 %v1355, 0.1
        %v1382 = vmul.f32 %v1356, 0.1
        %v1383 = vmul.f32 %v1357, 0.1
        %v1384 = vmul.f32 %v1358, 0.1
        %v1385 = vmul.f32 %v1359, 0.1
        %v1386 = vmul.f32 %v1360, 0.1
        %v1387 = vmul.f32 %v1361, 0.1
        %v1388 = vsel %vm1362, %v1349, %v1375
        %v1389 = vsel %vm1363, %v1350, %v1376
        %v1390 = vsel %vm1364, %v1351, %v1377
        %v1391 = vsel %vm1365, %v1352, %v1378
        %v1392 = vsel %vm1366, %v1353, %v1379
        %v1393 = vsel %vm1367, %v1354, %v1380
        %v1394 = vsel %vm1368, %v1355, %v1381
        %v1395 = vsel %vm1369, %v1356, %v1382
        %v1396 = vsel %vm1370, %v1357, %v1383
        %v1397 = vsel %vm1371, %v1358, %v1384
        %v1398 = vsel %vm1372, %v1359, %v1385
        %v1399 = vsel %vm1373, %v1360, %v1386
        %v1400 = vsel %vm1374, %v1361, %v1387
        %v1401 = vld [vmem:[%s5] sm:$0xff]
        %v1402 = vld [vmem:[%s5 + $0x8] sm:$0xff]
        %v1403 = vld [vmem:[%s5 + $0x10] sm:$0xff]
        %v1404 = vld [vmem:[%s5 + $0x18] sm:$0xff]
        %v1405 = vld [vmem:[%s5 + $0x20] sm:$0xff]
        %v1406 = vld [vmem:[%s5 + $0x28] sm:$0xff]
        %v1407 = vld [vmem:[%s5 + $0x30] sm:$0xff]
        %v1408 = vld [vmem:[%s5 + $0x38] sm:$0xff]
        %v1409 = vld [vmem:[%s5 + $0x40] sm:$0xff]
        %v1410 = vld [vmem:[%s5 + $0x48] sm:$0xff]
        %v1411 = vld [vmem:[%s5 + $0x50] sm:$0xff]
        %v1412 = vld [vmem:[%s5 + $0x58] sm:$0xff]
        %v1413 = vld [vmem:[%s5 + $0x60] sm:$0xff]
        %v1414 = vld [vmem:[%s5 + $0x68] sm:$0xff]
        %v1415 = vld [vmem:[%s5 + $0x70] sm:$0xff]
        %v1416 = vld [vmem:[%s5 + $0x78] sm:$0xff]
        %v1417 = vlaneseq
        %v1418 = vshrl.u32 %v1417, 7
        %v1419 = vsub.s32 0, %v1418
        %v1420 = vrot.slane %v354, %v1419
        %1421 = vmatprep.subr.mxu0 0.0
        %1422 = vmatpush1.msra.mxu0 %v1401
        %1423 = vmatprep.subr.mxu0 0.0
        %1424 = vmatpush1.msra.mxu0 %v1402
        %1425 = vmatprep.subr.mxu0 0.0
        %1426 = vmatpush1.msra.mxu0 %v1403
        %1427 = vmatprep.subr.mxu0 0.0
        %1428 = vmatpush1.msra.mxu0 %v1404
        %1429 = vmatprep.subr.mxu0 0.0
        %1430 = vmatpush1.msra.mxu0 %v1405
        %1431 = vmatprep.subr.mxu0 0.0
        %1432 = vmatpush1.msra.mxu0 %v1406
        %1433 = vmatprep.subr.mxu0 0.0
        %1434 = vmatpush1.msra.mxu0 %v1407
        %1435 = vmatprep.subr.mxu0 0.0
        %1436 = vmatpush1.msra.mxu0 %v1408
        %1437 = vmatprep.subr.mxu0 0.0
        %1438 = vmatpush1.msra.mxu0 %v1409
        %1439 = vmatprep.subr.mxu0 0.0
        %1440 = vmatpush1.msra.mxu0 %v1410
        %1441 = vmatprep.subr.mxu0 0.0
        %1442 = vmatpush1.msra.mxu0 %v1411
        %1443 = vmatprep.subr.mxu0 0.0
        %1444 = vmatpush1.msra.mxu0 %v1412
        %1445 = vmatprep.subr.mxu0 0.0
        %1446 = vmatpush1.msra.mxu0 %v1413
        %1447 = vmatprep.subr.mxu0 0.0
        %1448 = vmatpush1.msra.mxu0 %v1414
        %1449 = vmatprep.subr.mxu0 0.0
        %1450 = vmatpush1.msra.mxu0 %v1415
        %1451 = vmatprep.subr.mxu0 0.0
        %1452 = vmatpush1.msra.mxu0 %v1416
        %1453 = vmatprep.subr.mxu0 0.0
        %1454 = vmatpush1.msra.mxu0 0.0
        %1455 = vmatprep.subr.mxu0 0.0
        %1456 = vmatpush1.msra.mxu0 0.0
        %1457 = vmatprep.subr.mxu0 0.0
        %1458 = vmatpush1.msra.mxu0 0.0
        %1459 = vmatprep.subr.mxu0 0.0
        %1460 = vmatpush1.msra.mxu0 0.0
        %1461 = vmatprep.subr.mxu0 0.0
        %1462 = vmatpush1.msra.mxu0 0.0
        %1463 = vmatprep.subr.mxu0 0.0
        %1464 = vmatpush1.msra.mxu0 0.0
        %1465 = vmatprep.subr.mxu0 0.0
        %1466 = vmatpush1.msra.mxu0 0.0
        %1467 = vmatprep.subr.mxu0 0.0
        %1468 = vmatpush1.msra.mxu0 0.0
        %1469 = vmatprep.subr.mxu0 0.0
        %1470 = vmatpush1.msra.mxu0 0.0
        %1471 = vmatprep.subr.mxu0 0.0
        %1472 = vmatpush1.msra.mxu0 0.0
        %1473 = vmatprep.subr.mxu0 0.0
        %1474 = vmatpush1.msra.mxu0 0.0
        %1475 = vmatprep.subr.mxu0 0.0
        %1476 = vmatpush1.msra.mxu0 0.0
        %1477 = vmatprep.subr.mxu0 0.0
        %1478 = vmatpush1.msra.mxu0 0.0
        %1479 = vmatprep.subr.mxu0 0.0
        %1480 = vmatpush1.msra.mxu0 0.0
        %1481 = vmatprep.subr.mxu0 0.0
        %1482 = vmatpush1.msra.mxu0 0.0
        %1483 = vmatprep.subr.mxu0 0.0
        %1484 = vmatpush1.msra.mxu0 0.0
        %1485 = vmatprep.mubr.f32.mxu0 0.0
        %1486 = vmatmul.mubr.f32.gmra.mrb[0].mxu0 %v1388
        %v1487 = vpop.f32.mrb[0].mxu0
        %v1488 = vadd.f32 %v1420, %v1487
        %v1489 = vpop.f32.mrb[0].mxu0
        %1490 = vmatprep.mubr.f32.mxu0 0.0
        %1491 = vmatmul.mubr.f32.gmra.mrb[0].mxu0 %v1389
        %v1492 = vpop.f32.mrb[0].mxu0
        %v1493 = vadd.f32 %v1420, %v1492
        %v1494 = vpop.f32.mrb[0].mxu0
        %1495 = vmatprep.mubr.f32.mxu0 0.0
        %1496 = vmatmul.mubr.f32.gmra.mrb[0].mxu0 %v1390
        %v1497 = vpop.f32.mrb[0].mxu0
        %v1498 = vadd.f32 %v1420, %v1497
        %v1499 = vpop.f32.mrb[0].mxu0
        %1500 = vmatprep.mubr.f32.mxu0 0.0
        %1501 = vmatmul.mubr.f32.gmra.mrb[0].mxu0 %v1391
        %v1502 = vpop.f32.mrb[0].mxu0
        %v1503 = vadd.f32 %v1420, %v1502
        %v1504 = vpop.f32.mrb[0].mxu0
        %1505 = vmatprep.mubr.f32.mxu0 0.0
        %1506 = vmatmul.mubr.f32.gmra.mrb[0].mxu0 %v1392
        %v1507 = vpop.f32.mrb[0].mxu0
        %v1508 = vadd.f32 %v1420, %v1507
        %v1509 = vpop.f32.mrb[0].mxu0
        %1510 = vmatprep.mubr.f32.mxu0 0.0
        %1511 = vmatmul.mubr.f32.gmra.mrb[0].mxu0 %v1393
        %v1512 = vpop.f32.mrb[0].mxu0
        %v1513 = vadd.f32 %v1420, %v1512
        %v1514 = vpop.f32.mrb[0].mxu0
        %1515 = vmatprep.mubr.f32.mxu0 0.0
        %1516 = vmatmul.mubr.f32.gmra.mrb[0].mxu0 %v1394
        %v1517 = vpop.f32.mrb[0].mxu0
        %v1518 = vadd.f32 %v1420, %v1517
        %v1519 = vpop.f32.mrb[0].mxu0
        %1520 = vmatprep.mubr.f32.mxu0 0.0
        %1521 = vmatmul.mubr.f32.gmra.mrb[0].mxu0 %v1395
        %v1522 = vpop.f32.mrb[0].mxu0
        %v1523 = vadd.f32 %v1420, %v1522
        %v1524 = vpop.f32.mrb[0].mxu0
        %1525 = vmatprep.mubr.f32.mxu0 0.0
        %1526 = vmatmul.mubr.f32.gmra.mrb[0].mxu0 %v1396
        %v1527 = vpop.f32.mrb[0].mxu0
        %v1528 = vadd.f32 %v1420, %v1527
        %v1529 = vpop.f32.mrb[0].mxu0
        %1530 = vmatprep.mubr.f32.mxu0 0.0
        %1531 = vmatmul.mubr.f32.gmra.mrb[0].mxu0 %v1397
        %v1532 = vpop.f32.mrb[0].mxu0
        %v1533 = vadd.f32 %v1420, %v1532
        %v1534 = vpop.f32.mrb[0].mxu0
        %1535 = vmatprep.mubr.f32.mxu0 0.0
        %1536 = vmatmul.mubr.f32.gmra.mrb[0].mxu0 %v1398
        %v1537 = vpop.f32.mrb[0].mxu0
        %v1538 = vadd.f32 %v1420, %v1537
        %v1539 = vpop.f32.mrb[0].mxu0
        %1540 = vmatprep.mubr.f32.mxu0 0.0
        %1541 = vmatmul.mubr.f32.gmra.mrb[0].mxu0 %v1399
        %v1542 = vpop.f32.mrb[0].mxu0
        %v1543 = vadd.f32 %v1420, %v1542
        %v1544 = vpop.f32.mrb[0].mxu0
        %1545 = vmatprep.mubr.f32.mxu0 0.0
        %1546 = vmatmul.mubr.f32.gmra.mrb[0].mxu0 %v1400
        %v1547 = vpop.f32.mrb[0].mxu0
        %v1548 = vadd.f32 %v1420, %v1547
        %v1549 = vpop.f32.mrb[0].mxu0
        %1550 = vdwg.mxu0
        %v1551 = vadd.f32 %v1349, %v1488
        %v1552 = vadd.f32 %v1350, %v1493
        %v1553 = vadd.f32 %v1351, %v1498
        %v1554 = vadd.f32 %v1352, %v1503
        %v1555 = vadd.f32 %v1353, %v1508
        %v1556 = vadd.f32 %v1354, %v1513
        %v1557 = vadd.f32 %v1355, %v1518
        %v1558 = vadd.f32 %v1356, %v1523
        %v1559 = vadd.f32 %v1357, %v1528
        %v1560 = vadd.f32 %v1358, %v1533
        %v1561 = vadd.f32 %v1359, %v1538
        %v1562 = vadd.f32 %v1360, %v1543
        %v1563 = vadd.f32 %v1361, %v1548
        %vm1564 = vcmp.ge.f32.partialorder %v1551, 0.0
        %vm1565 = vcmp.ge.f32.partialorder %v1552, 0.0
        %vm1566 = vcmp.ge.f32.partialorder %v1553, 0.0
        %vm1567 = vcmp.ge.f32.partialorder %v1554, 0.0
        %vm1568 = vcmp.ge.f32.partialorder %v1555, 0.0
        %vm1569 = vcmp.ge.f32.partialorder %v1556, 0.0
        %vm1570 = vcmp.ge.f32.partialorder %v1557, 0.0
        %vm1571 = vcmp.ge.f32.partialorder %v1558, 0.0
        %vm1572 = vcmp.ge.f32.partialorder %v1559, 0.0
        %vm1573 = vcmp.ge.f32.partialorder %v1560, 0.0
        %vm1574 = vcmp.ge.f32.partialorder %v1561, 0.0
        %vm1575 = vcmp.ge.f32.partialorder %v1562, 0.0
        %vm1576 = vcmp.ge.f32.partialorder %v1563, 0.0
        %v1577 = vmul.f32 %v1551, 0.1
        %v1578 = vmul.f32 %v1552, 0.1
        %v1579 = vmul.f32 %v1553, 0.1
        %v1580 = vmul.f32 %v1554, 0.1
        %v1581 = vmul.f32 %v1555, 0.1
        %v1582 = vmul.f32 %v1556, 0.1
        %v1583 = vmul.f32 %v1557, 0.1
        %v1584 = vmul.f32 %v1558, 0.1
        %v1585 = vmul.f32 %v1559, 0.1
        %v1586 = vmul.f32 %v1560, 0.1
        %v1587 = vmul.f32 %v1561, 0.1
        %v1588 = vmul.f32 %v1562, 0.1
        %v1589 = vmul.f32 %v1563, 0.1
        %v1590 = vsel %vm1564, %v1551, %v1577
        %v1591 = vsel %vm1565, %v1552, %v1578
        %v1592 = vsel %vm1566, %v1553, %v1579
        %v1593 = vsel %vm1567, %v1554, %v1580
        %v1594 = vsel %vm1568, %v1555, %v1581
        %v1595 = vsel %vm1569, %v1556, %v1582
        %v1596 = vsel %vm1570, %v1557, %v1583
        %v1597 = vsel %vm1571, %v1558, %v1584
        %v1598 = vsel %vm1572, %v1559, %v1585
        %v1599 = vsel %vm1573, %v1560, %v1586
        %v1600 = vsel %vm1574, %v1561, %v1587
        %v1601 = vsel %vm1575, %v1562, %v1588
        %v1602 = vsel %vm1576, %v1563, %v1589
        %1603 = vst [vmem:[%s329] sm:$0xff] %v1590
        %1604 = vst [vmem:[%s329 + $0x8] sm:$0xff] %v1591
        %1605 = vst [vmem:[%s329 + $0x10] sm:$0xff] %v1592
        %1606 = vst [vmem:[%s329 + $0x18] sm:$0xff] %v1593
        %1607 = vst [vmem:[%s329 + $0x20] sm:$0xff] %v1594
        %1608 = vst [vmem:[%s329 + $0x28] sm:$0xff] %v1595
        %1609 = vst [vmem:[%s329 + $0x30] sm:$0xff] %v1596
        %1610 = vst [vmem:[%s329 + $0x38] sm:$0xff] %v1597
        %1611 = vst [vmem:[%s329 + $0x40] sm:$0xff] %v1598
        %1612 = vst [vmem:[%s329 + $0x48] sm:$0xff] %v1599
        %1613 = vst [vmem:[%s329 + $0x50] sm:$0xff] %v1600
        %1614 = vst [vmem:[%s329 + $0x58] sm:$0xff] %v1601
        %1615 = vst [vmem:[%s329 + $0x60] sm:$0xff] %v1602
        %s1616 = sand.u32 %s184, 1
        %s1617 = scalar_lea.sflag [#allocation4], %s1616
        %s1618 = sand.u32 %s184, 1
        %s1619 = smul.addr %s1618, 104
        %s1620 = scalar_lea.vmem [#allocation10], %s1619
        // Predicated region
        $region65: #{tpu_custom_call.1} parent=47 // pred_check
          %p1621 = pneg %p194
        $region66: #{tpu_custom_call.1} parent=47 // pred_check_branch
          %1623 = sbr.rel (%p1621) target = $region68
        $region67: #{tpu_custom_call.1} parent=47 // pred_region
          %s1624 = smul.u32 13, %s24
          %s1626 = ssub.s32 1664, 1664
          %1627 = vsyncadd %s1617, %s1626
          %s1628 = smul.addr %s1624, 128
          %s1629 = scalar_lea.hbm %s7, %s1628
          %s1630 = sshll.u32 %s1620, 4
          %s1631 = int_to_ptr.vmem [resolvable:$true] %s1630
          %1636 = dma.vmem_to_hbm [thread:$0]  %s1631, 1664, %s1629, %s1617, 128, 128, 8
        $region68: #{tpu_custom_call.1} parent=47 // pred_fallthru
          _
      $region48: #{tpu_custom_call.1} parent=5 // pred_fallthru
        _
      %p1637 = scmp.le.s32.totalorder 2, %s19
      // Predicated region
      $region69: #{tpu_custom_call.1} parent=5 // pred_check
        %p1638 = pneg %p1637
      $region70: #{tpu_custom_call.1} parent=5 // pred_check_branch
        %1640 = sbr.rel (%p1638) target = $region72
      $region71: #{tpu_custom_call.1} parent=5 // pred_region
        %s1641 = ssub.s32 %s19, 2
        // Predicated region
        $region73: #{tpu_custom_call.1} parent=71 // pred_check
          %p1642 = pneg %p200
        $region74: #{tpu_custom_call.1} parent=71 // pred_check_branch
          %1644 = sbr.rel (%p1642) target = $region76
        $region75: #{tpu_custom_call.1} parent=71 // pred_region
          %s1645 = sand.u32 %s185, 1
          %s1646 = scalar_lea.sflag [#allocation4], %s1645
          %s1647 = sand.u32 %s185, 1
          %s1648 = smul.addr %s1647, 104
          %s1649 = scalar_lea.vmem [#allocation10], %s1648
          %1650 = dma.done %s1646, 1664
        $region76: #{tpu_custom_call.1} parent=71 // pred_fallthru
          _
      $region72: #{tpu_custom_call.1} parent=5 // pred_fallthru
        _
    $region6: #{tpu_custom_call.1} parent=1 // loop_footer
      %s23 = sadd.s32 1, %s19
    $region7: #{tpu_custom_call.1} parent=1 // loop_footer_branch
      %18 = sbr.rel target = $region3
    $region8: #{tpu_custom_call.1} parent=1 // loop_exit
      _
    %1651 = vsyncpa [#allocation3], 1
    %s1652 = scalar_lea.sflag [#allocation3], 1
    %1653 = vsyncpa %s1652, 1
    %1654 = vsyncpa [#allocation6], 1
    %1655 = vsyncpa [#allocation9], 1
    %1656 = vsyncpa [#allocation4], 1
    %s1657 = scalar_lea.sflag [#allocation4], 1
    %1658 = vsyncpa %s1657, 1

</llo_original>
